<compile_context>
chip_gen: v7x
topology: tpu7x:2x2x1
jax: 0.10.0
libtpu: 0.0.40
codegen_flags: <defaults>
</compile_context>

<pallas_src>
import functools

import jax
import jax.numpy as jnp
from jax.experimental import pallas as pl
from jax.experimental.pallas import tpu as pltpu


# ----------------------------- Pallas kernel -------------------------------
def _fused_gnn_kernel(a_ref, x_ref, invdeg_ref, wl_ref, wr_ref, b_ref,
                      o_ref, h_ref, acc_ref, *, tm, tk, a_resident):
    layer = pl.program_id(0)          # 0 = conv1, 1 = conv2
    i = pl.program_id(1)              # output row tile
    k = pl.program_id(2)              # neighbor contraction tile
    nk = pl.num_programs(2)
    i0 = pl.multiple_of(i * tm, tm)
    k0 = pl.multiple_of(k * tk, tk)

    @pl.when(k == 0)
    def _init():
        acc_ref[...] = jnp.zeros_like(acc_ref)

    # Adjacency tile: int8 edge counts -> bf16 for the MXU.
    if a_resident:
        # A fully resident in VMEM, blocked along the contraction axis so the
        # dynamic slice only touches the leading + sublane axes (never lanes).
        a_tile = a_ref[k, pl.ds(i0, tm), :]
    else:
        a_tile = a_ref[...]                      # streamed (tm, tk) tile
    a_bf16 = a_tile.astype(jnp.float32).astype(jnp.bfloat16)

    # Neighbor-sum for this contraction tile. Layer 0 reads the VMEM-resident
    # input features; layer 1 reads the hidden activations layer 0 left in VMEM.
    @pl.when(layer == 0)
    def _agg_l0():
        acc_ref[...] += jnp.dot(a_bf16, x_ref[pl.ds(k0, tk), :],
                                preferred_element_type=jnp.float32)

    @pl.when(layer == 1)
    def _agg_l1():
        acc_ref[...] += jnp.dot(a_bf16, h_ref[pl.ds(k0, tk), :],
                                preferred_element_type=jnp.float32)

    # Epilogue: mean normalization in f32, then two-dot projection + bias.
    def _mean_project(self_feats_bf16):
        agg = (acc_ref[...] * invdeg_ref[...]).astype(jnp.bfloat16)
        return (jnp.dot(agg, wl_ref[...], preferred_element_type=jnp.float32)
                + jnp.dot(self_feats_bf16, wr_ref[...],
                          preferred_element_type=jnp.float32)
                + b_ref[...])

    @pl.when(jnp.logical_and(k == nk - 1, layer == 0))
    def _finalize_l0():
        out = jnp.maximum(_mean_project(x_ref[pl.ds(i0, tm), :]), 0.0)  # ReLU
        h_ref[pl.ds(i0, tm), :] = out.astype(h_ref.dtype)   # h stays in VMEM
        # NOTE: no o_ref store here -- layer-0 writebacks were pure HBM waste.

    @pl.when(jnp.logical_and(k == nk - 1, layer == 1))
    def _finalize_l1():
        o_ref[...] = _mean_project(h_ref[pl.ds(i0, tm), :]).astype(o_ref.dtype)


# ------------------------------- JAX glue -----------------------------------
def _round_up(v, m):
    return (v + m - 1) // m * m


def _edge_counts(edge_index, num_nodes):
    """Dense incoming-edge count matrix C[i, j] = #edges j->i (f32)."""
    src, dst = edge_index[0], edge_index[1]
    return jnp.zeros((num_nodes, num_nodes), jnp.float32).at[dst, src].add(1.0)


def init_gnn_params(key, in_channels, hidden_channels):
    """Deterministic glorot-uniform init matching SAGEConv parameter shapes."""
    def glorot(k, fan_in, fan_out):
        limit = jnp.sqrt(6.0 / (fan_in + fan_out))
        return jax.random.uniform(k, (fan_in, fan_out), jnp.float32, -limit, limit)

    k = jax.random.split(key, 4)
    return {
        "w1_l": glorot(k[0], in_channels, hidden_channels),
        "w1_r": glorot(k[1], in_channels, hidden_channels),
        "b1": jnp.zeros((1, hidden_channels), jnp.float32),
        "w2_l": glorot(k[2], hidden_channels, hidden_channels),
        "w2_r": glorot(k[3], hidden_channels, hidden_channels),
        "b2": jnp.zeros((1, hidden_channels), jnp.float32),
    }


def gnn_forward(params, x, edge_index, *, tm=256, tk=256,
                a_resident_max_bytes=8 * 1024 * 1024):
    """Fused conv1 -> relu -> conv2 forward pass in one pallas_call."""
    n, f_in = x.shape
    hidden = params["w1_l"].shape[1]

    # One shared lane-dense feature width (both 8 and 32 pad to 128 here).
    # TODO(synk): use separate lane-dense widths for the input-feature and
    # hidden paths when f_in and hidden pad to different multiples of 128.
    d = max(_round_up(f_in, 128), _round_up(hidden, 128))
    assert max(tm, tk) % min(tm, tk) == 0
    n_pad = _round_up(n, max(tm, tk))
    ni, nk = n_pad // tm, n_pad // tk

    # --- mean-aggregation operator split into int8 counts + f32 1/deg --------
    counts = _edge_counts(edge_index, n)
    deg = jnp.clip(jnp.sum(counts, axis=1, keepdims=True), 1.0, None)
    inv_deg = jnp.ones((n_pad, 1), jnp.float32).at[:n].set(1.0 / deg)
    # int8 is ample for realistic edge multiplicities (overflow needs >127
    # parallel edges between one pair of nodes).
    a_pad = jnp.zeros((n_pad, n_pad), jnp.int8).at[:n, :n].set(
        counts.astype(jnp.int8))

    # Node features, padded lane-dense and pre-cast to bf16 (resident in VMEM).
    x_pad = jnp.zeros((n_pad, d), jnp.bfloat16).at[:n, :f_in].set(
        x.astype(jnp.bfloat16))

    # Per-layer weight stacks (separate W_l / W_r -> two dots, no concatenate).
    def pad_w(w):
        fin, fout = w.shape
        return jnp.zeros((d, d), jnp.float32).at[:fin, :fout].set(
            w).astype(jnp.bfloat16)

    def pad_b(b):
        return jnp.zeros((1, d), jnp.float32).at[:, :b.shape[1]].set(b)

    w_l = jnp.stack([pad_w(params["w1_l"]), pad_w(params["w2_l"])])  # [2, d, d]
    w_r = jnp.stack([pad_w(params["w1_r"]), pad_w(params["w2_r"])])  # [2, d, d]
    b_all = jnp.stack([pad_b(params["b1"]), pad_b(params["b2"])])    # [2, 1, d]

    # A residency: one HBM read total instead of one per layer, when it fits
    # (2x for double buffering; conservative so it also fits v7x's 64 MiB VMEM).
    a_resident = (2 * n_pad * n_pad) <= a_resident_max_bytes
    if a_resident:
        # (nk, n_pad, tk): contraction-blocked so the kernel slices only along
        # the leading/sublane axes.
        a_arg = jnp.transpose(a_pad.reshape(n_pad, nk, tk), (1, 0, 2))
        a_spec = pl.BlockSpec((nk, n_pad, tk), lambda l, i, k: (0, 0, 0))
    else:
        a_arg = a_pad
        a_spec = pl.BlockSpec((tm, tk), lambda l, i, k: (i, k))

    kernel = functools.partial(_fused_gnn_kernel, tm=tm, tk=tk,
                               a_resident=a_resident)

    flops = 4 * n_pad * n_pad * d + 8 * n_pad * d * d
    bytes_accessed = (n_pad * n_pad * (1 if a_resident else 2)  # A (int8)
                      + n_pad * d * 2                           # X (bf16), once
                      + 2 * n_pad * 4                           # 1/deg per layer
                      + 2 * 2 * d * d * 2                       # W_l/W_r (bf16)
                      + 2 * d * 4                               # biases
                      + n_pad * d * 4)                          # output (f32)

    out_p = pl.pallas_call(
        kernel,
        out_shape=jax.ShapeDtypeStruct((n_pad, d), jnp.float32),
        grid_spec=pltpu.PrefetchScalarGridSpec(
            num_scalar_prefetch=0,
            grid=(2, ni, nk),                    # (layer, row tile, contraction)
            in_specs=[
                a_spec,                                              # adjacency
                pl.BlockSpec((n_pad, d), lambda l, i, k: (0, 0)),    # X resident
                pl.BlockSpec((tm, 1), lambda l, i, k: (i, 0)),       # 1/deg rows
                pl.BlockSpec((None, d, d), lambda l, i, k: (l, 0, 0)),  # W_l
                pl.BlockSpec((None, d, d), lambda l, i, k: (l, 0, 0)),  # W_r
                pl.BlockSpec((None, 1, d), lambda l, i, k: (l, 0, 0)),  # bias
            ],
            # Layer 0 pins the output to block (0,0) (never written -> no dead
            # writebacks); layer 1 streams the real row tiles.
            out_specs=pl.BlockSpec((tm, d), lambda l, i, k: (i * l, 0)),
            scratch_shapes=[
                pltpu.VMEM((n_pad, d), jnp.bfloat16),   # resident hidden h
                pltpu.VMEM((tm, d), jnp.float32),       # aggregation accumulator
            ],
        ),
        compiler_params=pltpu.CompilerParams(
            # Layer-1 row tiles depend on ALL layer-0 row tiles (h lives in a
            # shared VMEM scratch) and the output trick relies on sequential
            # order, so every grid axis must stay "arbitrary".
            dimension_semantics=("arbitrary", "arbitrary", "arbitrary"),
            # Working set here is ~1 MiB; 32 MiB keeps headroom on every
            # generation (v7x has only 64 MiB physical VMEM). Raise toward
            # ~96 MiB on v5e/v6e for larger resident A / bigger tiles.
            vmem_limit_bytes=32 * 1024 * 1024,
        ),
        cost_estimate=pl.CostEstimate(
            flops=flops, transcendentals=0, bytes_accessed=bytes_accessed),
    )(a_arg, x_pad, inv_deg, w_l, w_r, b_all)

    return out_p[:n, :hidden]


def gnn_forward_ref(params, x, edge_index, compute_dtype=jnp.float32):
    """Pure-JAX reference. compute_dtype=bfloat16 mirrors the kernel's MXU casts
    (counts matmul in bf16, mean normalization applied in f32 afterwards)."""
    n = x.shape[0]
    counts = _edge_counts(edge_index, n)
    deg = jnp.clip(jnp.sum(counts, axis=1, keepdims=True), 1.0, None)
    inv_deg = 1.0 / deg
    a = counts.astype(compute_dtype)

    def sage(feat, w_l, w_r, b):
        feat = feat.astype(compute_dtype)
        agg = jnp.dot(a, feat, preferred_element_type=jnp.float32) * inv_deg
        return (jnp.dot(agg.astype(compute_dtype), w_l.astype(compute_dtype),
                        preferred_element_type=jnp.float32)
                + jnp.dot(feat, w_r.astype(compute_dtype),
                          preferred_element_type=jnp.float32)
                + b)

    h = jnp.maximum(sage(x, params["w1_l"], params["w1_r"], params["b1"]), 0.0)
    return sage(h, params["w2_l"], params["w2_r"], params["b2"])


# --------------------------------- main --------------------------------------
if __name__ == "__main__":
    N = 300        # nodes (padded to 512 inside the wrapper -> 2x2 row/k tiles)
    F_IN = 8       # input feature dim (SAGEConv((-1,-1), H) infers this lazily)
    HIDDEN = 32    # hidden_channels
    E = 1200       # edges

    key = jax.random.PRNGKey(0)
    k_x, k_src, k_dst, k_params = jax.random.split(key, 4)

    x = jax.random.normal(k_x, (N, F_IN), jnp.float32)
    edge_index = jnp.stack([
        jax.random.randint(k_src, (E,), 0, N, jnp.int32),
        jax.random.randint(k_dst, (E,), 0, N, jnp.int32),
    ], axis=0)  # [2, E]

    params = init_gnn_params(k_params, F_IN, HIDDEN)

    out = gnn_forward(params, x, edge_index)
    out = jax.block_until_ready(out)
    assert out.shape == (N, HIDDEN)

    # tight check vs a reference applying the same bf16 casts / f32 deg scaling
    ref_bf16 = gnn_forward_ref(params, x, edge_index, compute_dtype=jnp.bfloat16)
    assert jnp.allclose(out, ref_bf16, atol=1e-2, rtol=1e-2), \
        float(jnp.max(jnp.abs(out - ref_bf16)))
    # sanity check vs full-f32 module semantics (bf16 MXU inputs -> looser tol)
    ref_f32 = gnn_forward_ref(params, x, edge_index)
    assert jnp.allclose(out, ref_f32, atol=5e-2, rtol=5e-2), \
        float(jnp.max(jnp.abs(out - ref_f32)))

    print("KERNEL_OK")
</pallas_src>

<mosaic_0001>
module attributes {stable_mosaic.version = 11 : i64} {
  func.func @_fused_gnn_kernel(%arg0: i32, %arg1: i32, %arg2: i32, %arg3: memref<2x512x256xi8, #tpu.memory_space<vmem>>, %arg4: memref<512x128xbf16, #tpu.memory_space<vmem>>, %arg5: memref<256x1xf32, #tpu.memory_space<vmem>>, %arg6: memref<1x128x128xbf16, #tpu.memory_space<vmem>>, %arg7: memref<1x128x128xbf16, #tpu.memory_space<vmem>>, %arg8: memref<1x1x128xf32, #tpu.memory_space<vmem>>, %arg9: memref<256x128xf32, #tpu.memory_space<vmem>>, %arg10: memref<512x128xbf16, #tpu.memory_space<vmem>>, %arg11: memref<256x128xf32, #tpu.memory_space<vmem>>) attributes {dimension_semantics = [#tpu.dimension_semantics<arbitrary>, #tpu.dimension_semantics<arbitrary>, #tpu.dimension_semantics<arbitrary>], iteration_bounds = array<i64: 2, 2, 2>, scalar_prefetch = 0 : i64, scratch_operands = 2 : i64, tpu.core_type = #tpu.core_type<tc>, window_params = [{pipeline_mode = #tpu.pipeline_mode<synchronous>, transform_indices = @transform_0, window_bounds = array<i64: 2, 512, 256>}, {pipeline_mode = #tpu.pipeline_mode<synchronous>, transform_indices = @transform_1, window_bounds = array<i64: 512, 128>}, {transform_indices = @transform_2, window_bounds = array<i64: 256, 1>}, {transform_indices = @transform_3, window_bounds = array<i64: 1, 128, 128>}, {transform_indices = @transform_4, window_bounds = array<i64: 1, 128, 128>}, {transform_indices = @transform_5, window_bounds = array<i64: 1, 1, 128>}, {transform_indices = @transform_6, window_bounds = array<i64: 256, 128>}]} {
    %c256_i32 = arith.constant 256 : i32
    %0 = arith.muli %arg1, %c256_i32 : i32
    %1 = tpu.assume_multiple %0, 256 : i32
    %c256_i32_0 = arith.constant 256 : i32
    %2 = arith.muli %arg2, %c256_i32_0 : i32
    %3 = tpu.assume_multiple %2, 256 : i32
    %c0_i32 = arith.constant 0 : i32
    %4 = arith.cmpi eq, %arg2, %c0_i32 : i32
    %5 = arith.extui %4 : i1 to i32
    %c0_i32_1 = arith.constant 0 : i32
    %6 = arith.cmpi ne, %5, %c0_i32_1 : i32
    scf.if %6 {
      %cst = arith.constant 0.000000e+00 : f32
      %29 = vector.broadcast %cst : f32 to vector<256x128xf32>
      %c0_11 = arith.constant 0 : index
      %c0_12 = arith.constant 0 : index
      %30 = vector.load %arg11[%c0_11, %c0_12] : memref<256x128xf32, #tpu.memory_space<vmem>>, vector<256x128xf32>
      tpu.vector_store %arg11[%c0_11, %c0_12], %29 {strides = array<i32>} : memref<256x128xf32, #tpu.memory_space<vmem>>, vector<256x128xf32>,
    } else {
    }
    %7 = arith.index_cast %arg2 : i32 to index
    %8 = arith.index_cast %1 : i32 to index
    %c0 = arith.constant 0 : index
    %9 = vector.load %arg3[%7, %8, %c0] : memref<2x512x256xi8, #tpu.memory_space<vmem>>, vector<1x256x256xi8>
    %10 = vector.shape_cast %9 : vector<1x256x256xi8> to vector<256x256xi8>
    %11 = arith.sitofp %10 : vector<256x256xi8> to vector<256x256xf32>
    %12 = arith.truncf %11 : vector<256x256xf32> to vector<256x256xbf16>
    %c0_i32_2 = arith.constant 0 : i32
    %13 = arith.cmpi eq, %arg0, %c0_i32_2 : i32
    %14 = arith.extui %13 : i1 to i32
    %c0_i32_3 = arith.constant 0 : i32
    %15 = arith.cmpi ne, %14, %c0_i32_3 : i32
    scf.if %15 {
      %c0_11 = arith.constant 0 : index
      %c0_12 = arith.constant 0 : index
      %29 = vector.load %arg11[%c0_11, %c0_12] : memref<256x128xf32, #tpu.memory_space<vmem>>, vector<256x128xf32>
      %30 = arith.index_cast %3 : i32 to index
      %c0_13 = arith.constant 0 : index
      %31 = vector.load %arg4[%30, %c0_13] : memref<512x128xbf16, #tpu.memory_space<vmem>>, vector<256x128xbf16>
      %cst = arith.constant dense<0.000000e+00> : vector<256x128xf32>
      %32 = tpu.matmul %12, %31, %cst {dimension_numbers = #tpu.dot_dimension_numbers<[1], [0], [0], [1], [0, 0, 1, 1], [], []>} : vector<256x256xbf16>, vector<256x128xbf16>, vector<256x128xf32> -> vector<256x128xf32>
      %33 = arith.addf %29, %32 : vector<256x128xf32>
      %c0_14 = arith.constant 0 : index
      %c0_15 = arith.constant 0 : index
      %34 = vector.load %arg11[%c0_14, %c0_15] : memref<256x128xf32, #tpu.memory_space<vmem>>, vector<256x128xf32>
      tpu.vector_store %arg11[%c0_14, %c0_15], %33 {strides = array<i32>} : memref<256x128xf32, #tpu.memory_space<vmem>>, vector<256x128xf32>,
    } else {
    }
    %c1_i32 = arith.constant 1 : i32
    %16 = arith.cmpi eq, %arg0, %c1_i32 : i32
    %17 = arith.extui %16 : i1 to i32
    %c0_i32_4 = arith.constant 0 : i32
    %18 = arith.cmpi ne, %17, %c0_i32_4 : i32
    scf.if %18 {
      %c0_11 = arith.constant 0 : index
      %c0_12 = arith.constant 0 : index
      %29 = vector.load %arg11[%c0_11, %c0_12] : memref<256x128xf32, #tpu.memory_space<vmem>>, vector<256x128xf32>
      %30 = arith.index_cast %3 : i32 to index
      %c0_13 = arith.constant 0 : index
      %31 = vector.load %arg10[%30, %c0_13] : memref<512x128xbf16, #tpu.memory_space<vmem>>, vector<256x128xbf16>
      %cst = arith.constant dense<0.000000e+00> : vector<256x128xf32>
      %32 = tpu.matmul %12, %31, %cst {dimension_numbers = #tpu.dot_dimension_numbers<[1], [0], [0], [1], [0, 0, 1, 1], [], []>} : vector<256x256xbf16>, vector<256x128xbf16>, vector<256x128xf32> -> vector<256x128xf32>
      %33 = arith.addf %29, %32 : vector<256x128xf32>
      %c0_14 = arith.constant 0 : index
      %c0_15 = arith.constant 0 : index
      %34 = vector.load %arg11[%c0_14, %c0_15] : memref<256x128xf32, #tpu.memory_space<vmem>>, vector<256x128xf32>
      tpu.vector_store %arg11[%c0_14, %c0_15], %33 {strides = array<i32>} : memref<256x128xf32, #tpu.memory_space<vmem>>, vector<256x128xf32>,
    } else {
    }
    %c1_i32_5 = arith.constant 1 : i32
    %19 = arith.cmpi eq, %arg2, %c1_i32_5 : i32
    %c0_i32_6 = arith.constant 0 : i32
    %20 = arith.cmpi eq, %arg0, %c0_i32_6 : i32
    %21 = arith.andi %19, %20 : i1
    %22 = arith.extui %21 : i1 to i32
    %c0_i32_7 = arith.constant 0 : i32
    %23 = arith.cmpi ne, %22, %c0_i32_7 : i32
    scf.if %23 {
      %29 = arith.index_cast %1 : i32 to index
      %c0_11 = arith.constant 0 : index
      %30 = vector.load %arg4[%29, %c0_11] : memref<512x128xbf16, #tpu.memory_space<vmem>>, vector<256x128xbf16>
      %c0_12 = arith.constant 0 : index
      %c0_13 = arith.constant 0 : index
      %31 = vector.load %arg11[%c0_12, %c0_13] : memref<256x128xf32, #tpu.memory_space<vmem>>, vector<256x128xf32>
      %c0_14 = arith.constant 0 : index
      %c0_15 = arith.constant 0 : index
      %32 = vector.load %arg5[%c0_14, %c0_15] : memref<256x1xf32, #tpu.memory_space<vmem>>, vector<256x1xf32>
      %33 = vector.broadcast %32 : vector<256x1xf32> to vector<256x128xf32>
      %34 = arith.mulf %31, %33 : vector<256x128xf32>
      %35 = arith.truncf %34 : vector<256x128xf32> to vector<256x128xbf16>
      %c0_16 = arith.constant 0 : index
      %c0_17 = arith.constant 0 : index
      %c0_18 = arith.constant 0 : index
      %36 = vector.load %arg6[%c0_16, %c0_17, %c0_18] : memref<1x128x128xbf16, #tpu.memory_space<vmem>>, vector<1x128x128xbf16>
      %37 = vector.shape_cast %36 : vector<1x128x128xbf16> to vector<128x128xbf16>
      %cst = arith.constant dense<0.000000e+00> : vector<256x128xf32>
      %38 = tpu.matmul %35, %37, %cst {dimension_numbers = #tpu.dot_dimension_numbers<[1], [0], [0], [1], [0, 0, 1, 1], [], []>} : vector<256x128xbf16>, vector<128x128xbf16>, vector<256x128xf32> -> vector<256x128xf32>
      %c0_19 = arith.constant 0 : index
      %c0_20 = arith.constant 0 : index
      %c0_21 = arith.constant 0 : index
      %39 = vector.load %arg7[%c0_19, %c0_20, %c0_21] : memref<1x128x128xbf16, #tpu.memory_space<vmem>>, vector<1x128x128xbf16>
      %40 = vector.shape_cast %39 : vector<1x128x128xbf16> to vector<128x128xbf16>
      %cst_22 = arith.constant dense<0.000000e+00> : vector<256x128xf32>
      %41 = tpu.matmul %30, %40, %cst_22 {dimension_numbers = #tpu.dot_dimension_numbers<[1], [0], [0], [1], [0, 0, 1, 1], [], []>} : vector<256x128xbf16>, vector<128x128xbf16>, vector<256x128xf32> -> vector<256x128xf32>
      %42 = arith.addf %38, %41 : vector<256x128xf32>
      %c0_23 = arith.constant 0 : index
      %c0_24 = arith.constant 0 : index
      %c0_25 = arith.constant 0 : index
      %43 = vector.load %arg8[%c0_23, %c0_24, %c0_25] : memref<1x1x128xf32, #tpu.memory_space<vmem>>, vector<1x1x128xf32>
      %44 = vector.shape_cast %43 : vector<1x1x128xf32> to vector<1x128xf32>
      %45 = vector.broadcast %44 : vector<1x128xf32> to vector<256x128xf32>
      %46 = arith.addf %42, %45 : vector<256x128xf32>
      %cst_26 = arith.constant 0.000000e+00 : f32
      %47 = vector.broadcast %cst_26 : f32 to vector<256x128xf32>
      %48 = arith.maximumf %46, %47 : vector<256x128xf32>
      %49 = arith.truncf %48 : vector<256x128xf32> to vector<256x128xbf16>
      %50 = arith.index_cast %1 : i32 to index
      %c0_27 = arith.constant 0 : index
      %51 = vector.load %arg10[%50, %c0_27] : memref<512x128xbf16, #tpu.memory_space<vmem>>, vector<256x128xbf16>
      tpu.vector_store %arg10[%50, %c0_27], %49 {strides = array<i32>} : memref<512x128xbf16, #tpu.memory_space<vmem>>, vector<256x128xbf16>,
    } else {
    }
    %c1_i32_8 = arith.constant 1 : i32
    %24 = arith.cmpi eq, %arg2, %c1_i32_8 : i32
    %c1_i32_9 = arith.constant 1 : i32
    %25 = arith.cmpi eq, %arg0, %c1_i32_9 : i32
    %26 = arith.andi %24, %25 : i1
    %27 = arith.extui %26 : i1 to i32
    %c0_i32_10 = arith.constant 0 : i32
    %28 = arith.cmpi ne, %27, %c0_i32_10 : i32
    scf.if %28 {
      %29 = arith.index_cast %1 : i32 to index
      %c0_11 = arith.constant 0 : index
      %30 = vector.load %arg10[%29, %c0_11] : memref<512x128xbf16, #tpu.memory_space<vmem>>, vector<256x128xbf16>
      %c0_12 = arith.constant 0 : index
      %c0_13 = arith.constant 0 : index
      %31 = vector.load %arg11[%c0_12, %c0_13] : memref<256x128xf32, #tpu.memory_space<vmem>>, vector<256x128xf32>
      %c0_14 = arith.constant 0 : index
      %c0_15 = arith.constant 0 : index
      %32 = vector.load %arg5[%c0_14, %c0_15] : memref<256x1xf32, #tpu.memory_space<vmem>>, vector<256x1xf32>
      %33 = vector.broadcast %32 : vector<256x1xf32> to vector<256x128xf32>
      %34 = arith.mulf %31, %33 : vector<256x128xf32>
      %35 = arith.truncf %34 : vector<256x128xf32> to vector<256x128xbf16>
      %c0_16 = arith.constant 0 : index
      %c0_17 = arith.constant 0 : index
      %c0_18 = arith.constant 0 : index
      %36 = vector.load %arg6[%c0_16, %c0_17, %c0_18] : memref<1x128x128xbf16, #tpu.memory_space<vmem>>, vector<1x128x128xbf16>
      %37 = vector.shape_cast %36 : vector<1x128x128xbf16> to vector<128x128xbf16>
      %cst = arith.constant dense<0.000000e+00> : vector<256x128xf32>
      %38 = tpu.matmul %35, %37, %cst {dimension_numbers = #tpu.dot_dimension_numbers<[1], [0], [0], [1], [0, 0, 1, 1], [], []>} : vector<256x128xbf16>, vector<128x128xbf16>, vector<256x128xf32> -> vector<256x128xf32>
      %c0_19 = arith.constant 0 : index
      %c0_20 = arith.constant 0 : index
      %c0_21 = arith.constant 0 : index
      %39 = vector.load %arg7[%c0_19, %c0_20, %c0_21] : memref<1x128x128xbf16, #tpu.memory_space<vmem>>, vector<1x128x128xbf16>
      %40 = vector.shape_cast %39 : vector<1x128x128xbf16> to vector<128x128xbf16>
      %cst_22 = arith.constant dense<0.000000e+00> : vector<256x128xf32>
      %41 = tpu.matmul %30, %40, %cst_22 {dimension_numbers = #tpu.dot_dimension_numbers<[1], [0], [0], [1], [0, 0, 1, 1], [], []>} : vector<256x128xbf16>, vector<128x128xbf16>, vector<256x128xf32> -> vector<256x128xf32>
      %42 = arith.addf %38, %41 : vector<256x128xf32>
      %c0_23 = arith.constant 0 : index
      %c0_24 = arith.constant 0 : index
      %c0_25 = arith.constant 0 : index
      %43 = vector.load %arg8[%c0_23, %c0_24, %c0_25] : memref<1x1x128xf32, #tpu.memory_space<vmem>>, vector<1x1x128xf32>
      %44 = vector.shape_cast %43 : vector<1x1x128xf32> to vector<1x128xf32>
      %45 = vector.broadcast %44 : vector<1x128xf32> to vector<256x128xf32>
      %46 = arith.addf %42, %45 : vector<256x128xf32>
      %c0_26 = arith.constant 0 : index
      %c0_27 = arith.constant 0 : index
      %47 = vector.load %arg9[%c0_26, %c0_27] : memref<256x128xf32, #tpu.memory_space<vmem>>, vector<256x128xf32>
      tpu.vector_store %arg9[%c0_26, %c0_27], %46 {strides = array<i32>} : memref<256x128xf32, #tpu.memory_space<vmem>>, vector<256x128xf32>,
    } else {
    }
    return
  }
  func.func @transform_0(%arg0: i32, %arg1: i32, %arg2: i32) -> (i32, i32, i32) {
    %c0_i32 = arith.constant 0 : i32
    %c0_i32_0 = arith.constant 0 : i32
    %c0_i32_1 = arith.constant 0 : i32
    %c0_i32_2 = arith.constant 0 : i32
    return %c0_i32, %c0_i32_0, %c0_i32_1 : i32, i32, i32
  }
  func.func @transform_1(%arg0: i32, %arg1: i32, %arg2: i32) -> (i32, i32) {
    %c0_i32 = arith.constant 0 : i32
    %c0_i32_0 = arith.constant 0 : i32
    %c0_i32_1 = arith.constant 0 : i32
    return %c0_i32, %c0_i32_0 : i32, i32
  }
  func.func @transform_2(%arg0: i32, %arg1: i32, %arg2: i32) -> (i32, i32) {
    %c0_i32 = arith.constant 0 : i32
    %c0_i32_0 = arith.constant 0 : i32
    return %arg1, %c0_i32 : i32, i32
  }
  func.func @transform_3(%arg0: i32, %arg1: i32, %arg2: i32) -> (i32, i32, i32) {
    %c0_i32 = arith.constant 0 : i32
    %c0_i32_0 = arith.constant 0 : i32
    %c0_i32_1 = arith.constant 0 : i32
    return %arg0, %c0_i32, %c0_i32_0 : i32, i32, i32
  }
  func.func @transform_4(%arg0: i32, %arg1: i32, %arg2: i32) -> (i32, i32, i32) {
    %c0_i32 = arith.constant 0 : i32
    %c0_i32_0 = arith.constant 0 : i32
    %c0_i32_1 = arith.constant 0 : i32
    return %arg0, %c0_i32, %c0_i32_0 : i32, i32, i32
  }
  func.func @transform_5(%arg0: i32, %arg1: i32, %arg2: i32) -> (i32, i32, i32) {
    %c0_i32 = arith.constant 0 : i32
    %c0_i32_0 = arith.constant 0 : i32
    %c0_i32_1 = arith.constant 0 : i32
    return %arg0, %c0_i32, %c0_i32_0 : i32, i32, i32
  }
  func.func @transform_6(%arg0: i32, %arg1: i32, %arg2: i32) -> (i32, i32) {
    %0 = arith.muli %arg1, %arg0 : i32
    %c0_i32 = arith.constant 0 : i32
    %c0_i32_0 = arith.constant 0 : i32
    return %0, %c0_i32 : i32, i32
  }
}

</mosaic_0001>

<llo_original>
// kernel: tpu_custom_call.1
$region0: #{tpu_custom_call.1}
  #allocation0 [shape = 'u32[]', space=smem, size = 0x4, offset = 0x4, fixed_abs, tag = 'smem constant byte address 0x4 - core index']
  #allocation1 [shape = 'u32[144,128]{1,0:T(1,128)}', space=vmem, size = 0x12000, scoped, tag = 'internal scratch']
  #allocation2 [shape = 'bf16[512,128]{1,0:T(16,128)(2,1)}', space=vmem, size = 0x20000, scoped, tag = 'scratch operand']
  #allocation3 [shape = 'f32[256,128]{1,0:T(8,128)}', space=vmem, size = 0x20000, scoped, tag = 'scratch operand']
  %s0 = inlined_call_operand.vmem [shape: s8[2,512,256], index: 0, kind: input, shape index: {}]
  %s1 = inlined_call_operand.hbm [shape: bf16[512,128], index: 1, kind: input, shape index: {}]
  %s2 = inlined_call_operand.vmem [shape: f32[512,1], index: 2, kind: input, shape index: {}]
  %s3 = inlined_call_operand.hbm [shape: bf16[2,128,128], index: 3, kind: input, shape index: {}]
  %s4 = inlined_call_operand.hbm [shape: bf16[2,128,128], index: 4, kind: input, shape index: {}]
  %s5 = inlined_call_operand.vmem [shape: f32[2,1,128], index: 5, kind: input, shape index: {}]
  %s6 = inlined_call_operand.hbm [shape: f32[512,128], index: 6, kind: output, shape index: {}]
  %s7 = sld [smem:[#allocation0]]
  $region89: #{tpu_custom_call.1} parent=0
    _
  %s9 = ssub.s32 1, %s7
  %s10 = scalar_select 0, %s9, %s7
  $region1: #{tpu_custom_call.1} parent=0
    #allocation4 [shape = 'u8[131072]{0}', space=vmem, size = 0x20000, scoped, tag = 'input window, operand 1, single buffered']
    #allocation5 [shape = 's32[2]{0}', space=sflag, size = 0x8, scoped, tag = 'scoped memory for tpu_custom_call.1']
    #allocation6 [shape = 's32[2]{0}', space=sflag, size = 0x8, scoped, tag = 'scoped memory for tpu_custom_call.1']
    #allocation7 [shape = 'u8[65536]{0}', space=vmem, size = 0x10000, scoped, tag = 'input window, operand 3']
    #allocation8 [shape = 's32[2]{0}', space=sflag, size = 0x8, scoped, tag = 'scoped memory for tpu_custom_call.1']
    #allocation9 [shape = 'u8[65536]{0}', space=vmem, size = 0x10000, scoped, tag = 'input window, operand 4']
    #allocation10 [shape = 'u8[262144]{0}', space=vmem, size = 0x40000, scoped, tag = 'output window, operand 0']
    %11 = vsyncpa [#allocation5], 0
    %12 = vsyncpa [#allocation8], 0
    %s13 = scalar_lea.sflag [#allocation8], 1
    %14 = vsyncpa %s13, 0
    %15 = vsyncpa [#allocation6], 0
    %s16 = scalar_lea.sflag [#allocation6], 1
    %17 = vsyncpa %s16, 0
    loop: start=0, step=1, limit=10
    $region2: #{tpu_custom_call.1} parent=1 // loop_pre_header
      _
    $region3: #{tpu_custom_call.1} parent=1 // loop_header
      %s19 = sphi 0, %s23
      %p20 = scmp.ge.s32.totalorder %s19, 10
      %s26 = sphi 0, %s45
      %s27 = sphi 0, %s41
      %s28 = sphi 0, %s37
      %s29 = sphi 0, %s26
      %s30 = sphi 0, %s27
      %s31 = sphi 0, %s28
      %s32 = sphi 0, %s29
      %s33 = sphi 0, %s30
      %s34 = sphi 0, %s31
      %s46 = sphi 0, %s46
      %s48 = sphi 0, %s46
      %s49 = sphi 0, %s48
      %s63 = sphi 0, %s49
      %s67 = sphi 0, %s67
      %s69 = sphi 0, %s67
      %s70 = sphi 0, %s69
      %s84 = sphi 0, %s70
      %s90 = sphi 0, %s92
      %s93 = sphi 0, %s90
      %s94 = sphi 0, %s93
      %s110 = sphi 0, %s94
      %s116 = sphi 0, %s118
      %s119 = sphi 0, %s116
      %s120 = sphi 0, %s119
      %s136 = sphi 0, %s120
      %s142 = sphi 0, %s144
      %s145 = sphi 0, %s142
      %s146 = sphi 0, %s145
      %s162 = sphi 0, %s146
      %s168 = sphi 0, %s170
      %s171 = sphi 0, %s168
      %s172 = sphi 0, %s171
      %s188 = sphi 0, %s172
      %s196 = sphi 0, %s198
      %s199 = sphi 0, %s196
      %s200 = sphi 0, %s199
      %s216 = sphi 0, %s200
    $region4: #{tpu_custom_call.1} parent=1 // loop_header_branch
      %22 = sbr.rel (%p20) target = $region8
    $region5: #{tpu_custom_call.1} parent=1 // loop_body
      %s24 = ssub.s32 %s19, 1
      %s25 = ssub.s32 %s19, 2
      %s35 = sadd.s32 1, %s28
      %p36 = scmp.ge.s32.totalorder %s35, 2
      %s37 = scalar_select %p36, 0, %s35
      %s38 = sadd.s32 1, %s27
      %s39 = scalar_select %p36, %s38, %s27
      %p40 = scmp.ge.s32.totalorder %s39, 2
      %s41 = scalar_select %p40, 0, %s39
      %s42 = sadd.s32 1, %s26
      %s43 = scalar_select %p40, %s42, %s26
      %p44 = scmp.ge.s32.totalorder %s43, 2
      %s45 = scalar_select %p44, 0, %s43
      %s47 = sadd.s32 %s46, 1
      %p50 = scmp.eq.s32.totalorder %s19, 7
      %p51 = scmp.ne.s32.totalorder %s46, %s48
      %p52 = scmp.eq.s32.totalorder %s19, 0
      %p53 = por %p51, %p52
      %p54 = scmp.ne.s32.totalorder %s46, %s48
      %p55 = scmp.eq.s32.totalorder %s24, 7
      %p56 = por %p54, %p55
      %p57 = scmp.ne.s32.totalorder %s48, %s49
      %p58 = scmp.eq.s32.totalorder %s24, 0
      %p59 = por %p57, %p58
      %p60 = scmp.ne.s32.totalorder %s48, %s49
      %p61 = scmp.eq.s32.totalorder %s25, 7
      %p62 = por %p60, %p61
      %p64 = scmp.ne.s32.totalorder %s49, %s63
      %p65 = scmp.eq.s32.totalorder %s25, 0
      %p66 = por %p64, %p65
      %s68 = sadd.s32 %s67, 1
      %p71 = scmp.eq.s32.totalorder %s19, 7
      %p72 = scmp.ne.s32.totalorder %s67, %s69
      %p73 = scmp.eq.s32.totalorder %s19, 0
      %p74 = por %p72, %p73
      %p75 = scmp.ne.s32.totalorder %s67, %s69
      %p76 = scmp.eq.s32.totalorder %s24, 7
      %p77 = por %p75, %p76
      %p78 = scmp.ne.s32.totalorder %s69, %s70
      %p79 = scmp.eq.s32.totalorder %s24, 0
      %p80 = por %p78, %p79
      %p81 = scmp.ne.s32.totalorder %s69, %s70
      %p82 = scmp.eq.s32.totalorder %s25, 7
      %p83 = por %p81, %p82
      %p85 = scmp.ne.s32.totalorder %s70, %s84
      %p86 = scmp.eq.s32.totalorder %s25, 0
      %p87 = por %p85, %p86
      %s88 = ssub.s32 %s27, %s41
      %p89 = scmp.eq.s32.totalorder %s88, 0
      %s91 = sadd.s32 %s90, 1
      %s92 = scalar_select %p89, %s90, %s91
      %p95 = pneg %p89
      %p96 = scmp.eq.s32.totalorder %s19, 7
      %p97 = por %p95, %p96
      %p98 = scmp.ne.s32.totalorder %s90, %s93
      %p99 = scmp.eq.s32.totalorder %s19, 0
      %p100 = por %p98, %p99
      %p101 = scmp.ne.s32.totalorder %s90, %s93
      %p102 = scmp.eq.s32.totalorder %s24, 7
      %p103 = por %p101, %p102
      %p104 = scmp.ne.s32.totalorder %s93, %s94
      %p105 = scmp.eq.s32.totalorder %s24, 0
      %p106 = por %p104, %p105
      %p107 = scmp.ne.s32.totalorder %s93, %s94
      %p108 = scmp.eq.s32.totalorder %s25, 7
      %p109 = por %p107, %p108
      %p111 = scmp.ne.s32.totalorder %s94, %s110
      %p112 = scmp.eq.s32.totalorder %s25, 0
      %p113 = por %p111, %p112
      %s114 = ssub.s32 %s26, %s45
      %p115 = scmp.eq.s32.totalorder %s114, 0
      %s117 = sadd.s32 %s116, 1
      %s118 = scalar_select %p115, %s116, %s117
      %p121 = pneg %p115
      %p122 = scmp.eq.s32.totalorder %s19, 7
      %p123 = por %p121, %p122
      %p124 = scmp.ne.s32.totalorder %s116, %s119
      %p125 = scmp.eq.s32.totalorder %s19, 0
      %p126 = por %p124, %p125
      %p127 = scmp.ne.s32.totalorder %s116, %s119
      %p128 = scmp.eq.s32.totalorder %s24, 7
      %p129 = por %p127, %p128
      %p130 = scmp.ne.s32.totalorder %s119, %s120
      %p131 = scmp.eq.s32.totalorder %s24, 0
      %p132 = por %p130, %p131
      %p133 = scmp.ne.s32.totalorder %s119, %s120
      %p134 = scmp.eq.s32.totalorder %s25, 7
      %p135 = por %p133, %p134
      %p137 = scmp.ne.s32.totalorder %s120, %s136
      %p138 = scmp.eq.s32.totalorder %s25, 0
      %p139 = por %p137, %p138
      %s140 = ssub.s32 %s26, %s45
      %p141 = scmp.eq.s32.totalorder %s140, 0
      %s143 = sadd.s32 %s142, 1
      %s144 = scalar_select %p141, %s142, %s143
      %p147 = pneg %p141
      %p148 = scmp.eq.s32.totalorder %s19, 7
      %p149 = por %p147, %p148
      %p150 = scmp.ne.s32.totalorder %s142, %s145
      %p151 = scmp.eq.s32.totalorder %s19, 0
      %p152 = por %p150, %p151
      %p153 = scmp.ne.s32.totalorder %s142, %s145
      %p154 = scmp.eq.s32.totalorder %s24, 7
      %p155 = por %p153, %p154
      %p156 = scmp.ne.s32.totalorder %s145, %s146
      %p157 = scmp.eq.s32.totalorder %s24, 0
      %p158 = por %p156, %p157
      %p159 = scmp.ne.s32.totalorder %s145, %s146
      %p160 = scmp.eq.s32.totalorder %s25, 7
      %p161 = por %p159, %p160
      %p163 = scmp.ne.s32.totalorder %s146, %s162
      %p164 = scmp.eq.s32.totalorder %s25, 0
      %p165 = por %p163, %p164
      %s166 = ssub.s32 %s26, %s45
      %p167 = scmp.eq.s32.totalorder %s166, 0
      %s169 = sadd.s32 %s168, 1
      %s170 = scalar_select %p167, %s168, %s169
      %p173 = pneg %p167
      %p174 = scmp.eq.s32.totalorder %s19, 7
      %p175 = por %p173, %p174
      %p176 = scmp.ne.s32.totalorder %s168, %s171
      %p177 = scmp.eq.s32.totalorder %s19, 0
      %p178 = por %p176, %p177
      %p179 = scmp.ne.s32.totalorder %s168, %s171
      %p180 = scmp.eq.s32.totalorder %s24, 7
      %p181 = por %p179, %p180
      %p182 = scmp.ne.s32.totalorder %s171, %s172
      %p183 = scmp.eq.s32.totalorder %s24, 0
      %p184 = por %p182, %p183
      %p185 = scmp.ne.s32.totalorder %s171, %s172
      %p186 = scmp.eq.s32.totalorder %s25, 7
      %p187 = por %p185, %p186
      %p189 = scmp.ne.s32.totalorder %s172, %s188
      %p190 = scmp.eq.s32.totalorder %s25, 0
      %p191 = por %p189, %p190
      %s192 = smul.u32 %s27, %s26
      %s193 = smul.u32 %s41, %s45
      %s194 = ssub.s32 %s192, %s193
      %p195 = scmp.eq.s32.totalorder %s194, 0
      %s197 = sadd.s32 %s196, 1
      %s198 = scalar_select %p195, %s196, %s197
      %p201 = pneg %p195
      %p202 = scmp.eq.s32.totalorder %s19, 7
      %p203 = por %p201, %p202
      %p204 = scmp.ne.s32.totalorder %s196, %s199
      %p205 = scmp.eq.s32.totalorder %s19, 0
      %p206 = por %p204, %p205
      %p207 = scmp.ne.s32.totalorder %s196, %s199
      %p208 = scmp.eq.s32.totalorder %s24, 7
      %p209 = por %p207, %p208
      %p210 = scmp.ne.s32.totalorder %s199, %s200
      %p211 = scmp.eq.s32.totalorder %s24, 0
      %p212 = por %p210, %p211
      %p213 = scmp.ne.s32.totalorder %s199, %s200
      %p214 = scmp.eq.s32.totalorder %s25, 7
      %p215 = por %p213, %p214
      %p217 = scmp.ne.s32.totalorder %s200, %s216
      %p218 = scmp.eq.s32.totalorder %s25, 0
      %p219 = por %p217, %p218
      %p220 = scmp.le.s32.totalorder 1, %s19
      %p221 = scmp.lt.s32.totalorder %s19, 9
      %p222 = pnand %p220, %p221
      %p223 = pneg %p222
      // Predicated region
      $region9: #{tpu_custom_call.1} parent=5 // pred_check
        _
      $region10: #{tpu_custom_call.1} parent=5 // pred_check_branch
        %225 = sbr.rel (%p222) target = $region12
      $region11: #{tpu_custom_call.1} parent=5 // pred_region
        %s226 = ssub.s32 %s19, 1
        // Predicated region
        $region13: #{tpu_custom_call.1} parent=11 // pred_check
          %p227 = pneg %p59
        $region14: #{tpu_custom_call.1} parent=11 // pred_check_branch
          %229 = sbr.rel (%p227) target = $region16
        $region15: #{tpu_custom_call.1} parent=11 // pred_region
          _
        $region16: #{tpu_custom_call.1} parent=11 // pred_fallthru
          _
        // Predicated region
        $region17: #{tpu_custom_call.1} parent=11 // pred_check
          %p230 = pneg %p80
        $region18: #{tpu_custom_call.1} parent=11 // pred_check_branch
          %232 = sbr.rel (%p230) target = $region20
        $region19: #{tpu_custom_call.1} parent=11 // pred_region
          %s234 = ssub.s32 4096, 4096
          %235 = vsyncadd [#allocation5], %s234
          %s236 = sshll.u32 [#allocation4], 4
          %s237 = int_to_ptr.vmem [resolvable:$true] %s236
          %242 = dma.hbm_to_vmem [thread:$0]  %s1, 4096, %s237, [#allocation5], 64, 64, 4
        $region20: #{tpu_custom_call.1} parent=11 // pred_fallthru
          _
      $region12: #{tpu_custom_call.1} parent=5 // pred_fallthru
        _
      %p243 = scmp.lt.s32.totalorder %s19, 8
      // Predicated region
      $region21: #{tpu_custom_call.1} parent=5 // pred_check
        %p244 = pneg %p243
      $region22: #{tpu_custom_call.1} parent=5 // pred_check_branch
        %246 = sbr.rel (%p244) target = $region24
      $region23: #{tpu_custom_call.1} parent=5 // pred_region
        // Predicated region
        $region25: #{tpu_custom_call.1} parent=23 // pred_check
          %p247 = pneg %p100
        $region26: #{tpu_custom_call.1} parent=23 // pred_check_branch
          %249 = sbr.rel (%p247) target = $region28
        $region27: #{tpu_custom_call.1} parent=23 // pred_region
          %s250 = smul.u32 32, %s27
          %p251 = scmp.lt.s32.totalorder %s250, 63
          %s252 = scalar_select %p251, %s250, 63
          %s253 = smul.addr %s252, 8
          %s254 = scalar_lea.vmem %s2, %s253
          %s255 = smul.u32 32, %s27
        $region28: #{tpu_custom_call.1} parent=23 // pred_fallthru
          _
        // Predicated region
        $region29: #{tpu_custom_call.1} parent=23 // pred_check
          %p256 = pneg %p126
        $region30: #{tpu_custom_call.1} parent=23 // pred_check_branch
          %258 = sbr.rel (%p256) target = $region32
        $region31: #{tpu_custom_call.1} parent=23 // pred_region
          %s259 = sand.u32 %s19, 1
          %s260 = scalar_lea.sflag [#allocation8], %s259
          %s261 = sand.u32 %s116, 1
          %s262 = smul.addr %s261, 64
          %s263 = scalar_lea.vmem [#allocation7], %s262
          %s265 = ssub.s32 1024, 1024
          %266 = vsyncadd %s260, %s265
          %s267 = smul.addr %s26, 16
          %s268 = smul.addr %s267, 64
          %s269 = scalar_lea.hbm %s3, %s268
          %s270 = sshll.u32 %s263, 4
          %s271 = int_to_ptr.vmem [resolvable:$true] %s270
          %276 = dma.hbm_to_vmem [thread:$0]  %s269, 1024, %s271, %s260, 64, 64, 4
        $region32: #{tpu_custom_call.1} parent=23 // pred_fallthru
          _
        // Predicated region
        $region33: #{tpu_custom_call.1} parent=23 // pred_check
          %p277 = pneg %p152
        $region34: #{tpu_custom_call.1} parent=23 // pred_check_branch
          %279 = sbr.rel (%p277) target = $region36
        $region35: #{tpu_custom_call.1} parent=23 // pred_region
          %s280 = sand.u32 %s19, 1
          %s281 = scalar_lea.sflag [#allocation8], %s280
          %s282 = sand.u32 %s142, 1
          %s283 = smul.addr %s282, 64
          %s284 = scalar_lea.vmem [#allocation9], %s283
          %s286 = ssub.s32 1024, 1024
          %287 = vsyncadd %s281, %s286
          %s288 = smul.addr %s26, 16
          %s289 = smul.addr %s288, 64
          %s290 = scalar_lea.hbm %s4, %s289
          %s291 = sshll.u32 %s284, 4
          %s292 = int_to_ptr.vmem [resolvable:$true] %s291
          %297 = dma.hbm_to_vmem [thread:$0]  %s290, 1024, %s292, %s281, 64, 64, 4
        $region36: #{tpu_custom_call.1} parent=23 // pred_fallthru
          _
        // Predicated region
        $region37: #{tpu_custom_call.1} parent=23 // pred_check
          %p298 = pneg %p178
        $region38: #{tpu_custom_call.1} parent=23 // pred_check_branch
          %300 = sbr.rel (%p298) target = $region40
        $region39: #{tpu_custom_call.1} parent=23 // pred_region
          %p301 = scmp.lt.s32.totalorder %s26, 1
          %s302 = scalar_select %p301, %s26, 1
          %s303 = scalar_lea.vmem %s5, %s302
        $region40: #{tpu_custom_call.1} parent=23 // pred_fallthru
          _
      $region24: #{tpu_custom_call.1} parent=5 // pred_fallthru
        _
      %p304 = scmp.le.s32.totalorder 1, %s19
      %p305 = scmp.lt.s32.totalorder %s19, 9
      %p306 = pnand %p304, %p305
      %p307 = pneg %p306
      // Predicated region
      $region41: #{tpu_custom_call.1} parent=5 // pred_check
        _
      $region42: #{tpu_custom_call.1} parent=5 // pred_check_branch
        %309 = sbr.rel (%p306) target = $region44
      $region43: #{tpu_custom_call.1} parent=5 // pred_region
        %s310 = ssub.s32 %s19, 1
        // Predicated region
        $region45: #{tpu_custom_call.1} parent=43 // pred_check
          %p311 = pneg %p80
        $region46: #{tpu_custom_call.1} parent=43 // pred_check_branch
          %313 = sbr.rel (%p311) target = $region48
        $region47: #{tpu_custom_call.1} parent=43 // pred_region
          %314 = dma.done [#allocation5], 4096
        $region48: #{tpu_custom_call.1} parent=43 // pred_fallthru
          _
        %s315 = sand.u32 %s24, 1
        %s316 = scalar_lea.sflag [#allocation8], %s315
        %s317 = sand.u32 %s119, 1
        %s318 = smul.addr %s317, 64
        %s319 = scalar_lea.vmem [#allocation7], %s318
        // Predicated region
        $region49: #{tpu_custom_call.1} parent=43 // pred_check
          %p320 = pneg %p132
        $region50: #{tpu_custom_call.1} parent=43 // pred_check_branch
          %322 = sbr.rel (%p320) target = $region52
        $region51: #{tpu_custom_call.1} parent=43 // pred_region
          %323 = dma.done %s316, 1024
        $region52: #{tpu_custom_call.1} parent=43 // pred_fallthru
          _
        %s324 = sand.u32 %s24, 1
        %s325 = scalar_lea.sflag [#allocation8], %s324
        %s326 = sand.u32 %s145, 1
        %s327 = smul.addr %s326, 64
        %s328 = scalar_lea.vmem [#allocation9], %s327
        // Predicated region
        $region53: #{tpu_custom_call.1} parent=43 // pred_check
          %p329 = pneg %p158
        $region54: #{tpu_custom_call.1} parent=43 // pred_check_branch
          %331 = sbr.rel (%p329) target = $region56
        $region55: #{tpu_custom_call.1} parent=43 // pred_region
          %332 = dma.done %s325, 1024
        $region56: #{tpu_custom_call.1} parent=43 // pred_fallthru
          _
        %p333 = pneg %p59
        %p334 = pneg %p56
        %p335 = pneg %p80
        %p336 = pneg %p77
        %s337 = smul.u32 32, %s30
        %p338 = scmp.lt.s32.totalorder %s337, 63
        %s339 = scalar_select %p338, %s337, 63
        %s340 = smul.addr %s339, 8
        %s341 = scalar_lea.vmem %s2, %s340
        %p342 = pneg %p106
        %p343 = pneg %p103
        %s344 = sand.u32 %s24, 1
        %s345 = scalar_lea.sflag [#allocation8], %s344
        %s346 = sand.u32 %s119, 1
        %s347 = smul.addr %s346, 64
        %s348 = scalar_lea.vmem [#allocation7], %s347
        %p349 = pneg %p132
        %p350 = pneg %p129
        %s351 = sand.u32 %s24, 1
        %s352 = scalar_lea.sflag [#allocation8], %s351
        %s353 = sand.u32 %s145, 1
        %s354 = smul.addr %s353, 64
        %s355 = scalar_lea.vmem [#allocation9], %s354
        %p356 = pneg %p158
        %p357 = pneg %p155
        %p358 = scmp.lt.s32.totalorder %s29, 1
        %s359 = scalar_select %p358, %s29, 1
        %s360 = scalar_lea.vmem %s5, %s359
        %p361 = pneg %p184
        %p362 = pneg %p181
        %p363 = pneg %p212
        %p364 = pneg %p209
        %s365 = sand.u32 %s199, 1
        %s366 = scalar_lea.sflag [#allocation6], %s365
        %s367 = sand.u32 %s199, 1
        %s368 = smul.addr %s367, 256
        %s369 = scalar_lea.vmem [#allocation10], %s368
        %s370 = smul.u32 32, %s30
        %p371 = scmp.lt.s32.totalorder %s370, 63
        %s372 = scalar_select %p371, %s370, 63
        %s373 = smul.addr %s372, 8
        %s374 = scalar_lea.vmem %s2, %s373
        %s375 = smul.u32 32, %s30
        %p376 = scmp.lt.s32.totalorder %s29, 1
        %s377 = scalar_select %p376, %s29, 1
        %s378 = scalar_lea.vmem %s5, %s377
        %s379 = smul.u32 %s30, %s29
        %s380 = smul.u32 32, %s379
        %s382 = smul.u32 %s30, 256
        %s383 = smul.u32 %s31, 256
        %p384 = scmp.eq.s32.totalorder %s31, 0
        // Predicated region
        $region57: #{tpu_custom_call.1} parent=43 // pred_check
          %p385 = pneg %p384
        $region58: #{tpu_custom_call.1} parent=43 // pred_check_branch
          %387 = sbr.rel (%p385) target = $region60
        $region59: #{tpu_custom_call.1} parent=43 // pred_region
          %388 = vst [vmem:[#allocation3] sm:$0xff] 0.0
          %389 = vst [vmem:[#allocation3 + $0x8] sm:$0xff] 0.0
          %390 = vst [vmem:[#allocation3 + $0x10] sm:$0xff] 0.0
          %391 = vst [vmem:[#allocation3 + $0x18] sm:$0xff] 0.0
          %392 = vst [vmem:[#allocation3 + $0x20] sm:$0xff] 0.0
          %393 = vst [vmem:[#allocation3 + $0x28] sm:$0xff] 0.0
          %394 = vst [vmem:[#allocation3 + $0x30] sm:$0xff] 0.0
          %395 = vst [vmem:[#allocation3 + $0x38] sm:$0xff] 0.0
          %396 = vst [vmem:[#allocation3 + $0x40] sm:$0xff] 0.0
          %397 = vst [vmem:[#allocation3 + $0x48] sm:$0xff] 0.0
          %398 = vst [vmem:[#allocation3 + $0x50] sm:$0xff] 0.0
          %399 = vst [vmem:[#allocation3 + $0x58] sm:$0xff] 0.0
          %400 = vst [vmem:[#allocation3 + $0x60] sm:$0xff] 0.0
          %401 = vst [vmem:[#allocation3 + $0x68] sm:$0xff] 0.0
          %402 = vst [vmem:[#allocation3 + $0x70] sm:$0xff] 0.0
          %403 = vst [vmem:[#allocation3 + $0x78] sm:$0xff] 0.0
          %404 = vst [vmem:[#allocation3 + $0x80] sm:$0xff] 0.0
          %405 = vst [vmem:[#allocation3 + $0x88] sm:$0xff] 0.0
          %406 = vst [vmem:[#allocation3 + $0x90] sm:$0xff] 0.0
          %407 = vst [vmem:[#allocation3 + $0x98] sm:$0xff] 0.0
          %408 = vst [vmem:[#allocation3 + $0xa0] sm:$0xff] 0.0
          %409 = vst [vmem:[#allocation3 + $0xa8] sm:$0xff] 0.0
          %410 = vst [vmem:[#allocation3 + $0xb0] sm:$0xff] 0.0
          %411 = vst [vmem:[#allocation3 + $0xb8] sm:$0xff] 0.0
          %412 = vst [vmem:[#allocation3 + $0xc0] sm:$0xff] 0.0
          %413 = vst [vmem:[#allocation3 + $0xc8] sm:$0xff] 0.0
          %414 = vst [vmem:[#allocation3 + $0xd0] sm:$0xff] 0.0
          %415 = vst [vmem:[#allocation3 + $0xd8] sm:$0xff] 0.0
          %416 = vst [vmem:[#allocation3 + $0xe0] sm:$0xff] 0.0
          %417 = vst [vmem:[#allocation3 + $0xe8] sm:$0xff] 0.0
          %418 = vst [vmem:[#allocation3 + $0xf0] sm:$0xff] 0.0
          %419 = vst [vmem:[#allocation3 + $0xf8] sm:$0xff] 0.0
        $region60: #{tpu_custom_call.1} parent=43 // pred_fallthru
          _
        %s420 = sshra.s32 %s382, 5
        %s421 = sand.u32 %s382, 31
        %s422 = smul.u32 %s420, 2
        %s423 = smul.u32 %s31, 32
        %s424 = sadd.s32 %s422, %s423
        %s425 = smul.addr %s424, 8
        %s426 = scalar_lea.vmem %s0, %s425
        %v427 = vld [vmem:[%s426] sm:$0xff]
        %v428 = vld [vmem:[%s426 + $0x8] sm:$0xff]
        %v429 = vld [vmem:[%s426 + $0x10] sm:$0xff]
        %v430 = vld [vmem:[%s426 + $0x18] sm:$0xff]
        %v431 = vld [vmem:[%s426 + $0x20] sm:$0xff]
        %v432 = vld [vmem:[%s426 + $0x28] sm:$0xff]
        %v433 = vld [vmem:[%s426 + $0x30] sm:$0xff]
        %v434 = vld [vmem:[%s426 + $0x38] sm:$0xff]
        %v435 = vld [vmem:[%s426 + $0x40] sm:$0xff]
        %v436 = vld [vmem:[%s426 + $0x48] sm:$0xff]
        %v437 = vld [vmem:[%s426 + $0x50] sm:$0xff]
        %v438 = vld [vmem:[%s426 + $0x58] sm:$0xff]
        %v439 = vld [vmem:[%s426 + $0x60] sm:$0xff]
        %v440 = vld [vmem:[%s426 + $0x68] sm:$0xff]
        %v441 = vld [vmem:[%s426 + $0x70] sm:$0xff]
        %v442 = vld [vmem:[%s426 + $0x78] sm:$0xff]
        %v443 = vunpack.c.l.s8.bf16 %v427
        %v444 = vunpack.c.l.s8.bf16 %v428
        %v445 = vunpack.c.h.s8.bf16 %v427
        %v446 = vunpack.c.h.s8.bf16 %v428
        %v447 = vunpack.c.l.s8.bf16 %v429
        %v448 = vunpack.c.l.s8.bf16 %v430
        %v449 = vunpack.c.h.s8.bf16 %v429
        %v450 = vunpack.c.h.s8.bf16 %v430
        %v451 = vunpack.c.l.s8.bf16 %v431
        %v452 = vunpack.c.l.s8.bf16 %v432
        %v453 = vunpack.c.h.s8.bf16 %v431
        %v454 = vunpack.c.h.s8.bf16 %v432
        %v455 = vunpack.c.l.s8.bf16 %v433
        %v456 = vunpack.c.l.s8.bf16 %v434
        %v457 = vunpack.c.h.s8.bf16 %v433
        %v458 = vunpack.c.h.s8.bf16 %v434
        %v459 = vunpack.c.l.s8.bf16 %v435
        %v460 = vunpack.c.l.s8.bf16 %v436
        %v461 = vunpack.c.h.s8.bf16 %v435
        %v462 = vunpack.c.h.s8.bf16 %v436
        %v463 = vunpack.c.l.s8.bf16 %v437
        %v464 = vunpack.c.l.s8.bf16 %v438
        %v465 = vunpack.c.h.s8.bf16 %v437
        %v466 = vunpack.c.h.s8.bf16 %v438
        %v467 = vunpack.c.l.s8.bf16 %v439
        %v468 = vunpack.c.l.s8.bf16 %v440
        %v469 = vunpack.c.h.s8.bf16 %v439
        %v470 = vunpack.c.h.s8.bf16 %v440
        %v471 = vunpack.c.l.s8.bf16 %v441
        %v472 = vunpack.c.l.s8.bf16 %v442
        %v473 = vunpack.c.h.s8.bf16 %v441
        %v474 = vunpack.c.h.s8.bf16 %v442
        %p475 = scmp.eq.s32.totalorder %s29, 0
        // Predicated region
        $region61: #{tpu_custom_call.1} parent=43 // pred_check
          %p476 = pneg %p475
        $region62: #{tpu_custom_call.1} parent=43 // pred_check_branch
          %478 = sbr.rel (%p476) target = $region64
        $region63: #{tpu_custom_call.1} parent=43 // pred_region
          %v479 = vld [vmem:[#allocation3] sm:$0xff]
          %v480 = vld [vmem:[#allocation3 + $0x8] sm:$0xff]
          %v481 = vld [vmem:[#allocation3 + $0x10] sm:$0xff]
          %v482 = vld [vmem:[#allocation3 + $0x18] sm:$0xff]
          %v483 = vld [vmem:[#allocation3 + $0x20] sm:$0xff]
          %v484 = vld [vmem:[#allocation3 + $0x28] sm:$0xff]
          %v485 = vld [vmem:[#allocation3 + $0x30] sm:$0xff]
          %v486 = vld [vmem:[#allocation3 + $0x38] sm:$0xff]
          %v487 = vld [vmem:[#allocation3 + $0x40] sm:$0xff]
          %v488 = vld [vmem:[#allocation3 + $0x48] sm:$0xff]
          %v489 = vld [vmem:[#allocation3 + $0x50] sm:$0xff]
          %v490 = vld [vmem:[#allocation3 + $0x58] sm:$0xff]
          %v491 = vld [vmem:[#allocation3 + $0x60] sm:$0xff]
          %v492 = vld [vmem:[#allocation3 + $0x68] sm:$0xff]
          %v493 = vld [vmem:[#allocation3 + $0x70] sm:$0xff]
          %v494 = vld [vmem:[#allocation3 + $0x78] sm:$0xff]
          %v495 = vld [vmem:[#allocation3 + $0x80] sm:$0xff]
          %v496 = vld [vmem:[#allocation3 + $0x88] sm:$0xff]
          %v497 = vld [vmem:[#allocation3 + $0x90] sm:$0xff]
          %v498 = vld [vmem:[#allocation3 + $0x98] sm:$0xff]
          %v499 = vld [vmem:[#allocation3 + $0xa0] sm:$0xff]
          %v500 = vld [vmem:[#allocation3 + $0xa8] sm:$0xff]
          %v501 = vld [vmem:[#allocation3 + $0xb0] sm:$0xff]
          %v502 = vld [vmem:[#allocation3 + $0xb8] sm:$0xff]
          %v503 = vld [vmem:[#allocation3 + $0xc0] sm:$0xff]
          %v504 = vld [vmem:[#allocation3 + $0xc8] sm:$0xff]
          %v505 = vld [vmem:[#allocation3 + $0xd0] sm:$0xff]
          %v506 = vld [vmem:[#allocation3 + $0xd8] sm:$0xff]
          %v507 = vld [vmem:[#allocation3 + $0xe0] sm:$0xff]
          %v508 = vld [vmem:[#allocation3 + $0xe8] sm:$0xff]
          %v509 = vld [vmem:[#allocation3 + $0xf0] sm:$0xff]
          %v510 = vld [vmem:[#allocation3 + $0xf8] sm:$0xff]
          %s511 = sshra.s32 %s383, 3
          %s512 = sand.u32 %s383, 7
          %s513 = smul.addr %s511, 4
          %s514 = scalar_lea.vmem [#allocation4], %s513
          %v515 = vld [vmem:[%s514] sm:$0xf]
          %v516 = vld [vmem:[%s514 + $0x4] sm:$0xf]
          %v517 = vld [vmem:[%s514 + $0x8] sm:$0xf]
          %v518 = vld [vmem:[%s514 + $0xc] sm:$0xf]
          %v519 = vld [vmem:[%s514 + $0x10] sm:$0xf]
          %v520 = vld [vmem:[%s514 + $0x14] sm:$0xf]
          %v521 = vld [vmem:[%s514 + $0x18] sm:$0xf]
          %v522 = vld [vmem:[%s514 + $0x1c] sm:$0xf]
          %v523 = vld [vmem:[%s514 + $0x20] sm:$0xf]
          %v524 = vld [vmem:[%s514 + $0x24] sm:$0xf]
          %v525 = vld [vmem:[%s514 + $0x28] sm:$0xf]
          %v526 = vld [vmem:[%s514 + $0x2c] sm:$0xf]
          %v527 = vld [vmem:[%s514 + $0x30] sm:$0xf]
          %v528 = vld [vmem:[%s514 + $0x34] sm:$0xf]
          %v529 = vld [vmem:[%s514 + $0x38] sm:$0xf]
          %v530 = vld [vmem:[%s514 + $0x3c] sm:$0xf]
          %v531 = vld [vmem:[%s514 + $0x40] sm:$0xf]
          %v532 = vld [vmem:[%s514 + $0x44] sm:$0xf]
          %v533 = vld [vmem:[%s514 + $0x48] sm:$0xf]
          %v534 = vld [vmem:[%s514 + $0x4c] sm:$0xf]
          %v535 = vld [vmem:[%s514 + $0x50] sm:$0xf]
          %v536 = vld [vmem:[%s514 + $0x54] sm:$0xf]
          %v537 = vld [vmem:[%s514 + $0x58] sm:$0xf]
          %v538 = vld [vmem:[%s514 + $0x5c] sm:$0xf]
          %v539 = vld [vmem:[%s514 + $0x60] sm:$0xf]
          %v540 = vld [vmem:[%s514 + $0x64] sm:$0xf]
          %v541 = vld [vmem:[%s514 + $0x68] sm:$0xf]
          %v542 = vld [vmem:[%s514 + $0x6c] sm:$0xf]
          %v543 = vld [vmem:[%s514 + $0x70] sm:$0xf]
          %v544 = vld [vmem:[%s514 + $0x74] sm:$0xf]
          %v545 = vld [vmem:[%s514 + $0x78] sm:$0xf]
          %v546 = vld [vmem:[%s514 + $0x7c] sm:$0xf]
          %v579 = vunpack.c.l.b16 %v515
          %v580 = vunpack.c.l.b16 %v516
          %v581 = vunpack.c.l.b16 %v517
          %v582 = vunpack.c.l.b16 %v518
          %v583 = vunpack.c.l.b16 %v519
          %v584 = vunpack.c.l.b16 %v520
          %v585 = vunpack.c.l.b16 %v521
          %v586 = vunpack.c.l.b16 %v522
          %v587 = vunpack.c.l.b16 %v523
          %v588 = vunpack.c.l.b16 %v524
          %v589 = vunpack.c.l.b16 %v525
          %v590 = vunpack.c.l.b16 %v526
          %v591 = vunpack.c.l.b16 %v527
          %v592 = vunpack.c.l.b16 %v528
          %v593 = vunpack.c.l.b16 %v529
          %v594 = vunpack.c.l.b16 %v530
          %v595 = vunpack.c.l.b16 %v531
          %v596 = vunpack.c.l.b16 %v532
          %v597 = vunpack.c.l.b16 %v533
          %v598 = vunpack.c.l.b16 %v534
          %v599 = vunpack.c.l.b16 %v535
          %v600 = vunpack.c.l.b16 %v536
          %v601 = vunpack.c.l.b16 %v537
          %v602 = vunpack.c.l.b16 %v538
          %v603 = vunpack.c.l.b16 %v539
          %v604 = vunpack.c.l.b16 %v540
          %v605 = vunpack.c.l.b16 %v541
          %v606 = vunpack.c.l.b16 %v542
          %v607 = vunpack.c.l.b16 %v543
          %v608 = vunpack.c.l.b16 %v544
          %v609 = vunpack.c.l.b16 %v545
          %v610 = vunpack.c.l.b16 %v546
          %v611 = vpack.c.b16 %v580, %v579
          %v612 = vpack.c.b16 %v582, %v581
          %v613 = vpack.c.b16 %v584, %v583
          %v614 = vpack.c.b16 %v586, %v585
          %v615 = vpack.c.b16 %v588, %v587
          %v616 = vpack.c.b16 %v590, %v589
          %v617 = vpack.c.b16 %v592, %v591
          %v618 = vpack.c.b16 %v594, %v593
          %v619 = vpack.c.b16 %v596, %v595
          %v620 = vpack.c.b16 %v598, %v597
          %v621 = vpack.c.b16 %v600, %v599
          %v622 = vpack.c.b16 %v602, %v601
          %v623 = vpack.c.b16 %v604, %v603
          %v624 = vpack.c.b16 %v606, %v605
          %v625 = vpack.c.b16 %v608, %v607
          %v626 = vpack.c.b16 %v610, %v609
          %643 = vmatprep.subr.bf16.mxu0 0
          %644 = vmatpush1.bf16.msra.mxu0 %v611
          %645 = vmatprep.subr.bf16.mxu0 0
          %646 = vmatpush1.bf16.msra.mxu0 %v612
          %647 = vmatprep.subr.bf16.mxu0 0
          %648 = vmatpush1.bf16.msra.mxu0 %v613
          %649 = vmatprep.subr.bf16.mxu0 0
          %650 = vmatpush1.bf16.msra.mxu0 %v614
          %651 = vmatprep.subr.bf16.mxu0 0
          %652 = vmatpush1.bf16.msra.mxu0 %v615
          %653 = vmatprep.subr.bf16.mxu0 0
          %654 = vmatpush1.bf16.msra.mxu0 %v616
          %655 = vmatprep.subr.bf16.mxu0 0
          %656 = vmatpush1.bf16.msra.mxu0 %v617
          %657 = vmatprep.subr.bf16.mxu0 0
          %658 = vmatpush1.bf16.msra.mxu0 %v618
          %659 = vmatprep.subr.bf16.mxu0 0
          %660 = vmatpush1.bf16.msra.mxu0 %v619
          %661 = vmatprep.subr.bf16.mxu0 0
          %662 = vmatpush1.bf16.msra.mxu0 %v620
          %663 = vmatprep.subr.bf16.mxu0 0
          %664 = vmatpush1.bf16.msra.mxu0 %v621
          %665 = vmatprep.subr.bf16.mxu0 0
          %666 = vmatpush1.bf16.msra.mxu0 %v622
          %667 = vmatprep.subr.bf16.mxu0 0
          %668 = vmatpush1.bf16.msra.mxu0 %v623
          %669 = vmatprep.subr.bf16.mxu0 0
          %670 = vmatpush1.bf16.msra.mxu0 %v624
          %671 = vmatprep.subr.bf16.mxu0 0
          %672 = vmatpush1.bf16.msra.mxu0 %v625
          %673 = vmatprep.subr.bf16.mxu0 0
          %674 = vmatpush1.bf16.msra.mxu0 %v626
          %675 = vmatprep.mubr.bf16.mxu0 %v444
          %676 = vmatmul.mubr.bf16.gmra.mrb[0].mxu0 %v443
          %v677 = vpop.f32.mrb[0].mxu0
          %v678 = vadd.f32 0.0, %v677
          %v679 = vpop.f32.mrb[0].mxu0
          %v680 = vpop.f32.mrb[0].mxu0
          %v681 = vadd.f32 0.0, %v680
          %v682 = vpop.f32.mrb[0].mxu0
          %683 = vmatprep.mubr.bf16.mxu0 %v446
          %684 = vmatmul.mubr.bf16.gmra.mrb[0].mxu0 %v445
          %v685 = vpop.f32.mrb[0].mxu0
          %v686 = vadd.f32 0.0, %v685
          %v687 = vpop.f32.mrb[0].mxu0
          %v688 = vpop.f32.mrb[0].mxu0
          %v689 = vadd.f32 0.0, %v688
          %v690 = vpop.f32.mrb[0].mxu0
          %691 = vmatprep.mubr.bf16.mxu0 %v448
          %692 = vmatmul.mubr.bf16.gmra.mrb[0].mxu0 %v447
          %v693 = vpop.f32.mrb[0].mxu0
          %v694 = vadd.f32 0.0, %v693
          %v695 = vpop.f32.mrb[0].mxu0
          %v696 = vpop.f32.mrb[0].mxu0
          %v697 = vadd.f32 0.0, %v696
          %v698 = vpop.f32.mrb[0].mxu0
          %699 = vmatprep.mubr.bf16.mxu0 %v450
          %700 = vmatmul.mubr.bf16.gmra.mrb[0].mxu0 %v449
          %v701 = vpop.f32.mrb[0].mxu0
          %v702 = vadd.f32 0.0, %v701
          %v703 = vpop.f32.mrb[0].mxu0
          %v704 = vpop.f32.mrb[0].mxu0
          %v705 = vadd.f32 0.0, %v704
          %v706 = vpop.f32.mrb[0].mxu0
          %707 = vmatprep.mubr.bf16.mxu0 %v452
          %708 = vmatmul.mubr.bf16.gmra.mrb[0].mxu0 %v451
          %v709 = vpop.f32.mrb[0].mxu0
          %v710 = vadd.f32 0.0, %v709
          %v711 = vpop.f32.mrb[0].mxu0
          %v712 = vpop.f32.mrb[0].mxu0
          %v713 = vadd.f32 0.0, %v712
          %v714 = vpop.f32.mrb[0].mxu0
          %715 = vmatprep.mubr.bf16.mxu0 %v454
          %716 = vmatmul.mubr.bf16.gmra.mrb[0].mxu0 %v453
          %v717 = vpop.f32.mrb[0].mxu0
          %v718 = vadd.f32 0.0, %v717
          %v719 = vpop.f32.mrb[0].mxu0
          %v720 = vpop.f32.mrb[0].mxu0
          %v721 = vadd.f32 0.0, %v720
          %v722 = vpop.f32.mrb[0].mxu0
          %723 = vmatprep.mubr.bf16.mxu0 %v456
          %724 = vmatmul.mubr.bf16.gmra.mrb[0].mxu0 %v455
          %v725 = vpop.f32.mrb[0].mxu0
          %v726 = vadd.f32 0.0, %v725
          %v727 = vpop.f32.mrb[0].mxu0
          %v728 = vpop.f32.mrb[0].mxu0
          %v729 = vadd.f32 0.0, %v728
          %v730 = vpop.f32.mrb[0].mxu0
          %731 = vmatprep.mubr.bf16.mxu0 %v458
          %732 = vmatmul.mubr.bf16.gmra.mrb[0].mxu0 %v457
          %v733 = vpop.f32.mrb[0].mxu0
          %v734 = vadd.f32 0.0, %v733
          %v735 = vpop.f32.mrb[0].mxu0
          %v736 = vpop.f32.mrb[0].mxu0
          %v737 = vadd.f32 0.0, %v736
          %v738 = vpop.f32.mrb[0].mxu0
          %739 = vmatprep.mubr.bf16.mxu0 %v460
          %740 = vmatmul.mubr.bf16.gmra.mrb[0].mxu0 %v459
          %v741 = vpop.f32.mrb[0].mxu0
          %v742 = vadd.f32 0.0, %v741
          %v743 = vpop.f32.mrb[0].mxu0
          %v744 = vpop.f32.mrb[0].mxu0
          %v745 = vadd.f32 0.0, %v744
          %v746 = vpop.f32.mrb[0].mxu0
          %747 = vmatprep.mubr.bf16.mxu0 %v462
          %748 = vmatmul.mubr.bf16.gmra.mrb[0].mxu0 %v461
          %v749 = vpop.f32.mrb[0].mxu0
          %v750 = vadd.f32 0.0, %v749
          %v751 = vpop.f32.mrb[0].mxu0
          %v752 = vpop.f32.mrb[0].mxu0
          %v753 = vadd.f32 0.0, %v752
          %v754 = vpop.f32.mrb[0].mxu0
          %755 = vmatprep.mubr.bf16.mxu0 %v464
          %756 = vmatmul.mubr.bf16.gmra.mrb[0].mxu0 %v463
          %v757 = vpop.f32.mrb[0].mxu0
          %v758 = vadd.f32 0.0, %v757
          %v759 = vpop.f32.mrb[0].mxu0
          %v760 = vpop.f32.mrb[0].mxu0
          %v761 = vadd.f32 0.0, %v760
          %v762 = vpop.f32.mrb[0].mxu0
          %763 = vmatprep.mubr.bf16.mxu0 %v466
          %764 = vmatmul.mubr.bf16.gmra.mrb[0].mxu0 %v465
          %v765 = vpop.f32.mrb[0].mxu0
          %v766 = vadd.f32 0.0, %v765
          %v767 = vpop.f32.mrb[0].mxu0
          %v768 = vpop.f32.mrb[0].mxu0
          %v769 = vadd.f32 0.0, %v768
          %v770 = vpop.f32.mrb[0].mxu0
          %771 = vmatprep.mubr.bf16.mxu0 %v468
          %772 = vmatmul.mubr.bf16.gmra.mrb[0].mxu0 %v467
          %v773 = vpop.f32.mrb[0].mxu0
          %v774 = vadd.f32 0.0, %v773
          %v775 = vpop.f32.mrb[0].mxu0
          %v776 = vpop.f32.mrb[0].mxu0
          %v777 = vadd.f32 0.0, %v776
          %v778 = vpop.f32.mrb[0].mxu0
          %779 = vmatprep.mubr.bf16.mxu0 %v470
          %780 = vmatmul.mubr.bf16.gmra.mrb[0].mxu0 %v469
          %v781 = vpop.f32.mrb[0].mxu0
          %v782 = vadd.f32 0.0, %v781
          %v783 = vpop.f32.mrb[0].mxu0
          %v784 = vpop.f32.mrb[0].mxu0
          %v785 = vadd.f32 0.0, %v784
          %v786 = vpop.f32.mrb[0].mxu0
          %787 = vmatprep.mubr.bf16.mxu0 %v472
          %788 = vmatmul.mubr.bf16.gmra.mrb[0].mxu0 %v471
          %v789 = vpop.f32.mrb[0].mxu0
          %v790 = vadd.f32 0.0, %v789
          %v791 = vpop.f32.mrb[0].mxu0
          %v792 = vpop.f32.mrb[0].mxu0
          %v793 = vadd.f32 0.0, %v792
          %v794 = vpop.f32.mrb[0].mxu0
          %795 = vmatprep.mubr.bf16.mxu0 %v474
          %796 = vmatmul.mubr.bf16.gmra.mrb[0].mxu0 %v473
          %v797 = vpop.f32.mrb[0].mxu0
          %v798 = vadd.f32 0.0, %v797
          %v799 = vpop.f32.mrb[0].mxu0
          %v800 = vpop.f32.mrb[0].mxu0
          %v801 = vadd.f32 0.0, %v800
          %v802 = vpop.f32.mrb[0].mxu0
          %803 = vdwg.mxu0
          %v804 = vadd.f32 %v479, %v678
          %v805 = vadd.f32 %v480, %v681
          %v806 = vadd.f32 %v481, %v686
          %v807 = vadd.f32 %v482, %v689
          %v808 = vadd.f32 %v483, %v694
          %v809 = vadd.f32 %v484, %v697
          %v810 = vadd.f32 %v485, %v702
          %v811 = vadd.f32 %v486, %v705
          %v812 = vadd.f32 %v487, %v710
          %v813 = vadd.f32 %v488, %v713
          %v814 = vadd.f32 %v489, %v718
          %v815 = vadd.f32 %v490, %v721
          %v816 = vadd.f32 %v491, %v726
          %v817 = vadd.f32 %v492, %v729
          %v818 = vadd.f32 %v493, %v734
          %v819 = vadd.f32 %v494, %v737
          %v820 = vadd.f32 %v495, %v742
          %v821 = vadd.f32 %v496, %v745
          %v822 = vadd.f32 %v497, %v750
          %v823 = vadd.f32 %v498, %v753
          %v824 = vadd.f32 %v499, %v758
          %v825 = vadd.f32 %v500, %v761
          %v826 = vadd.f32 %v501, %v766
          %v827 = vadd.f32 %v502, %v769
          %v828 = vadd.f32 %v503, %v774
          %v829 = vadd.f32 %v504, %v777
          %v830 = vadd.f32 %v505, %v782
          %v831 = vadd.f32 %v506, %v785
          %v832 = vadd.f32 %v507, %v790
          %v833 = vadd.f32 %v508, %v793
          %v834 = vadd.f32 %v509, %v798
          %v835 = vadd.f32 %v510, %v801
          %836 = vst [vmem:[#allocation3] sm:$0xff] %v804
          %837 = vst [vmem:[#allocation3 + $0x8] sm:$0xff] %v805
          %838 = vst [vmem:[#allocation3 + $0x10] sm:$0xff] %v806
          %839 = vst [vmem:[#allocation3 + $0x18] sm:$0xff] %v807
          %840 = vst [vmem:[#allocation3 + $0x20] sm:$0xff] %v808
          %841 = vst [vmem:[#allocation3 + $0x28] sm:$0xff] %v809
          %842 = vst [vmem:[#allocation3 + $0x30] sm:$0xff] %v810
          %843 = vst [vmem:[#allocation3 + $0x38] sm:$0xff] %v811
          %844 = vst [vmem:[#allocation3 + $0x40] sm:$0xff] %v812
          %845 = vst [vmem:[#allocation3 + $0x48] sm:$0xff] %v813
          %846 = vst [vmem:[#allocation3 + $0x50] sm:$0xff] %v814
          %847 = vst [vmem:[#allocation3 + $0x58] sm:$0xff] %v815
          %848 = vst [vmem:[#allocation3 + $0x60] sm:$0xff] %v816
          %849 = vst [vmem:[#allocation3 + $0x68] sm:$0xff] %v817
          %850 = vst [vmem:[#allocation3 + $0x70] sm:$0xff] %v818
          %851 = vst [vmem:[#allocation3 + $0x78] sm:$0xff] %v819
          %852 = vst [vmem:[#allocation3 + $0x80] sm:$0xff] %v820
          %853 = vst [vmem:[#allocation3 + $0x88] sm:$0xff] %v821
          %854 = vst [vmem:[#allocation3 + $0x90] sm:$0xff] %v822
          %855 = vst [vmem:[#allocation3 + $0x98] sm:$0xff] %v823
          %856 = vst [vmem:[#allocation3 + $0xa0] sm:$0xff] %v824
          %857 = vst [vmem:[#allocation3 + $0xa8] sm:$0xff] %v825
          %858 = vst [vmem:[#allocation3 + $0xb0] sm:$0xff] %v826
          %859 = vst [vmem:[#allocation3 + $0xb8] sm:$0xff] %v827
          %860 = vst [vmem:[#allocation3 + $0xc0] sm:$0xff] %v828
          %861 = vst [vmem:[#allocation3 + $0xc8] sm:$0xff] %v829
          %862 = vst [vmem:[#allocation3 + $0xd0] sm:$0xff] %v830
          %863 = vst [vmem:[#allocation3 + $0xd8] sm:$0xff] %v831
          %864 = vst [vmem:[#allocation3 + $0xe0] sm:$0xff] %v832
          %865 = vst [vmem:[#allocation3 + $0xe8] sm:$0xff] %v833
          %866 = vst [vmem:[#allocation3 + $0xf0] sm:$0xff] %v834
          %867 = vst [vmem:[#allocation3 + $0xf8] sm:$0xff] %v835
        $region64: #{tpu_custom_call.1} parent=43 // pred_fallthru
          _
        %p868 = scmp.eq.s32.totalorder %s29, 1
        // Predicated region
        $region65: #{tpu_custom_call.1} parent=43 // pred_check
          %p869 = pneg %p868
        $region66: #{tpu_custom_call.1} parent=43 // pred_check_branch
          %871 = sbr.rel (%p869) target = $region68
        $region67: #{tpu_custom_call.1} parent=43 // pred_region
          %v872 = vld [vmem:[#allocation3] sm:$0xff]
          %v873 = vld [vmem:[#allocation3 + $0x8] sm:$0xff]
          %v874 = vld [vmem:[#allocation3 + $0x10] sm:$0xff]
          %v875 = vld [vmem:[#allocation3 + $0x18] sm:$0xff]
          %v876 = vld [vmem:[#allocation3 + $0x20] sm:$0xff]
          %v877 = vld [vmem:[#allocation3 + $0x28] sm:$0xff]
          %v878 = vld [vmem:[#allocation3 + $0x30] sm:$0xff]
          %v879 = vld [vmem:[#allocation3 + $0x38] sm:$0xff]
          %v880 = vld [vmem:[#allocation3 + $0x40] sm:$0xff]
          %v881 = vld [vmem:[#allocation3 + $0x48] sm:$0xff]
          %v882 = vld [vmem:[#allocation3 + $0x50] sm:$0xff]
          %v883 = vld [vmem:[#allocation3 + $0x58] sm:$0xff]
          %v884 = vld [vmem:[#allocation3 + $0x60] sm:$0xff]
          %v885 = vld [vmem:[#allocation3 + $0x68] sm:$0xff]
          %v886 = vld [vmem:[#allocation3 + $0x70] sm:$0xff]
          %v887 = vld [vmem:[#allocation3 + $0x78] sm:$0xff]
          %v888 = vld [vmem:[#allocation3 + $0x80] sm:$0xff]
          %v889 = vld [vmem:[#allocation3 + $0x88] sm:$0xff]
          %v890 = vld [vmem:[#allocation3 + $0x90] sm:$0xff]
          %v891 = vld [vmem:[#allocation3 + $0x98] sm:$0xff]
          %v892 = vld [vmem:[#allocation3 + $0xa0] sm:$0xff]
          %v893 = vld [vmem:[#allocation3 + $0xa8] sm:$0xff]
          %v894 = vld [vmem:[#allocation3 + $0xb0] sm:$0xff]
          %v895 = vld [vmem:[#allocation3 + $0xb8] sm:$0xff]
          %v896 = vld [vmem:[#allocation3 + $0xc0] sm:$0xff]
          %v897 = vld [vmem:[#allocation3 + $0xc8] sm:$0xff]
          %v898 = vld [vmem:[#allocation3 + $0xd0] sm:$0xff]
          %v899 = vld [vmem:[#allocation3 + $0xd8] sm:$0xff]
          %v900 = vld [vmem:[#allocation3 + $0xe0] sm:$0xff]
          %v901 = vld [vmem:[#allocation3 + $0xe8] sm:$0xff]
          %v902 = vld [vmem:[#allocation3 + $0xf0] sm:$0xff]
          %v903 = vld [vmem:[#allocation3 + $0xf8] sm:$0xff]
          %s904 = sshra.s32 %s383, 4
          %s905 = sand.u32 %s383, 15
          %s906 = smul.addr %s904, 8
          %s907 = scalar_lea.vmem [#allocation2], %s906
          %v908 = vld [vmem:[%s907] sm:$0xff]
          %v909 = vld [vmem:[%s907 + $0x8] sm:$0xff]
          %v910 = vld [vmem:[%s907 + $0x10] sm:$0xff]
          %v911 = vld [vmem:[%s907 + $0x18] sm:$0xff]
          %v912 = vld [vmem:[%s907 + $0x20] sm:$0xff]
          %v913 = vld [vmem:[%s907 + $0x28] sm:$0xff]
          %v914 = vld [vmem:[%s907 + $0x30] sm:$0xff]
          %v915 = vld [vmem:[%s907 + $0x38] sm:$0xff]
          %v916 = vld [vmem:[%s907 + $0x40] sm:$0xff]
          %v917 = vld [vmem:[%s907 + $0x48] sm:$0xff]
          %v918 = vld [vmem:[%s907 + $0x50] sm:$0xff]
          %v919 = vld [vmem:[%s907 + $0x58] sm:$0xff]
          %v920 = vld [vmem:[%s907 + $0x60] sm:$0xff]
          %v921 = vld [vmem:[%s907 + $0x68] sm:$0xff]
          %v922 = vld [vmem:[%s907 + $0x70] sm:$0xff]
          %v923 = vld [vmem:[%s907 + $0x78] sm:$0xff]
          %924 = vmatprep.subr.bf16.mxu0 0
          %925 = vmatpush1.bf16.msra.mxu0 %v908
          %926 = vmatprep.subr.bf16.mxu0 0
          %927 = vmatpush1.bf16.msra.mxu0 %v909
          %928 = vmatprep.subr.bf16.mxu0 0
          %929 = vmatpush1.bf16.msra.mxu0 %v910
          %930 = vmatprep.subr.bf16.mxu0 0
          %931 = vmatpush1.bf16.msra.mxu0 %v911
          %932 = vmatprep.subr.bf16.mxu0 0
          %933 = vmatpush1.bf16.msra.mxu0 %v912
          %934 = vmatprep.subr.bf16.mxu0 0
          %935 = vmatpush1.bf16.msra.mxu0 %v913
          %936 = vmatprep.subr.bf16.mxu0 0
          %937 = vmatpush1.bf16.msra.mxu0 %v914
          %938 = vmatprep.subr.bf16.mxu0 0
          %939 = vmatpush1.bf16.msra.mxu0 %v915
          %940 = vmatprep.subr.bf16.mxu0 0
          %941 = vmatpush1.bf16.msra.mxu0 %v916
          %942 = vmatprep.subr.bf16.mxu0 0
          %943 = vmatpush1.bf16.msra.mxu0 %v917
          %944 = vmatprep.subr.bf16.mxu0 0
          %945 = vmatpush1.bf16.msra.mxu0 %v918
          %946 = vmatprep.subr.bf16.mxu0 0
          %947 = vmatpush1.bf16.msra.mxu0 %v919
          %948 = vmatprep.subr.bf16.mxu0 0
          %949 = vmatpush1.bf16.msra.mxu0 %v920
          %950 = vmatprep.subr.bf16.mxu0 0
          %951 = vmatpush1.bf16.msra.mxu0 %v921
          %952 = vmatprep.subr.bf16.mxu0 0
          %953 = vmatpush1.bf16.msra.mxu0 %v922
          %954 = vmatprep.subr.bf16.mxu0 0
          %955 = vmatpush1.bf16.msra.mxu0 %v923
          %956 = vmatprep.mubr.bf16.mxu0 %v444
          %957 = vmatmul.mubr.bf16.gmra.mrb[0].mxu0 %v443
          %v958 = vpop.f32.mrb[0].mxu0
          %v959 = vadd.f32 0.0, %v958
          %v960 = vpop.f32.mrb[0].mxu0
          %v961 = vpop.f32.mrb[0].mxu0
          %v962 = vadd.f32 0.0, %v961
          %v963 = vpop.f32.mrb[0].mxu0
          %964 = vmatprep.mubr.bf16.mxu0 %v446
          %965 = vmatmul.mubr.bf16.gmra.mrb[0].mxu0 %v445
          %v966 = vpop.f32.mrb[0].mxu0
          %v967 = vadd.f32 0.0, %v966
          %v968 = vpop.f32.mrb[0].mxu0
          %v969 = vpop.f32.mrb[0].mxu0
          %v970 = vadd.f32 0.0, %v969
          %v971 = vpop.f32.mrb[0].mxu0
          %972 = vmatprep.mubr.bf16.mxu0 %v448
          %973 = vmatmul.mubr.bf16.gmra.mrb[0].mxu0 %v447
          %v974 = vpop.f32.mrb[0].mxu0
          %v975 = vadd.f32 0.0, %v974
          %v976 = vpop.f32.mrb[0].mxu0
          %v977 = vpop.f32.mrb[0].mxu0
          %v978 = vadd.f32 0.0, %v977
          %v979 = vpop.f32.mrb[0].mxu0
          %980 = vmatprep.mubr.bf16.mxu0 %v450
          %981 = vmatmul.mubr.bf16.gmra.mrb[0].mxu0 %v449
          %v982 = vpop.f32.mrb[0].mxu0
          %v983 = vadd.f32 0.0, %v982
          %v984 = vpop.f32.mrb[0].mxu0
          %v985 = vpop.f32.mrb[0].mxu0
          %v986 = vadd.f32 0.0, %v985
          %v987 = vpop.f32.mrb[0].mxu0
          %988 = vmatprep.mubr.bf16.mxu0 %v452
          %989 = vmatmul.mubr.bf16.gmra.mrb[0].mxu0 %v451
          %v990 = vpop.f32.mrb[0].mxu0
          %v991 = vadd.f32 0.0, %v990
          %v992 = vpop.f32.mrb[0].mxu0
          %v993 = vpop.f32.mrb[0].mxu0
          %v994 = vadd.f32 0.0, %v993
          %v995 = vpop.f32.mrb[0].mxu0
          %996 = vmatprep.mubr.bf16.mxu0 %v454
          %997 = vmatmul.mubr.bf16.gmra.mrb[0].mxu0 %v453
          %v998 = vpop.f32.mrb[0].mxu0
          %v999 = vadd.f32 0.0, %v998
          %v1000 = vpop.f32.mrb[0].mxu0
          %v1001 = vpop.f32.mrb[0].mxu0
          %v1002 = vadd.f32 0.0, %v1001
          %v1003 = vpop.f32.mrb[0].mxu0
          %1004 = vmatprep.mubr.bf16.mxu0 %v456
          %1005 = vmatmul.mubr.bf16.gmra.mrb[0].mxu0 %v455
          %v1006 = vpop.f32.mrb[0].mxu0
          %v1007 = vadd.f32 0.0, %v1006
          %v1008 = vpop.f32.mrb[0].mxu0
          %v1009 = vpop.f32.mrb[0].mxu0
          %v1010 = vadd.f32 0.0, %v1009
          %v1011 = vpop.f32.mrb[0].mxu0
          %1012 = vmatprep.mubr.bf16.mxu0 %v458
          %1013 = vmatmul.mubr.bf16.gmra.mrb[0].mxu0 %v457
          %v1014 = vpop.f32.mrb[0].mxu0
          %v1015 = vadd.f32 0.0, %v1014
          %v1016 = vpop.f32.mrb[0].mxu0
          %v1017 = vpop.f32.mrb[0].mxu0
          %v1018 = vadd.f32 0.0, %v1017
          %v1019 = vpop.f32.mrb[0].mxu0
          %1020 = vmatprep.mubr.bf16.mxu0 %v460
          %1021 = vmatmul.mubr.bf16.gmra.mrb[0].mxu0 %v459
          %v1022 = vpop.f32.mrb[0].mxu0
          %v1023 = vadd.f32 0.0, %v1022
          %v1024 = vpop.f32.mrb[0].mxu0
          %v1025 = vpop.f32.mrb[0].mxu0
          %v1026 = vadd.f32 0.0, %v1025
          %v1027 = vpop.f32.mrb[0].mxu0
          %1028 = vmatprep.mubr.bf16.mxu0 %v462
          %1029 = vmatmul.mubr.bf16.gmra.mrb[0].mxu0 %v461
          %v1030 = vpop.f32.mrb[0].mxu0
          %v1031 = vadd.f32 0.0, %v1030
          %v1032 = vpop.f32.mrb[0].mxu0
          %v1033 = vpop.f32.mrb[0].mxu0
          %v1034 = vadd.f32 0.0, %v1033
          %v1035 = vpop.f32.mrb[0].mxu0
          %1036 = vmatprep.mubr.bf16.mxu0 %v464
          %1037 = vmatmul.mubr.bf16.gmra.mrb[0].mxu0 %v463
          %v1038 = vpop.f32.mrb[0].mxu0
          %v1039 = vadd.f32 0.0, %v1038
          %v1040 = vpop.f32.mrb[0].mxu0
          %v1041 = vpop.f32.mrb[0].mxu0
          %v1042 = vadd.f32 0.0, %v1041
          %v1043 = vpop.f32.mrb[0].mxu0
          %1044 = vmatprep.mubr.bf16.mxu0 %v466
          %1045 = vmatmul.mubr.bf16.gmra.mrb[0].mxu0 %v465
          %v1046 = vpop.f32.mrb[0].mxu0
          %v1047 = vadd.f32 0.0, %v1046
          %v1048 = vpop.f32.mrb[0].mxu0
          %v1049 = vpop.f32.mrb[0].mxu0
          %v1050 = vadd.f32 0.0, %v1049
          %v1051 = vpop.f32.mrb[0].mxu0
          %1052 = vmatprep.mubr.bf16.mxu0 %v468
          %1053 = vmatmul.mubr.bf16.gmra.mrb[0].mxu0 %v467
          %v1054 = vpop.f32.mrb[0].mxu0
          %v1055 = vadd.f32 0.0, %v1054
          %v1056 = vpop.f32.mrb[0].mxu0
          %v1057 = vpop.f32.mrb[0].mxu0
          %v1058 = vadd.f32 0.0, %v1057
          %v1059 = vpop.f32.mrb[0].mxu0
          %1060 = vmatprep.mubr.bf16.mxu0 %v470
          %1061 = vmatmul.mubr.bf16.gmra.mrb[0].mxu0 %v469
          %v1062 = vpop.f32.mrb[0].mxu0
          %v1063 = vadd.f32 0.0, %v1062
          %v1064 = vpop.f32.mrb[0].mxu0
          %v1065 = vpop.f32.mrb[0].mxu0
          %v1066 = vadd.f32 0.0, %v1065
          %v1067 = vpop.f32.mrb[0].mxu0
          %1068 = vmatprep.mubr.bf16.mxu0 %v472
          %1069 = vmatmul.mubr.bf16.gmra.mrb[0].mxu0 %v471
          %v1070 = vpop.f32.mrb[0].mxu0
          %v1071 = vadd.f32 0.0, %v1070
          %v1072 = vpop.f32.mrb[0].mxu0
          %v1073 = vpop.f32.mrb[0].mxu0
          %v1074 = vadd.f32 0.0, %v1073
          %v1075 = vpop.f32.mrb[0].mxu0
          %1076 = vmatprep.mubr.bf16.mxu0 %v474
          %1077 = vmatmul.mubr.bf16.gmra.mrb[0].mxu0 %v473
          %v1078 = vpop.f32.mrb[0].mxu0
          %v1079 = vadd.f32 0.0, %v1078
          %v1080 = vpop.f32.mrb[0].mxu0
          %v1081 = vpop.f32.mrb[0].mxu0
          %v1082 = vadd.f32 0.0, %v1081
          %v1083 = vpop.f32.mrb[0].mxu0
          %1084 = vdwg.mxu0
          %v1085 = vadd.f32 %v872, %v959
          %v1086 = vadd.f32 %v873, %v962
          %v1087 = vadd.f32 %v874, %v967
          %v1088 = vadd.f32 %v875, %v970
          %v1089 = vadd.f32 %v876, %v975
          %v1090 = vadd.f32 %v877, %v978
          %v1091 = vadd.f32 %v878, %v983
          %v1092 = vadd.f32 %v879, %v986
          %v1093 = vadd.f32 %v880, %v991
          %v1094 = vadd.f32 %v881, %v994
          %v1095 = vadd.f32 %v882, %v999
          %v1096 = vadd.f32 %v883, %v1002
          %v1097 = vadd.f32 %v884, %v1007
          %v1098 = vadd.f32 %v885, %v1010
          %v1099 = vadd.f32 %v886, %v1015
          %v1100 = vadd.f32 %v887, %v1018
          %v1101 = vadd.f32 %v888, %v1023
          %v1102 = vadd.f32 %v889, %v1026
          %v1103 = vadd.f32 %v890, %v1031
          %v1104 = vadd.f32 %v891, %v1034
          %v1105 = vadd.f32 %v892, %v1039
          %v1106 = vadd.f32 %v893, %v1042
          %v1107 = vadd.f32 %v894, %v1047
          %v1108 = vadd.f32 %v895, %v1050
          %v1109 = vadd.f32 %v896, %v1055
          %v1110 = vadd.f32 %v897, %v1058
          %v1111 = vadd.f32 %v898, %v1063
          %v1112 = vadd.f32 %v899, %v1066
          %v1113 = vadd.f32 %v900, %v1071
          %v1114 = vadd.f32 %v901, %v1074
          %v1115 = vadd.f32 %v902, %v1079
          %v1116 = vadd.f32 %v903, %v1082
          %1117 = vst [vmem:[#allocation3] sm:$0xff] %v1085
          %1118 = vst [vmem:[#allocation3 + $0x8] sm:$0xff] %v1086
          %1119 = vst [vmem:[#allocation3 + $0x10] sm:$0xff] %v1087
          %1120 = vst [vmem:[#allocation3 + $0x18] sm:$0xff] %v1088
          %1121 = vst [vmem:[#allocation3 + $0x20] sm:$0xff] %v1089
          %1122 = vst [vmem:[#allocation3 + $0x28] sm:$0xff] %v1090
          %1123 = vst [vmem:[#allocation3 + $0x30] sm:$0xff] %v1091
          %1124 = vst [vmem:[#allocation3 + $0x38] sm:$0xff] %v1092
          %1125 = vst [vmem:[#allocation3 + $0x40] sm:$0xff] %v1093
          %1126 = vst [vmem:[#allocation3 + $0x48] sm:$0xff] %v1094
          %1127 = vst [vmem:[#allocation3 + $0x50] sm:$0xff] %v1095
          %1128 = vst [vmem:[#allocation3 + $0x58] sm:$0xff] %v1096
          %1129 = vst [vmem:[#allocation3 + $0x60] sm:$0xff] %v1097
          %1130 = vst [vmem:[#allocation3 + $0x68] sm:$0xff] %v1098
          %1131 = vst [vmem:[#allocation3 + $0x70] sm:$0xff] %v1099
          %1132 = vst [vmem:[#allocation3 + $0x78] sm:$0xff] %v1100
          %1133 = vst [vmem:[#allocation3 + $0x80] sm:$0xff] %v1101
          %1134 = vst [vmem:[#allocation3 + $0x88] sm:$0xff] %v1102
          %1135 = vst [vmem:[#allocation3 + $0x90] sm:$0xff] %v1103
          %1136 = vst [vmem:[#allocation3 + $0x98] sm:$0xff] %v1104
          %1137 = vst [vmem:[#allocation3 + $0xa0] sm:$0xff] %v1105
          %1138 = vst [vmem:[#allocation3 + $0xa8] sm:$0xff] %v1106
          %1139 = vst [vmem:[#allocation3 + $0xb0] sm:$0xff] %v1107
          %1140 = vst [vmem:[#allocation3 + $0xb8] sm:$0xff] %v1108
          %1141 = vst [vmem:[#allocation3 + $0xc0] sm:$0xff] %v1109
          %1142 = vst [vmem:[#allocation3 + $0xc8] sm:$0xff] %v1110
          %1143 = vst [vmem:[#allocation3 + $0xd0] sm:$0xff] %v1111
          %1144 = vst [vmem:[#allocation3 + $0xd8] sm:$0xff] %v1112
          %1145 = vst [vmem:[#allocation3 + $0xe0] sm:$0xff] %v1113
          %1146 = vst [vmem:[#allocation3 + $0xe8] sm:$0xff] %v1114
          %1147 = vst [vmem:[#allocation3 + $0xf0] sm:$0xff] %v1115
          %1148 = vst [vmem:[#allocation3 + $0xf8] sm:$0xff] %v1116
        $region68: #{tpu_custom_call.1} parent=43 // pred_fallthru
          _
        %p1149 = scmp.eq.s32.totalorder %s31, 1
        %p1150 = pnand %p1149, %p475
        %p1151 = pneg %p1150
        // Predicated region
        $region69: #{tpu_custom_call.1} parent=43 // pred_check
          _
        $region70: #{tpu_custom_call.1} parent=43 // pred_check_branch
          %1153 = sbr.rel (%p1150) target = $region72
        $region71: #{tpu_custom_call.1} parent=43 // pred_region
          %s1154 = sshra.s32 %s382, 3
          %s1155 = sand.u32 %s382, 7
          %s1156 = smul.addr %s1154, 4
          %s1157 = scalar_lea.vmem [#allocation4], %s1156
          %v1158 = vld [vmem:[%s1157] sm:$0xf]
          %v1159 = vld [vmem:[%s1157 + $0x4] sm:$0xf]
          %v1160 = vld [vmem:[%s1157 + $0x8] sm:$0xf]
          %v1161 = vld [vmem:[%s1157 + $0xc] sm:$0xf]
          %v1162 = vld [vmem:[%s1157 + $0x10] sm:$0xf]
          %v1163 = vld [vmem:[%s1157 + $0x14] sm:$0xf]
          %v1164 = vld [vmem:[%s1157 + $0x18] sm:$0xf]
          %v1165 = vld [vmem:[%s1157 + $0x1c] sm:$0xf]
          %v1166 = vld [vmem:[%s1157 + $0x20] sm:$0xf]
          %v1167 = vld [vmem:[%s1157 + $0x24] sm:$0xf]
          %v1168 = vld [vmem:[%s1157 + $0x28] sm:$0xf]
          %v1169 = vld [vmem:[%s1157 + $0x2c] sm:$0xf]
          %v1170 = vld [vmem:[%s1157 + $0x30] sm:$0xf]
          %v1171 = vld [vmem:[%s1157 + $0x34] sm:$0xf]
          %v1172 = vld [vmem:[%s1157 + $0x38] sm:$0xf]
          %v1173 = vld [vmem:[%s1157 + $0x3c] sm:$0xf]
          %v1174 = vld [vmem:[%s1157 + $0x40] sm:$0xf]
          %v1175 = vld [vmem:[%s1157 + $0x44] sm:$0xf]
          %v1176 = vld [vmem:[%s1157 + $0x48] sm:$0xf]
          %v1177 = vld [vmem:[%s1157 + $0x4c] sm:$0xf]
          %v1178 = vld [vmem:[%s1157 + $0x50] sm:$0xf]
          %v1179 = vld [vmem:[%s1157 + $0x54] sm:$0xf]
          %v1180 = vld [vmem:[%s1157 + $0x58] sm:$0xf]
          %v1181 = vld [vmem:[%s1157 + $0x5c] sm:$0xf]
          %v1182 = vld [vmem:[%s1157 + $0x60] sm:$0xf]
          %v1183 = vld [vmem:[%s1157 + $0x64] sm:$0xf]
          %v1184 = vld [vmem:[%s1157 + $0x68] sm:$0xf]
          %v1185 = vld [vmem:[%s1157 + $0x6c] sm:$0xf]
          %v1186 = vld [vmem:[%s1157 + $0x70] sm:$0xf]
          %v1187 = vld [vmem:[%s1157 + $0x74] sm:$0xf]
          %v1188 = vld [vmem:[%s1157 + $0x78] sm:$0xf]
          %v1189 = vld [vmem:[%s1157 + $0x7c] sm:$0xf]
          %v1190 = vld [vmem:[#allocation3] sm:$0xff]
          %v1191 = vld [vmem:[#allocation3 + $0x8] sm:$0xff]
          %v1192 = vld [vmem:[#allocation3 + $0x10] sm:$0xff]
          %v1193 = vld [vmem:[#allocation3 + $0x18] sm:$0xff]
          %v1194 = vld [vmem:[#allocation3 + $0x20] sm:$0xff]
          %v1195 = vld [vmem:[#allocation3 + $0x28] sm:$0xff]
          %v1196 = vld [vmem:[#allocation3 + $0x30] sm:$0xff]
          %v1197 = vld [vmem:[#allocation3 + $0x38] sm:$0xff]
          %v1198 = vld [vmem:[#allocation3 + $0x40] sm:$0xff]
          %v1199 = vld [vmem:[#allocation3 + $0x48] sm:$0xff]
          %v1200 = vld [vmem:[#allocation3 + $0x50] sm:$0xff]
          %v1201 = vld [vmem:[#allocation3 + $0x58] sm:$0xff]
          %v1202 = vld [vmem:[#allocation3 + $0x60] sm:$0xff]
          %v1203 = vld [vmem:[#allocation3 + $0x68] sm:$0xff]
          %v1204 = vld [vmem:[#allocation3 + $0x70] sm:$0xff]
          %v1205 = vld [vmem:[#allocation3 + $0x78] sm:$0xff]
          %v1206 = vld [vmem:[#allocation3 + $0x80] sm:$0xff]
          %v1207 = vld [vmem:[#allocation3 + $0x88] sm:$0xff]
          %v1208 = vld [vmem:[#allocation3 + $0x90] sm:$0xff]
          %v1209 = vld [vmem:[#allocation3 + $0x98] sm:$0xff]
          %v1210 = vld [vmem:[#allocation3 + $0xa0] sm:$0xff]
          %v1211 = vld [vmem:[#allocation3 + $0xa8] sm:$0xff]
          %v1212 = vld [vmem:[#allocation3 + $0xb0] sm:$0xff]
          %v1213 = vld [vmem:[#allocation3 + $0xb8] sm:$0xff]
          %v1214 = vld [vmem:[#allocation3 + $0xc0] sm:$0xff]
          %v1215 = vld [vmem:[#allocation3 + $0xc8] sm:$0xff]
          %v1216 = vld [vmem:[#allocation3 + $0xd0] sm:$0xff]
          %v1217 = vld [vmem:[#allocation3 + $0xd8] sm:$0xff]
          %v1218 = vld [vmem:[#allocation3 + $0xe0] sm:$0xff]
          %v1219 = vld [vmem:[#allocation3 + $0xe8] sm:$0xff]
          %v1220 = vld [vmem:[#allocation3 + $0xf0] sm:$0xff]
          %v1221 = vld [vmem:[#allocation3 + $0xf8] sm:$0xff]
          %v1222 = vld [vmem:[%s374] sm:$0xff]
          %v1223 = vld [vmem:[%s374 + $0x8] sm:$0xff]
          %v1224 = vld [vmem:[%s374 + $0x10] sm:$0xff]
          %v1225 = vld [vmem:[%s374 + $0x18] sm:$0xff]
          %v1226 = vld [vmem:[%s374 + $0x20] sm:$0xff]
          %v1227 = vld [vmem:[%s374 + $0x28] sm:$0xff]
          %v1228 = vld [vmem:[%s374 + $0x30] sm:$0xff]
          %v1229 = vld [vmem:[%s374 + $0x38] sm:$0xff]
          %v1230 = vld [vmem:[%s374 + $0x40] sm:$0xff]
          %v1231 = vld [vmem:[%s374 + $0x48] sm:$0xff]
          %v1232 = vld [vmem:[%s374 + $0x50] sm:$0xff]
          %v1233 = vld [vmem:[%s374 + $0x58] sm:$0xff]
          %v1234 = vld [vmem:[%s374 + $0x60] sm:$0xff]
          %v1235 = vld [vmem:[%s374 + $0x68] sm:$0xff]
          %v1236 = vld [vmem:[%s374 + $0x70] sm:$0xff]
          %v1237 = vld [vmem:[%s374 + $0x78] sm:$0xff]
          %v1238 = vld [vmem:[%s374 + $0x80] sm:$0xff]
          %v1239 = vld [vmem:[%s374 + $0x88] sm:$0xff]
          %v1240 = vld [vmem:[%s374 + $0x90] sm:$0xff]
          %v1241 = vld [vmem:[%s374 + $0x98] sm:$0xff]
          %v1242 = vld [vmem:[%s374 + $0xa0] sm:$0xff]
          %v1243 = vld [vmem:[%s374 + $0xa8] sm:$0xff]
          %v1244 = vld [vmem:[%s374 + $0xb0] sm:$0xff]
          %v1245 = vld [vmem:[%s374 + $0xb8] sm:$0xff]
          %v1246 = vld [vmem:[%s374 + $0xc0] sm:$0xff]
          %v1247 = vld [vmem:[%s374 + $0xc8] sm:$0xff]
          %v1248 = vld [vmem:[%s374 + $0xd0] sm:$0xff]
          %v1249 = vld [vmem:[%s374 + $0xd8] sm:$0xff]
          %v1250 = vld [vmem:[%s374 + $0xe0] sm:$0xff]
          %v1251 = vld [vmem:[%s374 + $0xe8] sm:$0xff]
          %v1252 = vld [vmem:[%s374 + $0xf0] sm:$0xff]
          %v1253 = vld [vmem:[%s374 + $0xf8] sm:$0xff]
          %1255 = vset.pattern.permute.xlu0 0
          %1256 = vperm.xlu0 %1255, %v1222
          %v1257 = vpop.permute.xlu0 %1256
          %1260 = vset.pattern.permute.xlu0 0
          %1261 = vperm.xlu0 %1260, %v1223
          %v1262 = vpop.permute.xlu0 %1261
          %1265 = vset.pattern.permute.xlu0 0
          %1266 = vperm.xlu0 %1265, %v1224
          %v1267 = vpop.permute.xlu0 %1266
          %1270 = vset.pattern.permute.xlu0 0
          %1271 = vperm.xlu0 %1270, %v1225
          %v1272 = vpop.permute.xlu0 %1271
          %1275 = vset.pattern.permute.xlu0 0
          %1276 = vperm.xlu0 %1275, %v1226
          %v1277 = vpop.permute.xlu0 %1276
          %1280 = vset.pattern.permute.xlu0 0
          %1281 = vperm.xlu0 %1280, %v1227
          %v1282 = vpop.permute.xlu0 %1281
          %1285 = vset.pattern.permute.xlu0 0
          %1286 = vperm.xlu0 %1285, %v1228
          %v1287 = vpop.permute.xlu0 %1286
          %1290 = vset.pattern.permute.xlu0 0
          %1291 = vperm.xlu0 %1290, %v1229
          %v1292 = vpop.permute.xlu0 %1291
          %1295 = vset.pattern.permute.xlu0 0
          %1296 = vperm.xlu0 %1295, %v1230
          %v1297 = vpop.permute.xlu0 %1296
          %1300 = vset.pattern.permute.xlu0 0
          %1301 = vperm.xlu0 %1300, %v1231
          %v1302 = vpop.permute.xlu0 %1301
          %1305 = vset.pattern.permute.xlu0 0
          %1306 = vperm.xlu0 %1305, %v1232
          %v1307 = vpop.permute.xlu0 %1306
          %1310 = vset.pattern.permute.xlu0 0
          %1311 = vperm.xlu0 %1310, %v1233
          %v1312 = vpop.permute.xlu0 %1311
          %1315 = vset.pattern.permute.xlu0 0
          %1316 = vperm.xlu0 %1315, %v1234
          %v1317 = vpop.permute.xlu0 %1316
          %1320 = vset.pattern.permute.xlu0 0
          %1321 = vperm.xlu0 %1320, %v1235
          %v1322 = vpop.permute.xlu0 %1321
          %1325 = vset.pattern.permute.xlu0 0
          %1326 = vperm.xlu0 %1325, %v1236
          %v1327 = vpop.permute.xlu0 %1326
          %1330 = vset.pattern.permute.xlu0 0
          %1331 = vperm.xlu0 %1330, %v1237
          %v1332 = vpop.permute.xlu0 %1331
          %1335 = vset.pattern.permute.xlu0 0
          %1336 = vperm.xlu0 %1335, %v1238
          %v1337 = vpop.permute.xlu0 %1336
          %1340 = vset.pattern.permute.xlu0 0
          %1341 = vperm.xlu0 %1340, %v1239
          %v1342 = vpop.permute.xlu0 %1341
          %1345 = vset.pattern.permute.xlu0 0
          %1346 = vperm.xlu0 %1345, %v1240
          %v1347 = vpop.permute.xlu0 %1346
          %1350 = vset.pattern.permute.xlu0 0
          %1351 = vperm.xlu0 %1350, %v1241
          %v1352 = vpop.permute.xlu0 %1351
          %1355 = vset.pattern.permute.xlu0 0
          %1356 = vperm.xlu0 %1355, %v1242
          %v1357 = vpop.permute.xlu0 %1356
          %1360 = vset.pattern.permute.xlu0 0
          %1361 = vperm.xlu0 %1360, %v1243
          %v1362 = vpop.permute.xlu0 %1361
          %1365 = vset.pattern.permute.xlu0 0
          %1366 = vperm.xlu0 %1365, %v1244
          %v1367 = vpop.permute.xlu0 %1366
          %1370 = vset.pattern.permute.xlu0 0
          %1371 = vperm.xlu0 %1370, %v1245
          %v1372 = vpop.permute.xlu0 %1371
          %1375 = vset.pattern.permute.xlu0 0
          %1376 = vperm.xlu0 %1375, %v1246
          %v1377 = vpop.permute.xlu0 %1376
          %1380 = vset.pattern.permute.xlu0 0
          %1381 = vperm.xlu0 %1380, %v1247
          %v1382 = vpop.permute.xlu0 %1381
          %1385 = vset.pattern.permute.xlu0 0
          %1386 = vperm.xlu0 %1385, %v1248
          %v1387 = vpop.permute.xlu0 %1386
          %1390 = vset.pattern.permute.xlu0 0
          %1391 = vperm.xlu0 %1390, %v1249
          %v1392 = vpop.permute.xlu0 %1391
          %1395 = vset.pattern.permute.xlu0 0
          %1396 = vperm.xlu0 %1395, %v1250
          %v1397 = vpop.permute.xlu0 %1396
          %1400 = vset.pattern.permute.xlu0 0
          %1401 = vperm.xlu0 %1400, %v1251
          %v1402 = vpop.permute.xlu0 %1401
          %1405 = vset.pattern.permute.xlu0 0
          %1406 = vperm.xlu0 %1405, %v1252
          %v1407 = vpop.permute.xlu0 %1406
          %1410 = vset.pattern.permute.xlu0 0
          %1411 = vperm.xlu0 %1410, %v1253
          %v1412 = vpop.permute.xlu0 %1411
          %v1414 = vmul.f32 %v1190, %v1257
          %v1415 = vmul.f32 %v1191, %v1262
          %v1416 = vmul.f32 %v1192, %v1267
          %v1417 = vmul.f32 %v1193, %v1272
          %v1418 = vmul.f32 %v1194, %v1277
          %v1419 = vmul.f32 %v1195, %v1282
          %v1420 = vmul.f32 %v1196, %v1287
          %v1421 = vmul.f32 %v1197, %v1292
          %v1422 = vmul.f32 %v1198, %v1297
          %v1423 = vmul.f32 %v1199, %v1302
          %v1424 = vmul.f32 %v1200, %v1307
          %v1425 = vmul.f32 %v1201, %v1312
          %v1426 = vmul.f32 %v1202, %v1317
          %v1427 = vmul.f32 %v1203, %v1322
          %v1428 = vmul.f32 %v1204, %v1327
          %v1429 = vmul.f32 %v1205, %v1332
          %v1430 = vmul.f32 %v1206, %v1337
          %v1431 = vmul.f32 %v1207, %v1342
          %v1432 = vmul.f32 %v1208, %v1347
          %v1433 = vmul.f32 %v1209, %v1352
          %v1434 = vmul.f32 %v1210, %v1357
          %v1435 = vmul.f32 %v1211, %v1362
          %v1436 = vmul.f32 %v1212, %v1367
          %v1437 = vmul.f32 %v1213, %v1372
          %v1438 = vmul.f32 %v1214, %v1377
          %v1439 = vmul.f32 %v1215, %v1382
          %v1440 = vmul.f32 %v1216, %v1387
          %v1441 = vmul.f32 %v1217, %v1392
          %v1442 = vmul.f32 %v1218, %v1397
          %v1443 = vmul.f32 %v1219, %v1402
          %v1444 = vmul.f32 %v1220, %v1407
          %v1445 = vmul.f32 %v1221, %v1412
          %v1446 = vpack.c.bf16 %v1415, %v1414
          %v1447 = vpack.c.bf16 %v1417, %v1416
          %v1448 = vpack.c.bf16 %v1419, %v1418
          %v1449 = vpack.c.bf16 %v1421, %v1420
          %v1450 = vpack.c.bf16 %v1423, %v1422
          %v1451 = vpack.c.bf16 %v1425, %v1424
          %v1452 = vpack.c.bf16 %v1427, %v1426
          %v1453 = vpack.c.bf16 %v1429, %v1428
          %v1454 = vpack.c.bf16 %v1431, %v1430
          %v1455 = vpack.c.bf16 %v1433, %v1432
          %v1456 = vpack.c.bf16 %v1435, %v1434
          %v1457 = vpack.c.bf16 %v1437, %v1436
          %v1458 = vpack.c.bf16 %v1439, %v1438
          %v1459 = vpack.c.bf16 %v1441, %v1440
          %v1460 = vpack.c.bf16 %v1443, %v1442
          %v1461 = vpack.c.bf16 %v1445, %v1444
          %v1462 = vld [vmem:[%s319] sm:$0xf]
          %v1463 = vld [vmem:[%s319 + $0x4] sm:$0xf]
          %v1464 = vld [vmem:[%s319 + $0x8] sm:$0xf]
          %v1465 = vld [vmem:[%s319 + $0xc] sm:$0xf]
          %v1466 = vld [vmem:[%s319 + $0x10] sm:$0xf]
          %v1467 = vld [vmem:[%s319 + $0x14] sm:$0xf]
          %v1468 = vld [vmem:[%s319 + $0x18] sm:$0xf]
          %v1469 = vld [vmem:[%s319 + $0x1c] sm:$0xf]
          %v1470 = vld [vmem:[%s319 + $0x20] sm:$0xf]
          %v1471 = vld [vmem:[%s319 + $0x24] sm:$0xf]
          %v1472 = vld [vmem:[%s319 + $0x28] sm:$0xf]
          %v1473 = vld [vmem:[%s319 + $0x2c] sm:$0xf]
          %v1474 = vld [vmem:[%s319 + $0x30] sm:$0xf]
          %v1475 = vld [vmem:[%s319 + $0x34] sm:$0xf]
          %v1476 = vld [vmem:[%s319 + $0x38] sm:$0xf]
          %v1477 = vld [vmem:[%s319 + $0x3c] sm:$0xf]
          %v1478 = vld [vmem:[%s328] sm:$0xf]
          %v1479 = vld [vmem:[%s328 + $0x4] sm:$0xf]
          %v1480 = vld [vmem:[%s328 + $0x8] sm:$0xf]
          %v1481 = vld [vmem:[%s328 + $0xc] sm:$0xf]
          %v1482 = vld [vmem:[%s328 + $0x10] sm:$0xf]
          %v1483 = vld [vmem:[%s328 + $0x14] sm:$0xf]
          %v1484 = vld [vmem:[%s328 + $0x18] sm:$0xf]
          %v1485 = vld [vmem:[%s328 + $0x1c] sm:$0xf]
          %v1486 = vld [vmem:[%s328 + $0x20] sm:$0xf]
          %v1487 = vld [vmem:[%s328 + $0x24] sm:$0xf]
          %v1488 = vld [vmem:[%s328 + $0x28] sm:$0xf]
          %v1489 = vld [vmem:[%s328 + $0x2c] sm:$0xf]
          %v1490 = vld [vmem:[%s328 + $0x30] sm:$0xf]
          %v1491 = vld [vmem:[%s328 + $0x34] sm:$0xf]
          %v1492 = vld [vmem:[%s328 + $0x38] sm:$0xf]
          %v1493 = vld [vmem:[%s328 + $0x3c] sm:$0xf]
          %v1526 = vunpack.c.l.b16 %v1158
          %v1527 = vunpack.c.l.b16 %v1159
          %v1528 = vunpack.c.l.b16 %v1160
          %v1529 = vunpack.c.l.b16 %v1161
          %v1530 = vunpack.c.l.b16 %v1162
          %v1531 = vunpack.c.l.b16 %v1163
          %v1532 = vunpack.c.l.b16 %v1164
          %v1533 = vunpack.c.l.b16 %v1165
          %v1534 = vunpack.c.l.b16 %v1166
          %v1535 = vunpack.c.l.b16 %v1167
          %v1536 = vunpack.c.l.b16 %v1168
          %v1537 = vunpack.c.l.b16 %v1169
          %v1538 = vunpack.c.l.b16 %v1170
          %v1539 = vunpack.c.l.b16 %v1171
          %v1540 = vunpack.c.l.b16 %v1172
          %v1541 = vunpack.c.l.b16 %v1173
          %v1542 = vunpack.c.l.b16 %v1174
          %v1543 = vunpack.c.l.b16 %v1175
          %v1544 = vunpack.c.l.b16 %v1176
          %v1545 = vunpack.c.l.b16 %v1177
          %v1546 = vunpack.c.l.b16 %v1178
          %v1547 = vunpack.c.l.b16 %v1179
          %v1548 = vunpack.c.l.b16 %v1180
          %v1549 = vunpack.c.l.b16 %v1181
          %v1550 = vunpack.c.l.b16 %v1182
          %v1551 = vunpack.c.l.b16 %v1183
          %v1552 = vunpack.c.l.b16 %v1184
          %v1553 = vunpack.c.l.b16 %v1185
          %v1554 = vunpack.c.l.b16 %v1186
          %v1555 = vunpack.c.l.b16 %v1187
          %v1556 = vunpack.c.l.b16 %v1188
          %v1557 = vunpack.c.l.b16 %v1189
          %v1558 = vpack.c.b16 %v1527, %v1526
          %v1559 = vpack.c.b16 %v1529, %v1528
          %v1560 = vpack.c.b16 %v1531, %v1530
          %v1561 = vpack.c.b16 %v1533, %v1532
          %v1562 = vpack.c.b16 %v1535, %v1534
          %v1563 = vpack.c.b16 %v1537, %v1536
          %v1564 = vpack.c.b16 %v1539, %v1538
          %v1565 = vpack.c.b16 %v1541, %v1540
          %v1566 = vpack.c.b16 %v1543, %v1542
          %v1567 = vpack.c.b16 %v1545, %v1544
          %v1568 = vpack.c.b16 %v1547, %v1546
          %v1569 = vpack.c.b16 %v1549, %v1548
          %v1570 = vpack.c.b16 %v1551, %v1550
          %v1571 = vpack.c.b16 %v1553, %v1552
          %v1572 = vpack.c.b16 %v1555, %v1554
          %v1573 = vpack.c.b16 %v1557, %v1556
          %v1606 = vunpack.c.l.b16 %v1478
          %v1607 = vunpack.c.l.b16 %v1479
          %v1608 = vunpack.c.l.b16 %v1480
          %v1609 = vunpack.c.l.b16 %v1481
          %v1610 = vunpack.c.l.b16 %v1482
          %v1611 = vunpack.c.l.b16 %v1483
          %v1612 = vunpack.c.l.b16 %v1484
          %v1613 = vunpack.c.l.b16 %v1485
          %v1614 = vunpack.c.l.b16 %v1486
          %v1615 = vunpack.c.l.b16 %v1487
          %v1616 = vunpack.c.l.b16 %v1488
          %v1617 = vunpack.c.l.b16 %v1489
          %v1618 = vunpack.c.l.b16 %v1490
          %v1619 = vunpack.c.l.b16 %v1491
          %v1620 = vunpack.c.l.b16 %v1492
          %v1621 = vunpack.c.l.b16 %v1493
          %v1622 = vpack.c.b16 %v1607, %v1606
          %v1623 = vpack.c.b16 %v1609, %v1608
          %v1624 = vpack.c.b16 %v1611, %v1610
          %v1625 = vpack.c.b16 %v1613, %v1612
          %v1626 = vpack.c.b16 %v1615, %v1614
          %v1627 = vpack.c.b16 %v1617, %v1616
          %v1628 = vpack.c.b16 %v1619, %v1618
          %v1629 = vpack.c.b16 %v1621, %v1620
          %1638 = vmatprep.subr.bf16.mxu0 0
          %1639 = vmatpush1.bf16.msra.mxu0 %v1622
          %1640 = vmatprep.subr.bf16.mxu0 0
          %1641 = vmatpush1.bf16.msra.mxu0 %v1623
          %1642 = vmatprep.subr.bf16.mxu0 0
          %1643 = vmatpush1.bf16.msra.mxu0 %v1624
          %1644 = vmatprep.subr.bf16.mxu0 0
          %1645 = vmatpush1.bf16.msra.mxu0 %v1625
          %1646 = vmatprep.subr.bf16.mxu0 0
          %1647 = vmatpush1.bf16.msra.mxu0 %v1626
          %1648 = vmatprep.subr.bf16.mxu0 0
          %1649 = vmatpush1.bf16.msra.mxu0 %v1627
          %1650 = vmatprep.subr.bf16.mxu0 0
          %1651 = vmatpush1.bf16.msra.mxu0 %v1628
          %1652 = vmatprep.subr.bf16.mxu0 0
          %1653 = vmatpush1.bf16.msra.mxu0 %v1629
          %1654 = vmatprep.subr.bf16.mxu0 0
          %1655 = vmatpush1.bf16.msra.mxu0 0
          %1656 = vmatprep.subr.bf16.mxu0 0
          %1657 = vmatpush1.bf16.msra.mxu0 0
          %1658 = vmatprep.subr.bf16.mxu0 0
          %1659 = vmatpush1.bf16.msra.mxu0 0
          %1660 = vmatprep.subr.bf16.mxu0 0
          %1661 = vmatpush1.bf16.msra.mxu0 0
          %1662 = vmatprep.subr.bf16.mxu0 0
          %1663 = vmatpush1.bf16.msra.mxu0 0
          %1664 = vmatprep.subr.bf16.mxu0 0
          %1665 = vmatpush1.bf16.msra.mxu0 0
          %1666 = vmatprep.subr.bf16.mxu0 0
          %1667 = vmatpush1.bf16.msra.mxu0 0
          %1668 = vmatprep.subr.bf16.mxu0 0
          %1669 = vmatpush1.bf16.msra.mxu0 0
          %1670 = vmatprep.mubr.bf16.mxu0 0
          %1671 = vmatmul.mubr.bf16.gmra.mrb[0].mxu0 %v1558
          %v1672 = vpop.f32.mrb[0].mxu0
          %v1673 = vadd.f32 0.0, %v1672
          %v1674 = vpop.f32.mrb[0].mxu0
          %v1675 = vpop.f32.mrb[0].mxu0
          %v1676 = vadd.f32 0.0, %v1675
          %v1677 = vpop.f32.mrb[0].mxu0
          %1678 = vmatprep.mubr.bf16.mxu0 0
          %1679 = vmatmul.mubr.bf16.gmra.mrb[0].mxu0 %v1559
          %v1680 = vpop.f32.mrb[0].mxu0
          %v1681 = vadd.f32 0.0, %v1680
          %v1682 = vpop.f32.mrb[0].mxu0
          %v1683 = vpop.f32.mrb[0].mxu0
          %v1684 = vadd.f32 0.0, %v1683
          %v1685 = vpop.f32.mrb[0].mxu0
          %1686 = vmatprep.mubr.bf16.mxu0 0
          %1687 = vmatmul.mubr.bf16.gmra.mrb[0].mxu0 %v1560
          %v1688 = vpop.f32.mrb[0].mxu0
          %v1689 = vadd.f32 0.0, %v1688
          %v1690 = vpop.f32.mrb[0].mxu0
          %v1691 = vpop.f32.mrb[0].mxu0
          %v1692 = vadd.f32 0.0, %v1691
          %v1693 = vpop.f32.mrb[0].mxu0
          %1694 = vmatprep.mubr.bf16.mxu0 0
          %1695 = vmatmul.mubr.bf16.gmra.mrb[0].mxu0 %v1561
          %v1696 = vpop.f32.mrb[0].mxu0
          %v1697 = vadd.f32 0.0, %v1696
          %v1698 = vpop.f32.mrb[0].mxu0
          %v1699 = vpop.f32.mrb[0].mxu0
          %v1700 = vadd.f32 0.0, %v1699
          %v1701 = vpop.f32.mrb[0].mxu0
          %1702 = vmatprep.mubr.bf16.mxu0 0
          %1703 = vmatmul.mubr.bf16.gmra.mrb[0].mxu0 %v1562
          %v1704 = vpop.f32.mrb[0].mxu0
          %v1705 = vadd.f32 0.0, %v1704
          %v1706 = vpop.f32.mrb[0].mxu0
          %v1707 = vpop.f32.mrb[0].mxu0
          %v1708 = vadd.f32 0.0, %v1707
          %v1709 = vpop.f32.mrb[0].mxu0
          %1710 = vmatprep.mubr.bf16.mxu0 0
          %1711 = vmatmul.mubr.bf16.gmra.mrb[0].mxu0 %v1563
          %v1712 = vpop.f32.mrb[0].mxu0
          %v1713 = vadd.f32 0.0, %v1712
          %v1714 = vpop.f32.mrb[0].mxu0
          %v1715 = vpop.f32.mrb[0].mxu0
          %v1716 = vadd.f32 0.0, %v1715
          %v1717 = vpop.f32.mrb[0].mxu0
          %1718 = vmatprep.mubr.bf16.mxu0 0
          %1719 = vmatmul.mubr.bf16.gmra.mrb[0].mxu0 %v1564
          %v1720 = vpop.f32.mrb[0].mxu0
          %v1721 = vadd.f32 0.0, %v1720
          %v1722 = vpop.f32.mrb[0].mxu0
          %v1723 = vpop.f32.mrb[0].mxu0
          %v1724 = vadd.f32 0.0, %v1723
          %v1725 = vpop.f32.mrb[0].mxu0
          %1726 = vmatprep.mubr.bf16.mxu0 0
          %1727 = vmatmul.mubr.bf16.gmra.mrb[0].mxu0 %v1565
          %v1728 = vpop.f32.mrb[0].mxu0
          %v1729 = vadd.f32 0.0, %v1728
          %v1730 = vpop.f32.mrb[0].mxu0
          %v1731 = vpop.f32.mrb[0].mxu0
          %v1732 = vadd.f32 0.0, %v1731
          %v1733 = vpop.f32.mrb[0].mxu0
          %1734 = vmatprep.mubr.bf16.mxu0 0
          %1735 = vmatmul.mubr.bf16.gmra.mrb[0].mxu0 %v1566
          %v1736 = vpop.f32.mrb[0].mxu0
          %v1737 = vadd.f32 0.0, %v1736
          %v1738 = vpop.f32.mrb[0].mxu0
          %v1739 = vpop.f32.mrb[0].mxu0
          %v1740 = vadd.f32 0.0, %v1739
          %v1741 = vpop.f32.mrb[0].mxu0
          %1742 = vmatprep.mubr.bf16.mxu0 0
          %1743 = vmatmul.mubr.bf16.gmra.mrb[0].mxu0 %v1567
          %v1744 = vpop.f32.mrb[0].mxu0
          %v1745 = vadd.f32 0.0, %v1744
          %v1746 = vpop.f32.mrb[0].mxu0
          %v1747 = vpop.f32.mrb[0].mxu0
          %v1748 = vadd.f32 0.0, %v1747
          %v1749 = vpop.f32.mrb[0].mxu0
          %1750 = vmatprep.mubr.bf16.mxu0 0
          %1751 = vmatmul.mubr.bf16.gmra.mrb[0].mxu0 %v1568
          %v1752 = vpop.f32.mrb[0].mxu0
          %v1753 = vadd.f32 0.0, %v1752
          %v1754 = vpop.f32.mrb[0].mxu0
          %v1755 = vpop.f32.mrb[0].mxu0
          %v1756 = vadd.f32 0.0, %v1755
          %v1757 = vpop.f32.mrb[0].mxu0
          %1758 = vmatprep.mubr.bf16.mxu0 0
          %1759 = vmatmul.mubr.bf16.gmra.mrb[0].mxu0 %v1569
          %v1760 = vpop.f32.mrb[0].mxu0
          %v1761 = vadd.f32 0.0, %v1760
          %v1762 = vpop.f32.mrb[0].mxu0
          %v1763 = vpop.f32.mrb[0].mxu0
          %v1764 = vadd.f32 0.0, %v1763
          %v1765 = vpop.f32.mrb[0].mxu0
          %1766 = vmatprep.mubr.bf16.mxu0 0
          %1767 = vmatmul.mubr.bf16.gmra.mrb[0].mxu0 %v1570
          %v1768 = vpop.f32.mrb[0].mxu0
          %v1769 = vadd.f32 0.0, %v1768
          %v1770 = vpop.f32.mrb[0].mxu0
          %v1771 = vpop.f32.mrb[0].mxu0
          %v1772 = vadd.f32 0.0, %v1771
          %v1773 = vpop.f32.mrb[0].mxu0
          %1774 = vmatprep.mubr.bf16.mxu0 0
          %1775 = vmatmul.mubr.bf16.gmra.mrb[0].mxu0 %v1571
          %v1776 = vpop.f32.mrb[0].mxu0
          %v1777 = vadd.f32 0.0, %v1776
          %v1778 = vpop.f32.mrb[0].mxu0
          %v1779 = vpop.f32.mrb[0].mxu0
          %v1780 = vadd.f32 0.0, %v1779
          %v1781 = vpop.f32.mrb[0].mxu0
          %1782 = vmatprep.mubr.bf16.mxu0 0
          %1783 = vmatmul.mubr.bf16.gmra.mrb[0].mxu0 %v1572
          %v1784 = vpop.f32.mrb[0].mxu0
          %v1785 = vadd.f32 0.0, %v1784
          %v1786 = vpop.f32.mrb[0].mxu0
          %v1787 = vpop.f32.mrb[0].mxu0
          %v1788 = vadd.f32 0.0, %v1787
          %v1789 = vpop.f32.mrb[0].mxu0
          %1790 = vmatprep.mubr.bf16.mxu0 0
          %1791 = vmatmul.mubr.bf16.gmra.mrb[0].mxu0 %v1573
          %v1792 = vpop.f32.mrb[0].mxu0
          %v1793 = vadd.f32 0.0, %v1792
          %v1794 = vpop.f32.mrb[0].mxu0
          %v1795 = vpop.f32.mrb[0].mxu0
          %v1796 = vadd.f32 0.0, %v1795
          %v1797 = vpop.f32.mrb[0].mxu0
          %1798 = vdwg.mxu0
          %v1815 = vunpack.c.l.b16 %v1462
          %v1816 = vunpack.c.l.b16 %v1463
          %v1817 = vunpack.c.l.b16 %v1464
          %v1818 = vunpack.c.l.b16 %v1465
          %v1819 = vunpack.c.l.b16 %v1466
          %v1820 = vunpack.c.l.b16 %v1467
          %v1821 = vunpack.c.l.b16 %v1468
          %v1822 = vunpack.c.l.b16 %v1469
          %v1823 = vunpack.c.l.b16 %v1470
          %v1824 = vunpack.c.l.b16 %v1471
          %v1825 = vunpack.c.l.b16 %v1472
          %v1826 = vunpack.c.l.b16 %v1473
          %v1827 = vunpack.c.l.b16 %v1474
          %v1828 = vunpack.c.l.b16 %v1475
          %v1829 = vunpack.c.l.b16 %v1476
          %v1830 = vunpack.c.l.b16 %v1477
          %v1831 = vpack.c.b16 %v1816, %v1815
          %v1832 = vpack.c.b16 %v1818, %v1817
          %v1833 = vpack.c.b16 %v1820, %v1819
          %v1834 = vpack.c.b16 %v1822, %v1821
          %v1835 = vpack.c.b16 %v1824, %v1823
          %v1836 = vpack.c.b16 %v1826, %v1825
          %v1837 = vpack.c.b16 %v1828, %v1827
          %v1838 = vpack.c.b16 %v1830, %v1829
          %1847 = vmatprep.subr.bf16.mxu0 0
          %1848 = vmatpush1.bf16.msra.mxu0 %v1831
          %1849 = vmatprep.subr.bf16.mxu0 0
          %1850 = vmatpush1.bf16.msra.mxu0 %v1832
          %1851 = vmatprep.subr.bf16.mxu0 0
          %1852 = vmatpush1.bf16.msra.mxu0 %v1833
          %1853 = vmatprep.subr.bf16.mxu0 0
          %1854 = vmatpush1.bf16.msra.mxu0 %v1834
          %1855 = vmatprep.subr.bf16.mxu0 0
          %1856 = vmatpush1.bf16.msra.mxu0 %v1835
          %1857 = vmatprep.subr.bf16.mxu0 0
          %1858 = vmatpush1.bf16.msra.mxu0 %v1836
          %1859 = vmatprep.subr.bf16.mxu0 0
          %1860 = vmatpush1.bf16.msra.mxu0 %v1837
          %1861 = vmatprep.subr.bf16.mxu0 0
          %1862 = vmatpush1.bf16.msra.mxu0 %v1838
          %1863 = vmatprep.subr.bf16.mxu0 0
          %1864 = vmatpush1.bf16.msra.mxu0 0
          %1865 = vmatprep.subr.bf16.mxu0 0
          %1866 = vmatpush1.bf16.msra.mxu0 0
          %1867 = vmatprep.subr.bf16.mxu0 0
          %1868 = vmatpush1.bf16.msra.mxu0 0
          %1869 = vmatprep.subr.bf16.mxu0 0
          %1870 = vmatpush1.bf16.msra.mxu0 0
          %1871 = vmatprep.subr.bf16.mxu0 0
          %1872 = vmatpush1.bf16.msra.mxu0 0
          %1873 = vmatprep.subr.bf16.mxu0 0
          %1874 = vmatpush1.bf16.msra.mxu0 0
          %1875 = vmatprep.subr.bf16.mxu0 0
          %1876 = vmatpush1.bf16.msra.mxu0 0
          %1877 = vmatprep.subr.bf16.mxu0 0
          %1878 = vmatpush1.bf16.msra.mxu0 0
          %1879 = vmatprep.mubr.bf16.mxu0 0
          %1880 = vmatmul.mubr.bf16.gmra.mrb[0].mxu0 %v1446
          %v1881 = vpop.f32.mrb[0].mxu0
          %v1882 = vadd.f32 %v1673, %v1881
          %v1883 = vpop.f32.mrb[0].mxu0
          %v1884 = vpop.f32.mrb[0].mxu0
          %v1885 = vadd.f32 %v1676, %v1884
          %v1886 = vpop.f32.mrb[0].mxu0
          %1887 = vmatprep.mubr.bf16.mxu0 0
          %1888 = vmatmul.mubr.bf16.gmra.mrb[0].mxu0 %v1447
          %v1889 = vpop.f32.mrb[0].mxu0
          %v1890 = vadd.f32 %v1681, %v1889
          %v1891 = vpop.f32.mrb[0].mxu0
          %v1892 = vpop.f32.mrb[0].mxu0
          %v1893 = vadd.f32 %v1684, %v1892
          %v1894 = vpop.f32.mrb[0].mxu0
          %1895 = vmatprep.mubr.bf16.mxu0 0
          %1896 = vmatmul.mubr.bf16.gmra.mrb[0].mxu0 %v1448
          %v1897 = vpop.f32.mrb[0].mxu0
          %v1898 = vadd.f32 %v1689, %v1897
          %v1899 = vpop.f32.mrb[0].mxu0
          %v1900 = vpop.f32.mrb[0].mxu0
          %v1901 = vadd.f32 %v1692, %v1900
          %v1902 = vpop.f32.mrb[0].mxu0
          %1903 = vmatprep.mubr.bf16.mxu0 0
          %1904 = vmatmul.mubr.bf16.gmra.mrb[0].mxu0 %v1449
          %v1905 = vpop.f32.mrb[0].mxu0
          %v1906 = vadd.f32 %v1697, %v1905
          %v1907 = vpop.f32.mrb[0].mxu0
          %v1908 = vpop.f32.mrb[0].mxu0
          %v1909 = vadd.f32 %v1700, %v1908
          %v1910 = vpop.f32.mrb[0].mxu0
          %1911 = vmatprep.mubr.bf16.mxu0 0
          %1912 = vmatmul.mubr.bf16.gmra.mrb[0].mxu0 %v1450
          %v1913 = vpop.f32.mrb[0].mxu0
          %v1914 = vadd.f32 %v1705, %v1913
          %v1915 = vpop.f32.mrb[0].mxu0
          %v1916 = vpop.f32.mrb[0].mxu0
          %v1917 = vadd.f32 %v1708, %v1916
          %v1918 = vpop.f32.mrb[0].mxu0
          %1919 = vmatprep.mubr.bf16.mxu0 0
          %1920 = vmatmul.mubr.bf16.gmra.mrb[0].mxu0 %v1451
          %v1921 = vpop.f32.mrb[0].mxu0
          %v1922 = vadd.f32 %v1713, %v1921
          %v1923 = vpop.f32.mrb[0].mxu0
          %v1924 = vpop.f32.mrb[0].mxu0
          %v1925 = vadd.f32 %v1716, %v1924
          %v1926 = vpop.f32.mrb[0].mxu0
          %1927 = vmatprep.mubr.bf16.mxu0 0
          %1928 = vmatmul.mubr.bf16.gmra.mrb[0].mxu0 %v1452
          %v1929 = vpop.f32.mrb[0].mxu0
          %v1930 = vadd.f32 %v1721, %v1929
          %v1931 = vpop.f32.mrb[0].mxu0
          %v1932 = vpop.f32.mrb[0].mxu0
          %v1933 = vadd.f32 %v1724, %v1932
          %v1934 = vpop.f32.mrb[0].mxu0
          %1935 = vmatprep.mubr.bf16.mxu0 0
          %1936 = vmatmul.mubr.bf16.gmra.mrb[0].mxu0 %v1453
          %v1937 = vpop.f32.mrb[0].mxu0
          %v1938 = vadd.f32 %v1729, %v1937
          %v1939 = vpop.f32.mrb[0].mxu0
          %v1940 = vpop.f32.mrb[0].mxu0
          %v1941 = vadd.f32 %v1732, %v1940
          %v1942 = vpop.f32.mrb[0].mxu0
          %1943 = vmatprep.mubr.bf16.mxu0 0
          %1944 = vmatmul.mubr.bf16.gmra.mrb[0].mxu0 %v1454
          %v1945 = vpop.f32.mrb[0].mxu0
          %v1946 = vadd.f32 %v1737, %v1945
          %v1947 = vpop.f32.mrb[0].mxu0
          %v1948 = vpop.f32.mrb[0].mxu0
          %v1949 = vadd.f32 %v1740, %v1948
          %v1950 = vpop.f32.mrb[0].mxu0
          %1951 = vmatprep.mubr.bf16.mxu0 0
          %1952 = vmatmul.mubr.bf16.gmra.mrb[0].mxu0 %v1455
          %v1953 = vpop.f32.mrb[0].mxu0
          %v1954 = vadd.f32 %v1745, %v1953
          %v1955 = vpop.f32.mrb[0].mxu0
          %v1956 = vpop.f32.mrb[0].mxu0
          %v1957 = vadd.f32 %v1748, %v1956
          %v1958 = vpop.f32.mrb[0].mxu0
          %1959 = vmatprep.mubr.bf16.mxu0 0
          %1960 = vmatmul.mubr.bf16.gmra.mrb[0].mxu0 %v1456
          %v1961 = vpop.f32.mrb[0].mxu0
          %v1962 = vadd.f32 %v1753, %v1961
          %v1963 = vpop.f32.mrb[0].mxu0
          %v1964 = vpop.f32.mrb[0].mxu0
          %v1965 = vadd.f32 %v1756, %v1964
          %v1966 = vpop.f32.mrb[0].mxu0
          %1967 = vmatprep.mubr.bf16.mxu0 0
          %1968 = vmatmul.mubr.bf16.gmra.mrb[0].mxu0 %v1457
          %v1969 = vpop.f32.mrb[0].mxu0
          %v1970 = vadd.f32 %v1761, %v1969
          %v1971 = vpop.f32.mrb[0].mxu0
          %v1972 = vpop.f32.mrb[0].mxu0
          %v1973 = vadd.f32 %v1764, %v1972
          %v1974 = vpop.f32.mrb[0].mxu0
          %1975 = vmatprep.mubr.bf16.mxu0 0
          %1976 = vmatmul.mubr.bf16.gmra.mrb[0].mxu0 %v1458
          %v1977 = vpop.f32.mrb[0].mxu0
          %v1978 = vadd.f32 %v1769, %v1977
          %v1979 = vpop.f32.mrb[0].mxu0
          %v1980 = vpop.f32.mrb[0].mxu0
          %v1981 = vadd.f32 %v1772, %v1980
          %v1982 = vpop.f32.mrb[0].mxu0
          %1983 = vmatprep.mubr.bf16.mxu0 0
          %1984 = vmatmul.mubr.bf16.gmra.mrb[0].mxu0 %v1459
          %v1985 = vpop.f32.mrb[0].mxu0
          %v1986 = vadd.f32 %v1777, %v1985
          %v1987 = vpop.f32.mrb[0].mxu0
          %v1988 = vpop.f32.mrb[0].mxu0
          %v1989 = vadd.f32 %v1780, %v1988
          %v1990 = vpop.f32.mrb[0].mxu0
          %1991 = vmatprep.mubr.bf16.mxu0 0
          %1992 = vmatmul.mubr.bf16.gmra.mrb[0].mxu0 %v1460
          %v1993 = vpop.f32.mrb[0].mxu0
          %v1994 = vadd.f32 %v1785, %v1993
          %v1995 = vpop.f32.mrb[0].mxu0
          %v1996 = vpop.f32.mrb[0].mxu0
          %v1997 = vadd.f32 %v1788, %v1996
          %v1998 = vpop.f32.mrb[0].mxu0
          %1999 = vmatprep.mubr.bf16.mxu0 0
          %2000 = vmatmul.mubr.bf16.gmra.mrb[0].mxu0 %v1461
          %v2001 = vpop.f32.mrb[0].mxu0
          %v2002 = vadd.f32 %v1793, %v2001
          %v2003 = vpop.f32.mrb[0].mxu0
          %v2004 = vpop.f32.mrb[0].mxu0
          %v2005 = vadd.f32 %v1796, %v2004
          %v2006 = vpop.f32.mrb[0].mxu0
          %2007 = vdwg.mxu0
          %v2008 = vld [vmem:[%s378] sm:$0x1]
          %v2010 = vlaneseq
          %v2011 = vshrl.u32 %v2010, 7
          %v2012 = vsub.s32 0, %v2011
          %v2013 = vrot.slane %v2008, %v2012
          %v2015 = vadd.f32 %v1882, %v2013
          %v2016 = vadd.f32 %v1885, %v2013
          %v2017 = vadd.f32 %v1890, %v2013
          %v2018 = vadd.f32 %v1893, %v2013
          %v2019 = vadd.f32 %v1898, %v2013
          %v2020 = vadd.f32 %v1901, %v2013
          %v2021 = vadd.f32 %v1906, %v2013
          %v2022 = vadd.f32 %v1909, %v2013
          %v2023 = vadd.f32 %v1914, %v2013
          %v2024 = vadd.f32 %v1917, %v2013
          %v2025 = vadd.f32 %v1922, %v2013
          %v2026 = vadd.f32 %v1925, %v2013
          %v2027 = vadd.f32 %v1930, %v2013
          %v2028 = vadd.f32 %v1933, %v2013
          %v2029 = vadd.f32 %v1938, %v2013
          %v2030 = vadd.f32 %v1941, %v2013
          %v2031 = vadd.f32 %v1946, %v2013
          %v2032 = vadd.f32 %v1949, %v2013
          %v2033 = vadd.f32 %v1954, %v2013
          %v2034 = vadd.f32 %v1957, %v2013
          %v2035 = vadd.f32 %v1962, %v2013
          %v2036 = vadd.f32 %v1965, %v2013
          %v2037 = vadd.f32 %v1970, %v2013
          %v2038 = vadd.f32 %v1973, %v2013
          %v2039 = vadd.f32 %v1978, %v2013
          %v2040 = vadd.f32 %v1981, %v2013
          %v2041 = vadd.f32 %v1986, %v2013
          %v2042 = vadd.f32 %v1989, %v2013
          %v2043 = vadd.f32 %v1994, %v2013
          %v2044 = vadd.f32 %v1997, %v2013
          %v2045 = vadd.f32 %v2002, %v2013
          %v2046 = vadd.f32 %v2005, %v2013
          %v2047 = vmax.f32 %v2015, 0.0
          %v2048 = vmax.f32 %v2016, 0.0
          %v2049 = vmax.f32 %v2017, 0.0
          %v2050 = vmax.f32 %v2018, 0.0
          %v2051 = vmax.f32 %v2019, 0.0
          %v2052 = vmax.f32 %v2020, 0.0
          %v2053 = vmax.f32 %v2021, 0.0
          %v2054 = vmax.f32 %v2022, 0.0
          %v2055 = vmax.f32 %v2023, 0.0
          %v2056 = vmax.f32 %v2024, 0.0
          %v2057 = vmax.f32 %v2025, 0.0
          %v2058 = vmax.f32 %v2026, 0.0
          %v2059 = vmax.f32 %v2027, 0.0
          %v2060 = vmax.f32 %v2028, 0.0
          %v2061 = vmax.f32 %v2029, 0.0
          %v2062 = vmax.f32 %v2030, 0.0
          %v2063 = vmax.f32 %v2031, 0.0
          %v2064 = vmax.f32 %v2032, 0.0
          %v2065 = vmax.f32 %v2033, 0.0
          %v2066 = vmax.f32 %v2034, 0.0
          %v2067 = vmax.f32 %v2035, 0.0
          %v2068 = vmax.f32 %v2036, 0.0
          %v2069 = vmax.f32 %v2037, 0.0
          %v2070 = vmax.f32 %v2038, 0.0
          %v2071 = vmax.f32 %v2039, 0.0
          %v2072 = vmax.f32 %v2040, 0.0
          %v2073 = vmax.f32 %v2041, 0.0
          %v2074 = vmax.f32 %v2042, 0.0
          %v2075 = vmax.f32 %v2043, 0.0
          %v2076 = vmax.f32 %v2044, 0.0
          %v2077 = vmax.f32 %v2045, 0.0
          %v2078 = vmax.f32 %v2046, 0.0
          %v2079 = vpack.c.bf16 %v2048, %v2047
          %v2080 = vpack.c.bf16 %v2050, %v2049
          %v2081 = vpack.c.bf16 %v2052, %v2051
          %v2082 = vpack.c.bf16 %v2054, %v2053
          %v2083 = vpack.c.bf16 %v2056, %v2055
          %v2084 = vpack.c.bf16 %v2058, %v2057
          %v2085 = vpack.c.bf16 %v2060, %v2059
          %v2086 = vpack.c.bf16 %v2062, %v2061
          %v2087 = vpack.c.bf16 %v2064, %v2063
          %v2088 = vpack.c.bf16 %v2066, %v2065
          %v2089 = vpack.c.bf16 %v2068, %v2067
          %v2090 = vpack.c.bf16 %v2070, %v2069
          %v2091 = vpack.c.bf16 %v2072, %v2071
          %v2092 = vpack.c.bf16 %v2074, %v2073
          %v2093 = vpack.c.bf16 %v2076, %v2075
          %v2094 = vpack.c.bf16 %v2078, %v2077
          %s2095 = sshra.s32 %s382, 4
          %s2096 = sand.u32 %s382, 15
          %s2097 = smul.addr %s2095, 8
          %s2098 = scalar_lea.vmem [#allocation2], %s2097
          %2099 = vst [vmem:[%s2098] sm:$0xff] %v2079
          %2100 = vst [vmem:[%s2098 + $0x8] sm:$0xff] %v2080
          %2101 = vst [vmem:[%s2098 + $0x10] sm:$0xff] %v2081
          %2102 = vst [vmem:[%s2098 + $0x18] sm:$0xff] %v2082
          %2103 = vst [vmem:[%s2098 + $0x20] sm:$0xff] %v2083
          %2104 = vst [vmem:[%s2098 + $0x28] sm:$0xff] %v2084
          %2105 = vst [vmem:[%s2098 + $0x30] sm:$0xff] %v2085
          %2106 = vst [vmem:[%s2098 + $0x38] sm:$0xff] %v2086
          %2107 = vst [vmem:[%s2098 + $0x40] sm:$0xff] %v2087
          %2108 = vst [vmem:[%s2098 + $0x48] sm:$0xff] %v2088
          %2109 = vst [vmem:[%s2098 + $0x50] sm:$0xff] %v2089
          %2110 = vst [vmem:[%s2098 + $0x58] sm:$0xff] %v2090
          %2111 = vst [vmem:[%s2098 + $0x60] sm:$0xff] %v2091
          %2112 = vst [vmem:[%s2098 + $0x68] sm:$0xff] %v2092
          %2113 = vst [vmem:[%s2098 + $0x70] sm:$0xff] %v2093
          %2114 = vst [vmem:[%s2098 + $0x78] sm:$0xff] %v2094
        $region72: #{tpu_custom_call.1} parent=43 // pred_fallthru
          _
        %p2115 = pnand %p1149, %p868
        %p2116 = pneg %p2115
        // Predicated region
        $region73: #{tpu_custom_call.1} parent=43 // pred_check
          _
        $region74: #{tpu_custom_call.1} parent=43 // pred_check_branch
          %2118 = sbr.rel (%p2115) target = $region76
        $region75: #{tpu_custom_call.1} parent=43 // pred_region
          %s2119 = sshra.s32 %s382, 4
          %s2120 = sand.u32 %s382, 15
          %s2121 = smul.addr %s2119, 8
          %s2122 = scalar_lea.vmem [#allocation2], %s2121
          %v2123 = vld [vmem:[%s2122] sm:$0xff]
          %v2124 = vld [vmem:[%s2122 + $0x8] sm:$0xff]
          %v2125 = vld [vmem:[%s2122 + $0x10] sm:$0xff]
          %v2126 = vld [vmem:[%s2122 + $0x18] sm:$0xff]
          %v2127 = vld [vmem:[%s2122 + $0x20] sm:$0xff]
          %v2128 = vld [vmem:[%s2122 + $0x28] sm:$0xff]
          %v2129 = vld [vmem:[%s2122 + $0x30] sm:$0xff]
          %v2130 = vld [vmem:[%s2122 + $0x38] sm:$0xff]
          %v2131 = vld [vmem:[%s2122 + $0x40] sm:$0xff]
          %v2132 = vld [vmem:[%s2122 + $0x48] sm:$0xff]
          %v2133 = vld [vmem:[%s2122 + $0x50] sm:$0xff]
          %v2134 = vld [vmem:[%s2122 + $0x58] sm:$0xff]
          %v2135 = vld [vmem:[%s2122 + $0x60] sm:$0xff]
          %v2136 = vld [vmem:[%s2122 + $0x68] sm:$0xff]
          %v2137 = vld [vmem:[%s2122 + $0x70] sm:$0xff]
          %v2138 = vld [vmem:[%s2122 + $0x78] sm:$0xff]
          %v2139 = vld [vmem:[#allocation3] sm:$0xff]
          %v2140 = vld [vmem:[#allocation3 + $0x8] sm:$0xff]
          %v2141 = vld [vmem:[#allocation3 + $0x10] sm:$0xff]
          %v2142 = vld [vmem:[#allocation3 + $0x18] sm:$0xff]
          %v2143 = vld [vmem:[#allocation3 + $0x20] sm:$0xff]
          %v2144 = vld [vmem:[#allocation3 + $0x28] sm:$0xff]
          %v2145 = vld [vmem:[#allocation3 + $0x30] sm:$0xff]
          %v2146 = vld [vmem:[#allocation3 + $0x38] sm:$0xff]
          %v2147 = vld [vmem:[#allocation3 + $0x40] sm:$0xff]
          %v2148 = vld [vmem:[#allocation3 + $0x48] sm:$0xff]
          %v2149 = vld [vmem:[#allocation3 + $0x50] sm:$0xff]
          %v2150 = vld [vmem:[#allocation3 + $0x58] sm:$0xff]
          %v2151 = vld [vmem:[#allocation3 + $0x60] sm:$0xff]
          %v2152 = vld [vmem:[#allocation3 + $0x68] sm:$0xff]
          %v2153 = vld [vmem:[#allocation3 + $0x70] sm:$0xff]
          %v2154 = vld [vmem:[#allocation3 + $0x78] sm:$0xff]
          %v2155 = vld [vmem:[#allocation3 + $0x80] sm:$0xff]
          %v2156 = vld [vmem:[#allocation3 + $0x88] sm:$0xff]
          %v2157 = vld [vmem:[#allocation3 + $0x90] sm:$0xff]
          %v2158 = vld [vmem:[#allocation3 + $0x98] sm:$0xff]
          %v2159 = vld [vmem:[#allocation3 + $0xa0] sm:$0xff]
          %v2160 = vld [vmem:[#allocation3 + $0xa8] sm:$0xff]
          %v2161 = vld [vmem:[#allocation3 + $0xb0] sm:$0xff]
          %v2162 = vld [vmem:[#allocation3 + $0xb8] sm:$0xff]
          %v2163 = vld [vmem:[#allocation3 + $0xc0] sm:$0xff]
          %v2164 = vld [vmem:[#allocation3 + $0xc8] sm:$0xff]
          %v2165 = vld [vmem:[#allocation3 + $0xd0] sm:$0xff]
          %v2166 = vld [vmem:[#allocation3 + $0xd8] sm:$0xff]
          %v2167 = vld [vmem:[#allocation3 + $0xe0] sm:$0xff]
          %v2168 = vld [vmem:[#allocation3 + $0xe8] sm:$0xff]
          %v2169 = vld [vmem:[#allocation3 + $0xf0] sm:$0xff]
          %v2170 = vld [vmem:[#allocation3 + $0xf8] sm:$0xff]
          %v2171 = vld [vmem:[%s374] sm:$0xff]
          %v2172 = vld [vmem:[%s374 + $0x8] sm:$0xff]
          %v2173 = vld [vmem:[%s374 + $0x10] sm:$0xff]
          %v2174 = vld [vmem:[%s374 + $0x18] sm:$0xff]
          %v2175 = vld [vmem:[%s374 + $0x20] sm:$0xff]
          %v2176 = vld [vmem:[%s374 + $0x28] sm:$0xff]
          %v2177 = vld [vmem:[%s374 + $0x30] sm:$0xff]
          %v2178 = vld [vmem:[%s374 + $0x38] sm:$0xff]
          %v2179 = vld [vmem:[%s374 + $0x40] sm:$0xff]
          %v2180 = vld [vmem:[%s374 + $0x48] sm:$0xff]
          %v2181 = vld [vmem:[%s374 + $0x50] sm:$0xff]
          %v2182 = vld [vmem:[%s374 + $0x58] sm:$0xff]
          %v2183 = vld [vmem:[%s374 + $0x60] sm:$0xff]
          %v2184 = vld [vmem:[%s374 + $0x68] sm:$0xff]
          %v2185 = vld [vmem:[%s374 + $0x70] sm:$0xff]
          %v2186 = vld [vmem:[%s374 + $0x78] sm:$0xff]
          %v2187 = vld [vmem:[%s374 + $0x80] sm:$0xff]
          %v2188 = vld [vmem:[%s374 + $0x88] sm:$0xff]
          %v2189 = vld [vmem:[%s374 + $0x90] sm:$0xff]
          %v2190 = vld [vmem:[%s374 + $0x98] sm:$0xff]
          %v2191 = vld [vmem:[%s374 + $0xa0] sm:$0xff]
          %v2192 = vld [vmem:[%s374 + $0xa8] sm:$0xff]
          %v2193 = vld [vmem:[%s374 + $0xb0] sm:$0xff]
          %v2194 = vld [vmem:[%s374 + $0xb8] sm:$0xff]
          %v2195 = vld [vmem:[%s374 + $0xc0] sm:$0xff]
          %v2196 = vld [vmem:[%s374 + $0xc8] sm:$0xff]
          %v2197 = vld [vmem:[%s374 + $0xd0] sm:$0xff]
          %v2198 = vld [vmem:[%s374 + $0xd8] sm:$0xff]
          %v2199 = vld [vmem:[%s374 + $0xe0] sm:$0xff]
          %v2200 = vld [vmem:[%s374 + $0xe8] sm:$0xff]
          %v2201 = vld [vmem:[%s374 + $0xf0] sm:$0xff]
          %v2202 = vld [vmem:[%s374 + $0xf8] sm:$0xff]
          %2204 = vset.pattern.permute.xlu0 0
          %2205 = vperm.xlu0 %2204, %v2171
          %v2206 = vpop.permute.xlu0 %2205
          %2209 = vset.pattern.permute.xlu0 0
          %2210 = vperm.xlu0 %2209, %v2172
          %v2211 = vpop.permute.xlu0 %2210
          %2214 = vset.pattern.permute.xlu0 0
          %2215 = vperm.xlu0 %2214, %v2173
          %v2216 = vpop.permute.xlu0 %2215
          %2219 = vset.pattern.permute.xlu0 0
          %2220 = vperm.xlu0 %2219, %v2174
          %v2221 = vpop.permute.xlu0 %2220
          %2224 = vset.pattern.permute.xlu0 0
          %2225 = vperm.xlu0 %2224, %v2175
          %v2226 = vpop.permute.xlu0 %2225
          %2229 = vset.pattern.permute.xlu0 0
          %2230 = vperm.xlu0 %2229, %v2176
          %v2231 = vpop.permute.xlu0 %2230
          %2234 = vset.pattern.permute.xlu0 0
          %2235 = vperm.xlu0 %2234, %v2177
          %v2236 = vpop.permute.xlu0 %2235
          %2239 = vset.pattern.permute.xlu0 0
          %2240 = vperm.xlu0 %2239, %v2178
          %v2241 = vpop.permute.xlu0 %2240
          %2244 = vset.pattern.permute.xlu0 0
          %2245 = vperm.xlu0 %2244, %v2179
          %v2246 = vpop.permute.xlu0 %2245
          %2249 = vset.pattern.permute.xlu0 0
          %2250 = vperm.xlu0 %2249, %v2180
          %v2251 = vpop.permute.xlu0 %2250
          %2254 = vset.pattern.permute.xlu0 0
          %2255 = vperm.xlu0 %2254, %v2181
          %v2256 = vpop.permute.xlu0 %2255
          %2259 = vset.pattern.permute.xlu0 0
          %2260 = vperm.xlu0 %2259, %v2182
          %v2261 = vpop.permute.xlu0 %2260
          %2264 = vset.pattern.permute.xlu0 0
          %2265 = vperm.xlu0 %2264, %v2183
          %v2266 = vpop.permute.xlu0 %2265
          %2269 = vset.pattern.permute.xlu0 0
          %2270 = vperm.xlu0 %2269, %v2184
          %v2271 = vpop.permute.xlu0 %2270
          %2274 = vset.pattern.permute.xlu0 0
          %2275 = vperm.xlu0 %2274, %v2185
          %v2276 = vpop.permute.xlu0 %2275
          %2279 = vset.pattern.permute.xlu0 0
          %2280 = vperm.xlu0 %2279, %v2186
          %v2281 = vpop.permute.xlu0 %2280
          %2284 = vset.pattern.permute.xlu0 0
          %2285 = vperm.xlu0 %2284, %v2187
          %v2286 = vpop.permute.xlu0 %2285
          %2289 = vset.pattern.permute.xlu0 0
          %2290 = vperm.xlu0 %2289, %v2188
          %v2291 = vpop.permute.xlu0 %2290
          %2294 = vset.pattern.permute.xlu0 0
          %2295 = vperm.xlu0 %2294, %v2189
          %v2296 = vpop.permute.xlu0 %2295
          %2299 = vset.pattern.permute.xlu0 0
          %2300 = vperm.xlu0 %2299, %v2190
          %v2301 = vpop.permute.xlu0 %2300
          %2304 = vset.pattern.permute.xlu0 0
          %2305 = vperm.xlu0 %2304, %v2191
          %v2306 = vpop.permute.xlu0 %2305
          %2309 = vset.pattern.permute.xlu0 0
          %2310 = vperm.xlu0 %2309, %v2192
          %v2311 = vpop.permute.xlu0 %2310
          %2314 = vset.pattern.permute.xlu0 0
          %2315 = vperm.xlu0 %2314, %v2193
          %v2316 = vpop.permute.xlu0 %2315
          %2319 = vset.pattern.permute.xlu0 0
          %2320 = vperm.xlu0 %2319, %v2194
          %v2321 = vpop.permute.xlu0 %2320
          %2324 = vset.pattern.permute.xlu0 0
          %2325 = vperm.xlu0 %2324, %v2195
          %v2326 = vpop.permute.xlu0 %2325
          %2329 = vset.pattern.permute.xlu0 0
          %2330 = vperm.xlu0 %2329, %v2196
          %v2331 = vpop.permute.xlu0 %2330
          %2334 = vset.pattern.permute.xlu0 0
          %2335 = vperm.xlu0 %2334, %v2197
          %v2336 = vpop.permute.xlu0 %2335
          %2339 = vset.pattern.permute.xlu0 0
          %2340 = vperm.xlu0 %2339, %v2198
          %v2341 = vpop.permute.xlu0 %2340
          %2344 = vset.pattern.permute.xlu0 0
          %2345 = vperm.xlu0 %2344, %v2199
          %v2346 = vpop.permute.xlu0 %2345
          %2349 = vset.pattern.permute.xlu0 0
          %2350 = vperm.xlu0 %2349, %v2200
          %v2351 = vpop.permute.xlu0 %2350
          %2354 = vset.pattern.permute.xlu0 0
          %2355 = vperm.xlu0 %2354, %v2201
          %v2356 = vpop.permute.xlu0 %2355
          %2359 = vset.pattern.permute.xlu0 0
          %2360 = vperm.xlu0 %2359, %v2202
          %v2361 = vpop.permute.xlu0 %2360
          %v2363 = vmul.f32 %v2139, %v2206
          %v2364 = vmul.f32 %v2140, %v2211
          %v2365 = vmul.f32 %v2141, %v2216
          %v2366 = vmul.f32 %v2142, %v2221
          %v2367 = vmul.f32 %v2143, %v2226
          %v2368 = vmul.f32 %v2144, %v2231
          %v2369 = vmul.f32 %v2145, %v2236
          %v2370 = vmul.f32 %v2146, %v2241
          %v2371 = vmul.f32 %v2147, %v2246
          %v2372 = vmul.f32 %v2148, %v2251
          %v2373 = vmul.f32 %v2149, %v2256
          %v2374 = vmul.f32 %v2150, %v2261
          %v2375 = vmul.f32 %v2151, %v2266
          %v2376 = vmul.f32 %v2152, %v2271
          %v2377 = vmul.f32 %v2153, %v2276
          %v2378 = vmul.f32 %v2154, %v2281
          %v2379 = vmul.f32 %v2155, %v2286
          %v2380 = vmul.f32 %v2156, %v2291
          %v2381 = vmul.f32 %v2157, %v2296
          %v2382 = vmul.f32 %v2158, %v2301
          %v2383 = vmul.f32 %v2159, %v2306
          %v2384 = vmul.f32 %v2160, %v2311
          %v2385 = vmul.f32 %v2161, %v2316
          %v2386 = vmul.f32 %v2162, %v2321
          %v2387 = vmul.f32 %v2163, %v2326
          %v2388 = vmul.f32 %v2164, %v2331
          %v2389 = vmul.f32 %v2165, %v2336
          %v2390 = vmul.f32 %v2166, %v2341
          %v2391 = vmul.f32 %v2167, %v2346
          %v2392 = vmul.f32 %v2168, %v2351
          %v2393 = vmul.f32 %v2169, %v2356
          %v2394 = vmul.f32 %v2170, %v2361
          %v2395 = vpack.c.bf16 %v2364, %v2363
          %v2396 = vpack.c.bf16 %v2366, %v2365
          %v2397 = vpack.c.bf16 %v2368, %v2367
          %v2398 = vpack.c.bf16 %v2370, %v2369
          %v2399 = vpack.c.bf16 %v2372, %v2371
          %v2400 = vpack.c.bf16 %v2374, %v2373
          %v2401 = vpack.c.bf16 %v2376, %v2375
          %v2402 = vpack.c.bf16 %v2378, %v2377
          %v2403 = vpack.c.bf16 %v2380, %v2379
          %v2404 = vpack.c.bf16 %v2382, %v2381
          %v2405 = vpack.c.bf16 %v2384, %v2383
          %v2406 = vpack.c.bf16 %v2386, %v2385
          %v2407 = vpack.c.bf16 %v2388, %v2387
          %v2408 = vpack.c.bf16 %v2390, %v2389
          %v2409 = vpack.c.bf16 %v2392, %v2391
          %v2410 = vpack.c.bf16 %v2394, %v2393
          %v2411 = vld [vmem:[%s319] sm:$0xf]
          %v2412 = vld [vmem:[%s319 + $0x4] sm:$0xf]
          %v2413 = vld [vmem:[%s319 + $0x8] sm:$0xf]
          %v2414 = vld [vmem:[%s319 + $0xc] sm:$0xf]
          %v2415 = vld [vmem:[%s319 + $0x10] sm:$0xf]
          %v2416 = vld [vmem:[%s319 + $0x14] sm:$0xf]
          %v2417 = vld [vmem:[%s319 + $0x18] sm:$0xf]
          %v2418 = vld [vmem:[%s319 + $0x1c] sm:$0xf]
          %v2419 = vld [vmem:[%s319 + $0x20] sm:$0xf]
          %v2420 = vld [vmem:[%s319 + $0x24] sm:$0xf]
          %v2421 = vld [vmem:[%s319 + $0x28] sm:$0xf]
          %v2422 = vld [vmem:[%s319 + $0x2c] sm:$0xf]
          %v2423 = vld [vmem:[%s319 + $0x30] sm:$0xf]
          %v2424 = vld [vmem:[%s319 + $0x34] sm:$0xf]
          %v2425 = vld [vmem:[%s319 + $0x38] sm:$0xf]
          %v2426 = vld [vmem:[%s319 + $0x3c] sm:$0xf]
          %v2427 = vld [vmem:[%s328] sm:$0xf]
          %v2428 = vld [vmem:[%s328 + $0x4] sm:$0xf]
          %v2429 = vld [vmem:[%s328 + $0x8] sm:$0xf]
          %v2430 = vld [vmem:[%s328 + $0xc] sm:$0xf]
          %v2431 = vld [vmem:[%s328 + $0x10] sm:$0xf]
          %v2432 = vld [vmem:[%s328 + $0x14] sm:$0xf]
          %v2433 = vld [vmem:[%s328 + $0x18] sm:$0xf]
          %v2434 = vld [vmem:[%s328 + $0x1c] sm:$0xf]
          %v2435 = vld [vmem:[%s328 + $0x20] sm:$0xf]
          %v2436 = vld [vmem:[%s328 + $0x24] sm:$0xf]
          %v2437 = vld [vmem:[%s328 + $0x28] sm:$0xf]
          %v2438 = vld [vmem:[%s328 + $0x2c] sm:$0xf]
          %v2439 = vld [vmem:[%s328 + $0x30] sm:$0xf]
          %v2440 = vld [vmem:[%s328 + $0x34] sm:$0xf]
          %v2441 = vld [vmem:[%s328 + $0x38] sm:$0xf]
          %v2442 = vld [vmem:[%s328 + $0x3c] sm:$0xf]
          %v2459 = vunpack.c.l.b16 %v2427
          %v2460 = vunpack.c.l.b16 %v2428
          %v2461 = vunpack.c.l.b16 %v2429
          %v2462 = vunpack.c.l.b16 %v2430
          %v2463 = vunpack.c.l.b16 %v2431
          %v2464 = vunpack.c.l.b16 %v2432
          %v2465 = vunpack.c.l.b16 %v2433
          %v2466 = vunpack.c.l.b16 %v2434
          %v2467 = vunpack.c.l.b16 %v2435
          %v2468 = vunpack.c.l.b16 %v2436
          %v2469 = vunpack.c.l.b16 %v2437
          %v2470 = vunpack.c.l.b16 %v2438
          %v2471 = vunpack.c.l.b16 %v2439
          %v2472 = vunpack.c.l.b16 %v2440
          %v2473 = vunpack.c.l.b16 %v2441
          %v2474 = vunpack.c.l.b16 %v2442
          %v2475 = vpack.c.b16 %v2460, %v2459
          %v2476 = vpack.c.b16 %v2462, %v2461
          %v2477 = vpack.c.b16 %v2464, %v2463
          %v2478 = vpack.c.b16 %v2466, %v2465
          %v2479 = vpack.c.b16 %v2468, %v2467
          %v2480 = vpack.c.b16 %v2470, %v2469
          %v2481 = vpack.c.b16 %v2472, %v2471
          %v2482 = vpack.c.b16 %v2474, %v2473
          %2491 = vmatprep.subr.bf16.mxu0 0
          %2492 = vmatpush1.bf16.msra.mxu0 %v2475
          %2493 = vmatprep.subr.bf16.mxu0 0
          %2494 = vmatpush1.bf16.msra.mxu0 %v2476
          %2495 = vmatprep.subr.bf16.mxu0 0
          %2496 = vmatpush1.bf16.msra.mxu0 %v2477
          %2497 = vmatprep.subr.bf16.mxu0 0
          %2498 = vmatpush1.bf16.msra.mxu0 %v2478
          %2499 = vmatprep.subr.bf16.mxu0 0
          %2500 = vmatpush1.bf16.msra.mxu0 %v2479
          %2501 = vmatprep.subr.bf16.mxu0 0
          %2502 = vmatpush1.bf16.msra.mxu0 %v2480
          %2503 = vmatprep.subr.bf16.mxu0 0
          %2504 = vmatpush1.bf16.msra.mxu0 %v2481
          %2505 = vmatprep.subr.bf16.mxu0 0
          %2506 = vmatpush1.bf16.msra.mxu0 %v2482
          %2507 = vmatprep.subr.bf16.mxu0 0
          %2508 = vmatpush1.bf16.msra.mxu0 0
          %2509 = vmatprep.subr.bf16.mxu0 0
          %2510 = vmatpush1.bf16.msra.mxu0 0
          %2511 = vmatprep.subr.bf16.mxu0 0
          %2512 = vmatpush1.bf16.msra.mxu0 0
          %2513 = vmatprep.subr.bf16.mxu0 0
          %2514 = vmatpush1.bf16.msra.mxu0 0
          %2515 = vmatprep.subr.bf16.mxu0 0
          %2516 = vmatpush1.bf16.msra.mxu0 0
          %2517 = vmatprep.subr.bf16.mxu0 0
          %2518 = vmatpush1.bf16.msra.mxu0 0
          %2519 = vmatprep.subr.bf16.mxu0 0
          %2520 = vmatpush1.bf16.msra.mxu0 0
          %2521 = vmatprep.subr.bf16.mxu0 0
          %2522 = vmatpush1.bf16.msra.mxu0 0
          %2523 = vmatprep.mubr.bf16.mxu0 0
          %2524 = vmatmul.mubr.bf16.gmra.mrb[0].mxu0 %v2123
          %v2525 = vpop.f32.mrb[0].mxu0
          %v2526 = vadd.f32 0.0, %v2525
          %v2527 = vpop.f32.mrb[0].mxu0
          %v2528 = vpop.f32.mrb[0].mxu0
          %v2529 = vadd.f32 0.0, %v2528
          %v2530 = vpop.f32.mrb[0].mxu0
          %2531 = vmatprep.mubr.bf16.mxu0 0
          %2532 = vmatmul.mubr.bf16.gmra.mrb[0].mxu0 %v2124
          %v2533 = vpop.f32.mrb[0].mxu0
          %v2534 = vadd.f32 0.0, %v2533
          %v2535 = vpop.f32.mrb[0].mxu0
          %v2536 = vpop.f32.mrb[0].mxu0
          %v2537 = vadd.f32 0.0, %v2536
          %v2538 = vpop.f32.mrb[0].mxu0
          %2539 = vmatprep.mubr.bf16.mxu0 0
          %2540 = vmatmul.mubr.bf16.gmra.mrb[0].mxu0 %v2125
          %v2541 = vpop.f32.mrb[0].mxu0
          %v2542 = vadd.f32 0.0, %v2541
          %v2543 = vpop.f32.mrb[0].mxu0
          %v2544 = vpop.f32.mrb[0].mxu0
          %v2545 = vadd.f32 0.0, %v2544
          %v2546 = vpop.f32.mrb[0].mxu0
          %2547 = vmatprep.mubr.bf16.mxu0 0
          %2548 = vmatmul.mubr.bf16.gmra.mrb[0].mxu0 %v2126
          %v2549 = vpop.f32.mrb[0].mxu0
          %v2550 = vadd.f32 0.0, %v2549
          %v2551 = vpop.f32.mrb[0].mxu0
          %v2552 = vpop.f32.mrb[0].mxu0
          %v2553 = vadd.f32 0.0, %v2552
          %v2554 = vpop.f32.mrb[0].mxu0
          %2555 = vmatprep.mubr.bf16.mxu0 0
          %2556 = vmatmul.mubr.bf16.gmra.mrb[0].mxu0 %v2127
          %v2557 = vpop.f32.mrb[0].mxu0
          %v2558 = vadd.f32 0.0, %v2557
          %v2559 = vpop.f32.mrb[0].mxu0
          %v2560 = vpop.f32.mrb[0].mxu0
          %v2561 = vadd.f32 0.0, %v2560
          %v2562 = vpop.f32.mrb[0].mxu0
          %2563 = vmatprep.mubr.bf16.mxu0 0
          %2564 = vmatmul.mubr.bf16.gmra.mrb[0].mxu0 %v2128
          %v2565 = vpop.f32.mrb[0].mxu0
          %v2566 = vadd.f32 0.0, %v2565
          %v2567 = vpop.f32.mrb[0].mxu0
          %v2568 = vpop.f32.mrb[0].mxu0
          %v2569 = vadd.f32 0.0, %v2568
          %v2570 = vpop.f32.mrb[0].mxu0
          %2571 = vmatprep.mubr.bf16.mxu0 0
          %2572 = vmatmul.mubr.bf16.gmra.mrb[0].mxu0 %v2129
          %v2573 = vpop.f32.mrb[0].mxu0
          %v2574 = vadd.f32 0.0, %v2573
          %v2575 = vpop.f32.mrb[0].mxu0
          %v2576 = vpop.f32.mrb[0].mxu0
          %v2577 = vadd.f32 0.0, %v2576
          %v2578 = vpop.f32.mrb[0].mxu0
          %2579 = vmatprep.mubr.bf16.mxu0 0
          %2580 = vmatmul.mubr.bf16.gmra.mrb[0].mxu0 %v2130
          %v2581 = vpop.f32.mrb[0].mxu0
          %v2582 = vadd.f32 0.0, %v2581
          %v2583 = vpop.f32.mrb[0].mxu0
          %v2584 = vpop.f32.mrb[0].mxu0
          %v2585 = vadd.f32 0.0, %v2584
          %v2586 = vpop.f32.mrb[0].mxu0
          %2587 = vmatprep.mubr.bf16.mxu0 0
          %2588 = vmatmul.mubr.bf16.gmra.mrb[0].mxu0 %v2131
          %v2589 = vpop.f32.mrb[0].mxu0
          %v2590 = vadd.f32 0.0, %v2589
          %v2591 = vpop.f32.mrb[0].mxu0
          %v2592 = vpop.f32.mrb[0].mxu0
          %v2593 = vadd.f32 0.0, %v2592
          %v2594 = vpop.f32.mrb[0].mxu0
          %2595 = vmatprep.mubr.bf16.mxu0 0
          %2596 = vmatmul.mubr.bf16.gmra.mrb[0].mxu0 %v2132
          %v2597 = vpop.f32.mrb[0].mxu0
          %v2598 = vadd.f32 0.0, %v2597
          %v2599 = vpop.f32.mrb[0].mxu0
          %v2600 = vpop.f32.mrb[0].mxu0
          %v2601 = vadd.f32 0.0, %v2600
          %v2602 = vpop.f32.mrb[0].mxu0
          %2603 = vmatprep.mubr.bf16.mxu0 0
          %2604 = vmatmul.mubr.bf16.gmra.mrb[0].mxu0 %v2133
          %v2605 = vpop.f32.mrb[0].mxu0
          %v2606 = vadd.f32 0.0, %v2605
          %v2607 = vpop.f32.mrb[0].mxu0
          %v2608 = vpop.f32.mrb[0].mxu0
          %v2609 = vadd.f32 0.0, %v2608
          %v2610 = vpop.f32.mrb[0].mxu0
          %2611 = vmatprep.mubr.bf16.mxu0 0
          %2612 = vmatmul.mubr.bf16.gmra.mrb[0].mxu0 %v2134
          %v2613 = vpop.f32.mrb[0].mxu0
          %v2614 = vadd.f32 0.0, %v2613
          %v2615 = vpop.f32.mrb[0].mxu0
          %v2616 = vpop.f32.mrb[0].mxu0
          %v2617 = vadd.f32 0.0, %v2616
          %v2618 = vpop.f32.mrb[0].mxu0
          %2619 = vmatprep.mubr.bf16.mxu0 0
          %2620 = vmatmul.mubr.bf16.gmra.mrb[0].mxu0 %v2135
          %v2621 = vpop.f32.mrb[0].mxu0
          %v2622 = vadd.f32 0.0, %v2621
          %v2623 = vpop.f32.mrb[0].mxu0
          %v2624 = vpop.f32.mrb[0].mxu0
          %v2625 = vadd.f32 0.0, %v2624
          %v2626 = vpop.f32.mrb[0].mxu0
          %2627 = vmatprep.mubr.bf16.mxu0 0
          %2628 = vmatmul.mubr.bf16.gmra.mrb[0].mxu0 %v2136
          %v2629 = vpop.f32.mrb[0].mxu0
          %v2630 = vadd.f32 0.0, %v2629
          %v2631 = vpop.f32.mrb[0].mxu0
          %v2632 = vpop.f32.mrb[0].mxu0
          %v2633 = vadd.f32 0.0, %v2632
          %v2634 = vpop.f32.mrb[0].mxu0
          %2635 = vmatprep.mubr.bf16.mxu0 0
          %2636 = vmatmul.mubr.bf16.gmra.mrb[0].mxu0 %v2137
          %v2637 = vpop.f32.mrb[0].mxu0
          %v2638 = vadd.f32 0.0, %v2637
          %v2639 = vpop.f32.mrb[0].mxu0
          %v2640 = vpop.f32.mrb[0].mxu0
          %v2641 = vadd.f32 0.0, %v2640
          %v2642 = vpop.f32.mrb[0].mxu0
          %2643 = vmatprep.mubr.bf16.mxu0 0
          %2644 = vmatmul.mubr.bf16.gmra.mrb[0].mxu0 %v2138
          %v2645 = vpop.f32.mrb[0].mxu0
          %v2646 = vadd.f32 0.0, %v2645
          %v2647 = vpop.f32.mrb[0].mxu0
          %v2648 = vpop.f32.mrb[0].mxu0
          %v2649 = vadd.f32 0.0, %v2648
          %v2650 = vpop.f32.mrb[0].mxu0
          %2651 = vdwg.mxu0
          %v2668 = vunpack.c.l.b16 %v2411
          %v2669 = vunpack.c.l.b16 %v2412
          %v2670 = vunpack.c.l.b16 %v2413
          %v2671 = vunpack.c.l.b16 %v2414
          %v2672 = vunpack.c.l.b16 %v2415
          %v2673 = vunpack.c.l.b16 %v2416
          %v2674 = vunpack.c.l.b16 %v2417
          %v2675 = vunpack.c.l.b16 %v2418
          %v2676 = vunpack.c.l.b16 %v2419
          %v2677 = vunpack.c.l.b16 %v2420
          %v2678 = vunpack.c.l.b16 %v2421
          %v2679 = vunpack.c.l.b16 %v2422
          %v2680 = vunpack.c.l.b16 %v2423
          %v2681 = vunpack.c.l.b16 %v2424
          %v2682 = vunpack.c.l.b16 %v2425
          %v2683 = vunpack.c.l.b16 %v2426
          %v2684 = vpack.c.b16 %v2669, %v2668
          %v2685 = vpack.c.b16 %v2671, %v2670
          %v2686 = vpack.c.b16 %v2673, %v2672
          %v2687 = vpack.c.b16 %v2675, %v2674
          %v2688 = vpack.c.b16 %v2677, %v2676
          %v2689 = vpack.c.b16 %v2679, %v2678
          %v2690 = vpack.c.b16 %v2681, %v2680
          %v2691 = vpack.c.b16 %v2683, %v2682
          %2700 = vmatprep.subr.bf16.mxu0 0
          %2701 = vmatpush1.bf16.msra.mxu0 %v2684
          %2702 = vmatprep.subr.bf16.mxu0 0
          %2703 = vmatpush1.bf16.msra.mxu0 %v2685
          %2704 = vmatprep.subr.bf16.mxu0 0
          %2705 = vmatpush1.bf16.msra.mxu0 %v2686
          %2706 = vmatprep.subr.bf16.mxu0 0
          %2707 = vmatpush1.bf16.msra.mxu0 %v2687
          %2708 = vmatprep.subr.bf16.mxu0 0
          %2709 = vmatpush1.bf16.msra.mxu0 %v2688
          %2710 = vmatprep.subr.bf16.mxu0 0
          %2711 = vmatpush1.bf16.msra.mxu0 %v2689
          %2712 = vmatprep.subr.bf16.mxu0 0
          %2713 = vmatpush1.bf16.msra.mxu0 %v2690
          %2714 = vmatprep.subr.bf16.mxu0 0
          %2715 = vmatpush1.bf16.msra.mxu0 %v2691
          %2716 = vmatprep.subr.bf16.mxu0 0
          %2717 = vmatpush1.bf16.msra.mxu0 0
          %2718 = vmatprep.subr.bf16.mxu0 0
          %2719 = vmatpush1.bf16.msra.mxu0 0
          %2720 = vmatprep.subr.bf16.mxu0 0
          %2721 = vmatpush1.bf16.msra.mxu0 0
          %2722 = vmatprep.subr.bf16.mxu0 0
          %2723 = vmatpush1.bf16.msra.mxu0 0
          %2724 = vmatprep.subr.bf16.mxu0 0
          %2725 = vmatpush1.bf16.msra.mxu0 0
          %2726 = vmatprep.subr.bf16.mxu0 0
          %2727 = vmatpush1.bf16.msra.mxu0 0
          %2728 = vmatprep.subr.bf16.mxu0 0
          %2729 = vmatpush1.bf16.msra.mxu0 0
          %2730 = vmatprep.subr.bf16.mxu0 0
          %2731 = vmatpush1.bf16.msra.mxu0 0
          %2732 = vmatprep.mubr.bf16.mxu0 0
          %2733 = vmatmul.mubr.bf16.gmra.mrb[0].mxu0 %v2395
          %v2734 = vpop.f32.mrb[0].mxu0
          %v2735 = vadd.f32 %v2526, %v2734
          %v2736 = vpop.f32.mrb[0].mxu0
          %v2737 = vpop.f32.mrb[0].mxu0
          %v2738 = vadd.f32 %v2529, %v2737
          %v2739 = vpop.f32.mrb[0].mxu0
          %2740 = vmatprep.mubr.bf16.mxu0 0
          %2741 = vmatmul.mubr.bf16.gmra.mrb[0].mxu0 %v2396
          %v2742 = vpop.f32.mrb[0].mxu0
          %v2743 = vadd.f32 %v2534, %v2742
          %v2744 = vpop.f32.mrb[0].mxu0
          %v2745 = vpop.f32.mrb[0].mxu0
          %v2746 = vadd.f32 %v2537, %v2745
          %v2747 = vpop.f32.mrb[0].mxu0
          %2748 = vmatprep.mubr.bf16.mxu0 0
          %2749 = vmatmul.mubr.bf16.gmra.mrb[0].mxu0 %v2397
          %v2750 = vpop.f32.mrb[0].mxu0
          %v2751 = vadd.f32 %v2542, %v2750
          %v2752 = vpop.f32.mrb[0].mxu0
          %v2753 = vpop.f32.mrb[0].mxu0
          %v2754 = vadd.f32 %v2545, %v2753
          %v2755 = vpop.f32.mrb[0].mxu0
          %2756 = vmatprep.mubr.bf16.mxu0 0
          %2757 = vmatmul.mubr.bf16.gmra.mrb[0].mxu0 %v2398
          %v2758 = vpop.f32.mrb[0].mxu0
          %v2759 = vadd.f32 %v2550, %v2758
          %v2760 = vpop.f32.mrb[0].mxu0
          %v2761 = vpop.f32.mrb[0].mxu0
          %v2762 = vadd.f32 %v2553, %v2761
          %v2763 = vpop.f32.mrb[0].mxu0
          %2764 = vmatprep.mubr.bf16.mxu0 0
          %2765 = vmatmul.mubr.bf16.gmra.mrb[0].mxu0 %v2399
          %v2766 = vpop.f32.mrb[0].mxu0
          %v2767 = vadd.f32 %v2558, %v2766
          %v2768 = vpop.f32.mrb[0].mxu0
          %v2769 = vpop.f32.mrb[0].mxu0
          %v2770 = vadd.f32 %v2561, %v2769
          %v2771 = vpop.f32.mrb[0].mxu0
          %2772 = vmatprep.mubr.bf16.mxu0 0
          %2773 = vmatmul.mubr.bf16.gmra.mrb[0].mxu0 %v2400
          %v2774 = vpop.f32.mrb[0].mxu0
          %v2775 = vadd.f32 %v2566, %v2774
          %v2776 = vpop.f32.mrb[0].mxu0
          %v2777 = vpop.f32.mrb[0].mxu0
          %v2778 = vadd.f32 %v2569, %v2777
          %v2779 = vpop.f32.mrb[0].mxu0
          %2780 = vmatprep.mubr.bf16.mxu0 0
          %2781 = vmatmul.mubr.bf16.gmra.mrb[0].mxu0 %v2401
          %v2782 = vpop.f32.mrb[0].mxu0
          %v2783 = vadd.f32 %v2574, %v2782
          %v2784 = vpop.f32.mrb[0].mxu0
          %v2785 = vpop.f32.mrb[0].mxu0
          %v2786 = vadd.f32 %v2577, %v2785
          %v2787 = vpop.f32.mrb[0].mxu0
          %2788 = vmatprep.mubr.bf16.mxu0 0
          %2789 = vmatmul.mubr.bf16.gmra.mrb[0].mxu0 %v2402
          %v2790 = vpop.f32.mrb[0].mxu0
          %v2791 = vadd.f32 %v2582, %v2790
          %v2792 = vpop.f32.mrb[0].mxu0
          %v2793 = vpop.f32.mrb[0].mxu0
          %v2794 = vadd.f32 %v2585, %v2793
          %v2795 = vpop.f32.mrb[0].mxu0
          %2796 = vmatprep.mubr.bf16.mxu0 0
          %2797 = vmatmul.mubr.bf16.gmra.mrb[0].mxu0 %v2403
          %v2798 = vpop.f32.mrb[0].mxu0
          %v2799 = vadd.f32 %v2590, %v2798
          %v2800 = vpop.f32.mrb[0].mxu0
          %v2801 = vpop.f32.mrb[0].mxu0
          %v2802 = vadd.f32 %v2593, %v2801
          %v2803 = vpop.f32.mrb[0].mxu0
          %2804 = vmatprep.mubr.bf16.mxu0 0
          %2805 = vmatmul.mubr.bf16.gmra.mrb[0].mxu0 %v2404
          %v2806 = vpop.f32.mrb[0].mxu0
          %v2807 = vadd.f32 %v2598, %v2806
          %v2808 = vpop.f32.mrb[0].mxu0
          %v2809 = vpop.f32.mrb[0].mxu0
          %v2810 = vadd.f32 %v2601, %v2809
          %v2811 = vpop.f32.mrb[0].mxu0
          %2812 = vmatprep.mubr.bf16.mxu0 0
          %2813 = vmatmul.mubr.bf16.gmra.mrb[0].mxu0 %v2405
          %v2814 = vpop.f32.mrb[0].mxu0
          %v2815 = vadd.f32 %v2606, %v2814
          %v2816 = vpop.f32.mrb[0].mxu0
          %v2817 = vpop.f32.mrb[0].mxu0
          %v2818 = vadd.f32 %v2609, %v2817
          %v2819 = vpop.f32.mrb[0].mxu0
          %2820 = vmatprep.mubr.bf16.mxu0 0
          %2821 = vmatmul.mubr.bf16.gmra.mrb[0].mxu0 %v2406
          %v2822 = vpop.f32.mrb[0].mxu0
          %v2823 = vadd.f32 %v2614, %v2822
          %v2824 = vpop.f32.mrb[0].mxu0
          %v2825 = vpop.f32.mrb[0].mxu0
          %v2826 = vadd.f32 %v2617, %v2825
          %v2827 = vpop.f32.mrb[0].mxu0
          %2828 = vmatprep.mubr.bf16.mxu0 0
          %2829 = vmatmul.mubr.bf16.gmra.mrb[0].mxu0 %v2407
          %v2830 = vpop.f32.mrb[0].mxu0
          %v2831 = vadd.f32 %v2622, %v2830
          %v2832 = vpop.f32.mrb[0].mxu0
          %v2833 = vpop.f32.mrb[0].mxu0
          %v2834 = vadd.f32 %v2625, %v2833
          %v2835 = vpop.f32.mrb[0].mxu0
          %2836 = vmatprep.mubr.bf16.mxu0 0
          %2837 = vmatmul.mubr.bf16.gmra.mrb[0].mxu0 %v2408
          %v2838 = vpop.f32.mrb[0].mxu0
          %v2839 = vadd.f32 %v2630, %v2838
          %v2840 = vpop.f32.mrb[0].mxu0
          %v2841 = vpop.f32.mrb[0].mxu0
          %v2842 = vadd.f32 %v2633, %v2841
          %v2843 = vpop.f32.mrb[0].mxu0
          %2844 = vmatprep.mubr.bf16.mxu0 0
          %2845 = vmatmul.mubr.bf16.gmra.mrb[0].mxu0 %v2409
          %v2846 = vpop.f32.mrb[0].mxu0
          %v2847 = vadd.f32 %v2638, %v2846
          %v2848 = vpop.f32.mrb[0].mxu0
          %v2849 = vpop.f32.mrb[0].mxu0
          %v2850 = vadd.f32 %v2641, %v2849
          %v2851 = vpop.f32.mrb[0].mxu0
          %2852 = vmatprep.mubr.bf16.mxu0 0
          %2853 = vmatmul.mubr.bf16.gmra.mrb[0].mxu0 %v2410
          %v2854 = vpop.f32.mrb[0].mxu0
          %v2855 = vadd.f32 %v2646, %v2854
          %v2856 = vpop.f32.mrb[0].mxu0
          %v2857 = vpop.f32.mrb[0].mxu0
          %v2858 = vadd.f32 %v2649, %v2857
          %v2859 = vpop.f32.mrb[0].mxu0
          %2860 = vdwg.mxu0
          %v2861 = vld [vmem:[%s378] sm:$0x1]
          %v2863 = vlaneseq
          %v2864 = vshrl.u32 %v2863, 7
          %v2865 = vsub.s32 0, %v2864
          %v2866 = vrot.slane %v2861, %v2865
          %v2868 = vadd.f32 %v2735, %v2866
          %v2869 = vadd.f32 %v2738, %v2866
          %v2870 = vadd.f32 %v2743, %v2866
          %v2871 = vadd.f32 %v2746, %v2866
          %v2872 = vadd.f32 %v2751, %v2866
          %v2873 = vadd.f32 %v2754, %v2866
          %v2874 = vadd.f32 %v2759, %v2866
          %v2875 = vadd.f32 %v2762, %v2866
          %v2876 = vadd.f32 %v2767, %v2866
          %v2877 = vadd.f32 %v2770, %v2866
          %v2878 = vadd.f32 %v2775, %v2866
          %v2879 = vadd.f32 %v2778, %v2866
          %v2880 = vadd.f32 %v2783, %v2866
          %v2881 = vadd.f32 %v2786, %v2866
          %v2882 = vadd.f32 %v2791, %v2866
          %v2883 = vadd.f32 %v2794, %v2866
          %v2884 = vadd.f32 %v2799, %v2866
          %v2885 = vadd.f32 %v2802, %v2866
          %v2886 = vadd.f32 %v2807, %v2866
          %v2887 = vadd.f32 %v2810, %v2866
          %v2888 = vadd.f32 %v2815, %v2866
          %v2889 = vadd.f32 %v2818, %v2866
          %v2890 = vadd.f32 %v2823, %v2866
          %v2891 = vadd.f32 %v2826, %v2866
          %v2892 = vadd.f32 %v2831, %v2866
          %v2893 = vadd.f32 %v2834, %v2866
          %v2894 = vadd.f32 %v2839, %v2866
          %v2895 = vadd.f32 %v2842, %v2866
          %v2896 = vadd.f32 %v2847, %v2866
          %v2897 = vadd.f32 %v2850, %v2866
          %v2898 = vadd.f32 %v2855, %v2866
          %v2899 = vadd.f32 %v2858, %v2866
          %2900 = vst [vmem:[%s369] sm:$0xff] %v2868
          %2901 = vst [vmem:[%s369 + $0x8] sm:$0xff] %v2869
          %2902 = vst [vmem:[%s369 + $0x10] sm:$0xff] %v2870
          %2903 = vst [vmem:[%s369 + $0x18] sm:$0xff] %v2871
          %2904 = vst [vmem:[%s369 + $0x20] sm:$0xff] %v2872
          %2905 = vst [vmem:[%s369 + $0x28] sm:$0xff] %v2873
          %2906 = vst [vmem:[%s369 + $0x30] sm:$0xff] %v2874
          %2907 = vst [vmem:[%s369 + $0x38] sm:$0xff] %v2875
          %2908 = vst [vmem:[%s369 + $0x40] sm:$0xff] %v2876
          %2909 = vst [vmem:[%s369 + $0x48] sm:$0xff] %v2877
          %2910 = vst [vmem:[%s369 + $0x50] sm:$0xff] %v2878
          %2911 = vst [vmem:[%s369 + $0x58] sm:$0xff] %v2879
          %2912 = vst [vmem:[%s369 + $0x60] sm:$0xff] %v2880
          %2913 = vst [vmem:[%s369 + $0x68] sm:$0xff] %v2881
          %2914 = vst [vmem:[%s369 + $0x70] sm:$0xff] %v2882
          %2915 = vst [vmem:[%s369 + $0x78] sm:$0xff] %v2883
          %2916 = vst [vmem:[%s369 + $0x80] sm:$0xff] %v2884
          %2917 = vst [vmem:[%s369 + $0x88] sm:$0xff] %v2885
          %2918 = vst [vmem:[%s369 + $0x90] sm:$0xff] %v2886
          %2919 = vst [vmem:[%s369 + $0x98] sm:$0xff] %v2887
          %2920 = vst [vmem:[%s369 + $0xa0] sm:$0xff] %v2888
          %2921 = vst [vmem:[%s369 + $0xa8] sm:$0xff] %v2889
          %2922 = vst [vmem:[%s369 + $0xb0] sm:$0xff] %v2890
          %2923 = vst [vmem:[%s369 + $0xb8] sm:$0xff] %v2891
          %2924 = vst [vmem:[%s369 + $0xc0] sm:$0xff] %v2892
          %2925 = vst [vmem:[%s369 + $0xc8] sm:$0xff] %v2893
          %2926 = vst [vmem:[%s369 + $0xd0] sm:$0xff] %v2894
          %2927 = vst [vmem:[%s369 + $0xd8] sm:$0xff] %v2895
          %2928 = vst [vmem:[%s369 + $0xe0] sm:$0xff] %v2896
          %2929 = vst [vmem:[%s369 + $0xe8] sm:$0xff] %v2897
          %2930 = vst [vmem:[%s369 + $0xf0] sm:$0xff] %v2898
          %2931 = vst [vmem:[%s369 + $0xf8] sm:$0xff] %v2899
        $region76: #{tpu_custom_call.1} parent=43 // pred_fallthru
          _
        %s2932 = sand.u32 %s199, 1
        %s2933 = scalar_lea.sflag [#allocation6], %s2932
        %s2934 = sand.u32 %s199, 1
        %s2935 = smul.addr %s2934, 256
        %s2936 = scalar_lea.vmem [#allocation10], %s2935
        // Predicated region
        $region77: #{tpu_custom_call.1} parent=43 // pred_check
          %p2937 = pneg %p209
        $region78: #{tpu_custom_call.1} parent=43 // pred_check_branch
          %2939 = sbr.rel (%p2937) target = $region80
        $region79: #{tpu_custom_call.1} parent=43 // pred_region
          %s2940 = smul.u32 %s30, %s29
          %s2941 = smul.u32 32, %s2940
          %s2943 = ssub.s32 4096, 4096
          %2944 = vsyncadd %s2933, %s2943
          %s2945 = smul.addr %s2941, 128
          %s2946 = scalar_lea.hbm %s6, %s2945
          %s2947 = sshll.u32 %s2936, 4
          %s2948 = int_to_ptr.vmem [resolvable:$true] %s2947
          %2953 = dma.vmem_to_hbm [thread:$0]  %s2948, 4096, %s2946, %s2933, 128, 128, 8
        $region80: #{tpu_custom_call.1} parent=43 // pred_fallthru
          _
      $region44: #{tpu_custom_call.1} parent=5 // pred_fallthru
        _
      %p2954 = scmp.le.s32.totalorder 2, %s19
      // Predicated region
      $region81: #{tpu_custom_call.1} parent=5 // pred_check
        %p2955 = pneg %p2954
      $region82: #{tpu_custom_call.1} parent=5 // pred_check_branch
        %2957 = sbr.rel (%p2955) target = $region84
      $region83: #{tpu_custom_call.1} parent=5 // pred_region
        %s2958 = ssub.s32 %s19, 2
        // Predicated region
        $region85: #{tpu_custom_call.1} parent=83 // pred_check
          %p2959 = pneg %p215
        $region86: #{tpu_custom_call.1} parent=83 // pred_check_branch
          %2961 = sbr.rel (%p2959) target = $region88
        $region87: #{tpu_custom_call.1} parent=83 // pred_region
          %s2962 = sand.u32 %s200, 1
          %s2963 = scalar_lea.sflag [#allocation6], %s2962
          %s2964 = sand.u32 %s200, 1
          %s2965 = smul.addr %s2964, 256
          %s2966 = scalar_lea.vmem [#allocation10], %s2965
          %2967 = dma.done %s2963, 4096
        $region88: #{tpu_custom_call.1} parent=83 // pred_fallthru
          _
      $region84: #{tpu_custom_call.1} parent=5 // pred_fallthru
        _
    $region6: #{tpu_custom_call.1} parent=1 // loop_footer
      %s23 = sadd.s32 1, %s19
    $region7: #{tpu_custom_call.1} parent=1 // loop_footer_branch
      %18 = sbr.rel target = $region3
    $region8: #{tpu_custom_call.1} parent=1 // loop_exit
      _
    %2968 = vsyncpa [#allocation5], 1
    %s2969 = scalar_lea.sflag [#allocation5], 1
    %2970 = vsyncpa %s2969, 1
    %2971 = vsyncpa [#allocation8], 1
    %s2972 = scalar_lea.sflag [#allocation8], 1
    %2973 = vsyncpa %s2972, 1
    %2974 = vsyncpa [#allocation6], 1
    %s2975 = scalar_lea.sflag [#allocation6], 1
    %2976 = vsyncpa %s2975, 1

</llo_original>
